<compile_context>
chip_gen: v7x
topology: tpu7x:2x2x1
jax: 0.10.0
libtpu: 0.0.40
codegen_flags: <defaults>
</compile_context>

<pallas_src>
import functools

import jax
import jax.numpy as jnp
from jax.experimental import pallas as pl
from jax.experimental.pallas import tpu as pltpu


def _round_up(x, m):
    return ((x + m - 1) // m) * m


def _warpper_kernel(x_ids_ref, y_ref, emb_ref, w_ref, b_ref,
                    corr_ref, loss_ref, *, batch, seq_len):
    # x_ids_ref: [TB, S] i32      y_ref: [TB, 1] i32
    # emb_ref:   [VP, HP] bf16    w_ref: [HP, CP] bf16   b_ref: [1, CP] f32
    # corr_ref:  [1, 8, 128] i32  loss_ref: [1, 8, 128] f32   (per-tile partials)
    i = pl.program_id(0)
    ids = x_ids_ref[...]                                   # [TB, S] i32
    TB = ids.shape[0]
    VP = emb_ref.shape[0]
    CP = w_ref.shape[1]

    # ---- fused embedding gather + mean-pool --------------------------------
    # counts[b, v] = #occurrences of token v in row b  ->  pooled = counts@emb/S
    # (one-hot path is fine for modest vocab; see TODO(synk) above for large.)
    vocab_iota = jax.lax.broadcasted_iota(jnp.int32, (TB, VP), 1)
    counts = jnp.zeros((TB, VP), jnp.float32)
    for s in range(seq_len):                               # static unroll, S small
        counts = counts + (ids[:, s:s + 1] == vocab_iota).astype(jnp.float32)
    # counts are exact small integers -> exact in bf16 (S <= 256 asserted).
    pooled = jnp.dot(counts.astype(jnp.bfloat16), emb_ref[...],
                     preferred_element_type=jnp.float32)   # [TB, HP] f32
    pooled = pooled * (1.0 / seq_len)

    # ---- classifier matmul: bf16 MXU inputs, f32 accumulation --------------
    # Padded class columns get -1e30 from the bias (mask folded at pad time).
    logits = jnp.dot(pooled.astype(jnp.bfloat16), w_ref[...],
                     preferred_element_type=jnp.float32) + b_ref[...]  # [TB, CP]

    # ---- CrossEntropyLoss pieces (f32), reusing the row max ----------------
    m = jnp.max(logits, axis=1, keepdims=True)                              # [TB,1]
    z = logits - m
    lse = jnp.log(jnp.sum(jnp.exp(z), axis=1, keepdims=True))               # [TB,1]

    col = jax.lax.broadcasted_iota(jnp.int32, (TB, CP), 1)
    y = y_ref[...]                                                          # [TB,1]
    picked_z = jnp.sum(jnp.where(col == y, z, 0.0), axis=1, keepdims=True)  # [TB,1]

    # Row-validity mask for the zero-padded tail of the batch.
    rows = i * TB + jax.lax.broadcasted_iota(jnp.int32, (TB, 1), 0)
    valid = rows < batch                                                    # [TB,1]

    logp_sum = jnp.sum(jnp.where(valid, picked_z - lse, 0.0))   # scalar f32

    # ---- torch.max(logits, dim=1): first index of the row max --------------
    is_max = logits == m
    predict = jnp.min(jnp.where(is_max, col, CP), axis=1, keepdims=True)    # [TB,1]
    hits = jnp.logical_and(predict == y, valid)
    n_correct = jnp.sum(hits.astype(jnp.int32))                  # scalar i32

    # Lane-dense per-tile partial outputs (reduced in the wrapper).
    corr_ref[...] = jnp.zeros((1, 8, 128), jnp.int32) + n_correct
    loss_ref[...] = jnp.zeros((1, 8, 128), jnp.float32) + logp_sum


def _call_pallas(x_p, y_p, emb_p, w_p, b_p, *, kernel, tile_b, S, G, VP, HP, CP,
                 vmem_limit, single_buffer_weights):
    wkw = dict(pipeline_mode=pl.Buffered(1)) if single_buffer_weights else {}
    return pl.pallas_call(
        kernel,
        out_shape=(
            jax.ShapeDtypeStruct((G, 8, 128), jnp.int32),    # correct partials
            jax.ShapeDtypeStruct((G, 8, 128), jnp.float32),  # sum-log-prob partials
        ),
        grid_spec=pltpu.PrefetchScalarGridSpec(
            num_scalar_prefetch=0,
            grid=(G,),
            in_specs=[
                pl.BlockSpec((tile_b, S), lambda i: (i, 0)),        # token ids tile
                pl.BlockSpec((tile_b, 1), lambda i: (i, 0)),        # label tile
                pl.BlockSpec((VP, HP), lambda i: (0, 0), **wkw),    # embedding (resident)
                pl.BlockSpec((HP, CP), lambda i: (0, 0), **wkw),    # classifier weight
                pl.BlockSpec((1, CP), lambda i: (0, 0), **wkw),     # bias (+ class mask)
            ],
            out_specs=(
                pl.BlockSpec((1, 8, 128), lambda i: (i, 0, 0)),
                pl.BlockSpec((1, 8, 128), lambda i: (i, 0, 0)),
            ),
        ),
        compiler_params=pltpu.CompilerParams(
            dimension_semantics=("parallel",),    # independent tiles -> both v7x TCs
            vmem_limit_bytes=vmem_limit),
    )(x_p, y_p, emb_p, w_p, b_p)


def warpper_forward(x_ids, y, emb, w, b, *, tile_b=128):
    """Warpper forward. x_ids: [B, S] int tokens; y: [B] int labels.
    Returns (correct: int32 scalar, loss: f32 scalar)."""
    B, S = x_ids.shape
    VOCAB, H = emb.shape
    C = w.shape[1]
    assert S <= 256, "bf16-exact token counts require S <= 256"

    # Lane-dense padding everywhere.
    CP = _round_up(C, 128)
    VP = _round_up(VOCAB, 128)
    HP = _round_up(H, 128)
    B_pad = _round_up(B, tile_b)
    G = B_pad // tile_b

    emb_p = jnp.pad(emb.astype(jnp.float32),
                    ((0, VP - VOCAB), (0, HP - H))).astype(jnp.bfloat16)
    w_p = jnp.pad(w.astype(jnp.float32),
                  ((0, HP - H), (0, CP - C))).astype(jnp.bfloat16)
    # Fold the padded-class mask into the bias (f32: -1e30 sentinel is safe).
    b_p = jnp.pad(b.reshape(1, C).astype(jnp.float32),
                  ((0, 0), (0, CP - C)), constant_values=-1e30)
    x_p = jnp.pad(x_ids.astype(jnp.int32), ((0, B_pad - B), (0, 0)))
    y_p = jnp.pad(y.astype(jnp.int32), (0, B_pad - B)).reshape(B_pad, 1)

    kernel = functools.partial(_warpper_kernel, batch=B, seq_len=S)

    # Scoped-VMEM budget from the actual footprint (resident weights are
    # single-buffered; streamed tiles double-buffered; rough intermediates).
    resident_bytes = VP * HP * 2 + HP * CP * 2 + CP * 4
    streamed_bytes = 2 * (tile_b * S * 4 + tile_b * 4 + 2 * 8 * 128 * 4)
    scratch_bytes = tile_b * (VP + HP + 4 * CP) * 4
    vmem_limit = int(min(64 * 2 ** 20,
                         max(32 * 2 ** 20,
                             1.5 * (resident_bytes + streamed_bytes + scratch_bytes))))

    common = dict(kernel=kernel, tile_b=tile_b, S=S, G=G, VP=VP, HP=HP, CP=CP,
                  vmem_limit=vmem_limit)
    try:
        corr_parts, loss_parts = _call_pallas(
            x_p, y_p, emb_p, w_p, b_p, single_buffer_weights=True, **common)
    except Exception:
        # Fallback if pipeline_mode=pl.Buffered(1) is rejected by this JAX build.
        corr_parts, loss_parts = _call_pallas(
            x_p, y_p, emb_p, w_p, b_p, single_buffer_weights=False, **common)

    correct = jnp.sum(corr_parts[:, 0, 0]).astype(jnp.int32)
    loss = -jnp.sum(loss_parts[:, 0, 0]) / jnp.float32(B)
    return correct, loss


if __name__ == "__main__":
    # Small, deterministic setup (B not a tile multiple -> exercises masking,
    # G=2 tiles -> exercises the parallel grid axis and per-tile partials).
    B, S, H, C, VOCAB = 200, 8, 32, 8, 16
    key = jax.random.PRNGKey(0)
    k_emb, k_w, k_b, k_x, k_y = jax.random.split(key, 5)

    emb = jax.random.normal(k_emb, (VOCAB, H), dtype=jnp.float32) * 0.1
    w = jax.random.normal(k_w, (H, C), dtype=jnp.float32) * 0.1
    b = jax.random.normal(k_b, (1, C), dtype=jnp.float32) * 0.1

    x = jax.random.randint(k_x, (B, S), 0, VOCAB, dtype=jnp.int32)
    y = jax.random.randint(k_y, (B,), 0, C, dtype=jnp.int32)

    correct, loss = warpper_forward(x, y, emb, w, b)
    jax.block_until_ready((correct, loss))

    # Plain-JAX reference with matching (bf16-MXU) precision.
    emb_bf = emb.astype(jnp.bfloat16)
    pooled = jnp.mean(emb_bf[x].astype(jnp.float32), axis=1)
    logits = jnp.dot(pooled.astype(jnp.bfloat16), w.astype(jnp.bfloat16),
                     preferred_element_type=jnp.float32) + b
    logp = jax.nn.log_softmax(logits, axis=1)
    ref_loss = -jnp.mean(logp[jnp.arange(B), y])
    ref_correct = jnp.sum(jnp.argmax(logits, axis=1) == y).astype(jnp.int32)

    assert jnp.allclose(loss, ref_loss, atol=2e-3), (float(loss), float(ref_loss))
    assert int(correct) == int(ref_correct), (int(correct), int(ref_correct))

    print("KERNEL_OK")
</pallas_src>

<mosaic_0001>
module attributes {stable_mosaic.version = 11 : i64} {
  func.func @_warpper_kernel(%arg0: i32, %arg1: memref<128x8xi32, #tpu.memory_space<vmem>>, %arg2: memref<128x1xi32, #tpu.memory_space<vmem>>, %arg3: memref<128x128xbf16, #tpu.memory_space<vmem>>, %arg4: memref<128x128xbf16, #tpu.memory_space<vmem>>, %arg5: memref<1x128xf32, #tpu.memory_space<vmem>>, %arg6: memref<1x8x128xi32, #tpu.memory_space<vmem>>, %arg7: memref<1x8x128xf32, #tpu.memory_space<vmem>>) attributes {dimension_semantics = [#tpu.dimension_semantics<parallel>], iteration_bounds = array<i64: 2>, scalar_prefetch = 0 : i64, scratch_operands = 0 : i64, tpu.core_type = #tpu.core_type<tc>, window_params = [{transform_indices = @transform_0, window_bounds = array<i64: 128, 8>}, {transform_indices = @transform_1, window_bounds = array<i64: 128, 1>}, {pipeline_mode = #tpu.pipeline_mode<synchronous>, transform_indices = @transform_2, window_bounds = array<i64: 128, 128>}, {pipeline_mode = #tpu.pipeline_mode<synchronous>, transform_indices = @transform_3, window_bounds = array<i64: 128, 128>}, {pipeline_mode = #tpu.pipeline_mode<synchronous>, transform_indices = @transform_4, window_bounds = array<i64: 1, 128>}, {transform_indices = @transform_5, window_bounds = array<i64: 1, 8, 128>}, {transform_indices = @transform_6, window_bounds = array<i64: 1, 8, 128>}]} {
    %c0 = arith.constant 0 : index
    %c0_0 = arith.constant 0 : index
    %0 = vector.load %arg1[%c0, %c0_0] : memref<128x8xi32, #tpu.memory_space<vmem>>, vector<128x8xi32>
    %1 = tpu.iota {dimensions = array<i32: 1>} : vector<128x128xi32>
    %cst = arith.constant 0.000000e+00 : f32
    %2 = vector.broadcast %cst : f32 to vector<128x128xf32>
    %3 = vector.extract_strided_slice %0 {offsets = [0, 0], sizes = [128, 1], strides = [1, 1]} : vector<128x8xi32> to vector<128x1xi32>
    %4 = vector.broadcast %3 : vector<128x1xi32> to vector<128x128xi32>
    %5 = arith.cmpi eq, %4, %1 : vector<128x128xi32>
    %6 = arith.extui %5 : vector<128x128xi1> to vector<128x128xi32>
    %7 = arith.sitofp %6 : vector<128x128xi32> to vector<128x128xf32>
    %8 = arith.addf %2, %7 : vector<128x128xf32>
    %9 = vector.extract_strided_slice %0 {offsets = [0, 1], sizes = [128, 1], strides = [1, 1]} : vector<128x8xi32> to vector<128x1xi32>
    %10 = vector.broadcast %9 : vector<128x1xi32> to vector<128x128xi32>
    %11 = arith.cmpi eq, %10, %1 : vector<128x128xi32>
    %12 = arith.extui %11 : vector<128x128xi1> to vector<128x128xi32>
    %13 = arith.sitofp %12 : vector<128x128xi32> to vector<128x128xf32>
    %14 = arith.addf %8, %13 : vector<128x128xf32>
    %15 = vector.extract_strided_slice %0 {offsets = [0, 2], sizes = [128, 1], strides = [1, 1]} : vector<128x8xi32> to vector<128x1xi32>
    %16 = vector.broadcast %15 : vector<128x1xi32> to vector<128x128xi32>
    %17 = arith.cmpi eq, %16, %1 : vector<128x128xi32>
    %18 = arith.extui %17 : vector<128x128xi1> to vector<128x128xi32>
    %19 = arith.sitofp %18 : vector<128x128xi32> to vector<128x128xf32>
    %20 = arith.addf %14, %19 : vector<128x128xf32>
    %21 = vector.extract_strided_slice %0 {offsets = [0, 3], sizes = [128, 1], strides = [1, 1]} : vector<128x8xi32> to vector<128x1xi32>
    %22 = vector.broadcast %21 : vector<128x1xi32> to vector<128x128xi32>
    %23 = arith.cmpi eq, %22, %1 : vector<128x128xi32>
    %24 = arith.extui %23 : vector<128x128xi1> to vector<128x128xi32>
    %25 = arith.sitofp %24 : vector<128x128xi32> to vector<128x128xf32>
    %26 = arith.addf %20, %25 : vector<128x128xf32>
    %27 = vector.extract_strided_slice %0 {offsets = [0, 4], sizes = [128, 1], strides = [1, 1]} : vector<128x8xi32> to vector<128x1xi32>
    %28 = vector.broadcast %27 : vector<128x1xi32> to vector<128x128xi32>
    %29 = arith.cmpi eq, %28, %1 : vector<128x128xi32>
    %30 = arith.extui %29 : vector<128x128xi1> to vector<128x128xi32>
    %31 = arith.sitofp %30 : vector<128x128xi32> to vector<128x128xf32>
    %32 = arith.addf %26, %31 : vector<128x128xf32>
    %33 = vector.extract_strided_slice %0 {offsets = [0, 5], sizes = [128, 1], strides = [1, 1]} : vector<128x8xi32> to vector<128x1xi32>
    %34 = vector.broadcast %33 : vector<128x1xi32> to vector<128x128xi32>
    %35 = arith.cmpi eq, %34, %1 : vector<128x128xi32>
    %36 = arith.extui %35 : vector<128x128xi1> to vector<128x128xi32>
    %37 = arith.sitofp %36 : vector<128x128xi32> to vector<128x128xf32>
    %38 = arith.addf %32, %37 : vector<128x128xf32>
    %39 = vector.extract_strided_slice %0 {offsets = [0, 6], sizes = [128, 1], strides = [1, 1]} : vector<128x8xi32> to vector<128x1xi32>
    %40 = vector.broadcast %39 : vector<128x1xi32> to vector<128x128xi32>
    %41 = arith.cmpi eq, %40, %1 : vector<128x128xi32>
    %42 = arith.extui %41 : vector<128x128xi1> to vector<128x128xi32>
    %43 = arith.sitofp %42 : vector<128x128xi32> to vector<128x128xf32>
    %44 = arith.addf %38, %43 : vector<128x128xf32>
    %45 = vector.extract_strided_slice %0 {offsets = [0, 7], sizes = [128, 1], strides = [1, 1]} : vector<128x8xi32> to vector<128x1xi32>
    %46 = vector.broadcast %45 : vector<128x1xi32> to vector<128x128xi32>
    %47 = arith.cmpi eq, %46, %1 : vector<128x128xi32>
    %48 = arith.extui %47 : vector<128x128xi1> to vector<128x128xi32>
    %49 = arith.sitofp %48 : vector<128x128xi32> to vector<128x128xf32>
    %50 = arith.addf %44, %49 : vector<128x128xf32>
    %51 = arith.truncf %50 : vector<128x128xf32> to vector<128x128xbf16>
    %c0_1 = arith.constant 0 : index
    %c0_2 = arith.constant 0 : index
    %52 = vector.load %arg3[%c0_1, %c0_2] : memref<128x128xbf16, #tpu.memory_space<vmem>>, vector<128x128xbf16>
    %cst_3 = arith.constant dense<0.000000e+00> : vector<128x128xf32>
    %53 = tpu.matmul %51, %52, %cst_3 {dimension_numbers = #tpu.dot_dimension_numbers<[1], [0], [0], [1], [0, 0, 1, 1], [], []>} : vector<128x128xbf16>, vector<128x128xbf16>, vector<128x128xf32> -> vector<128x128xf32>
    %cst_4 = arith.constant 1.250000e-01 : f32
    %54 = vector.broadcast %cst_4 : f32 to vector<128x128xf32>
    %55 = arith.mulf %53, %54 : vector<128x128xf32>
    %56 = arith.truncf %55 : vector<128x128xf32> to vector<128x128xbf16>
    %c0_5 = arith.constant 0 : index
    %c0_6 = arith.constant 0 : index
    %57 = vector.load %arg4[%c0_5, %c0_6] : memref<128x128xbf16, #tpu.memory_space<vmem>>, vector<128x128xbf16>
    %cst_7 = arith.constant dense<0.000000e+00> : vector<128x128xf32>
    %58 = tpu.matmul %56, %57, %cst_7 {dimension_numbers = #tpu.dot_dimension_numbers<[1], [0], [0], [1], [0, 0, 1, 1], [], []>} : vector<128x128xbf16>, vector<128x128xbf16>, vector<128x128xf32> -> vector<128x128xf32>
    %c0_8 = arith.constant 0 : index
    %c0_9 = arith.constant 0 : index
    %59 = vector.load %arg5[%c0_8, %c0_9] : memref<1x128xf32, #tpu.memory_space<vmem>>, vector<1x128xf32>
    %60 = vector.broadcast %59 : vector<1x128xf32> to vector<128x128xf32>
    %61 = arith.addf %58, %60 : vector<128x128xf32>
    %cst_10 = arith.constant dense<0xFF800000> : vector<128xf32>
    %62 = vector.multi_reduction <maximumf>, %61, %cst_10 [1] : vector<128x128xf32> to vector<128xf32>
    %63 = vector.shape_cast %62 : vector<128xf32> to vector<128x1xf32>
    %64 = vector.broadcast %63 : vector<128x1xf32> to vector<128x128xf32>
    %65 = arith.subf %61, %64 : vector<128x128xf32>
    %66 = math.exp %65 : vector<128x128xf32>
    %cst_11 = arith.constant dense<0.000000e+00> : vector<128xf32>
    %67 = vector.multi_reduction <add>, %66, %cst_11 [1] : vector<128x128xf32> to vector<128xf32>
    %68 = vector.shape_cast %67 : vector<128xf32> to vector<128x1xf32>
    %69 = math.log %68 : vector<128x1xf32>
    %70 = tpu.iota {dimensions = array<i32: 1>} : vector<128x128xi32>
    %c0_12 = arith.constant 0 : index
    %c0_13 = arith.constant 0 : index
    %71 = vector.load %arg2[%c0_12, %c0_13] : memref<128x1xi32, #tpu.memory_space<vmem>>, vector<128x1xi32>
    %72 = vector.broadcast %71 : vector<128x1xi32> to vector<128x128xi32>
    %73 = arith.cmpi eq, %70, %72 : vector<128x128xi32>
    %cst_14 = arith.constant 0.000000e+00 : f32
    %74 = vector.broadcast %cst_14 : f32 to vector<128x128xf32>
    %75 = arith.select %73, %65, %74 : vector<128x128xi1>, vector<128x128xf32>
    %cst_15 = arith.constant dense<0.000000e+00> : vector<128xf32>
    %76 = vector.multi_reduction <add>, %75, %cst_15 [1] : vector<128x128xf32> to vector<128xf32>
    %77 = vector.shape_cast %76 : vector<128xf32> to vector<128x1xf32>
    %c128_i32 = arith.constant 128 : i32
    %78 = arith.muli %arg0, %c128_i32 : i32
    %79 = tpu.iota {dimensions = array<i32: 0>} : vector<128x1xi32>
    %80 = vector.broadcast %78 : i32 to vector<128x1xi32>
    %81 = arith.addi %80, %79 : vector<128x1xi32>
    %c200_i32 = arith.constant 200 : i32
    %82 = vector.broadcast %c200_i32 : i32 to vector<128x1xi32>
    %83 = arith.cmpi slt, %81, %82 : vector<128x1xi32>
    %84 = arith.subf %77, %69 : vector<128x1xf32>
    %cst_16 = arith.constant 0.000000e+00 : f32
    %85 = vector.broadcast %cst_16 : f32 to vector<128x1xf32>
    %86 = arith.select %83, %84, %85 : vector<128x1xi1>, vector<128x1xf32>
    %87 = vector.shape_cast %86 : vector<128x1xf32> to vector<1x128x1xf32>
    %cst_17 = arith.constant dense<0.000000e+00> : vector<1xf32>
    %88 = vector.multi_reduction <add>, %87, %cst_17 [1, 2] : vector<1x128x1xf32> to vector<1xf32>
    %89 = vector.shape_cast %88 : vector<1xf32> to vector<1x1x1xf32>
    %90 = vector.extract %89[0, 0, 0] : f32 from vector<1x1x1xf32>
    %91 = vector.broadcast %63 : vector<128x1xf32> to vector<128x128xf32>
    %92 = arith.cmpf oeq, %61, %91 : vector<128x128xf32>
    %c128_i32_18 = arith.constant 128 : i32
    %93 = vector.broadcast %c128_i32_18 : i32 to vector<128x128xi32>
    %94 = arith.select %92, %70, %93 : vector<128x128xi1>, vector<128x128xi32>
    %cst_19 = arith.constant dense<2147483647> : vector<128xi32>
    %95 = vector.multi_reduction <minsi>, %94, %cst_19 [1] : vector<128x128xi32> to vector<128xi32>
    %96 = vector.shape_cast %95 : vector<128xi32> to vector<128x1xi32>
    %97 = arith.cmpi eq, %96, %71 : vector<128x1xi32>
    %98 = arith.andi %97, %83 : vector<128x1xi1>
    %99 = arith.extui %98 : vector<128x1xi1> to vector<128x1xi32>
    %100 = vector.shape_cast %99 : vector<128x1xi32> to vector<1x128x1xi32>
    %cst_20 = arith.constant dense<0> : vector<1xi32>
    %101 = vector.multi_reduction <add>, %100, %cst_20 [1, 2] : vector<1x128x1xi32> to vector<1xi32>
    %102 = vector.shape_cast %101 : vector<1xi32> to vector<1x1x1xi32>
    %103 = vector.extract %102[0, 0, 0] : i32 from vector<1x1x1xi32>
    %c0_i32 = arith.constant 0 : i32
    %104 = vector.broadcast %c0_i32 : i32 to vector<1x8x128xi32>
    %105 = vector.broadcast %103 : i32 to vector<1x8x128xi32>
    %106 = arith.addi %104, %105 : vector<1x8x128xi32>
    %c0_21 = arith.constant 0 : index
    %c0_22 = arith.constant 0 : index
    %c0_23 = arith.constant 0 : index
    %107 = vector.load %arg6[%c0_21, %c0_22, %c0_23] : memref<1x8x128xi32, #tpu.memory_space<vmem>>, vector<1x8x128xi32>
    tpu.vector_store %arg6[%c0_21, %c0_22, %c0_23], %106 {strides = array<i32>} : memref<1x8x128xi32, #tpu.memory_space<vmem>>, vector<1x8x128xi32>,
    %cst_24 = arith.constant 0.000000e+00 : f32
    %108 = vector.broadcast %cst_24 : f32 to vector<1x8x128xf32>
    %109 = vector.broadcast %90 : f32 to vector<1x8x128xf32>
    %110 = arith.addf %108, %109 : vector<1x8x128xf32>
    %c0_25 = arith.constant 0 : index
    %c0_26 = arith.constant 0 : index
    %c0_27 = arith.constant 0 : index
    %111 = vector.load %arg7[%c0_25, %c0_26, %c0_27] : memref<1x8x128xf32, #tpu.memory_space<vmem>>, vector<1x8x128xf32>
    tpu.vector_store %arg7[%c0_25, %c0_26, %c0_27], %110 {strides = array<i32>} : memref<1x8x128xf32, #tpu.memory_space<vmem>>, vector<1x8x128xf32>,
    return
  }
  func.func @transform_0(%arg0: i32) -> (i32, i32) {
    %c0_i32 = arith.constant 0 : i32
    %c0_i32_0 = arith.constant 0 : i32
    return %arg0, %c0_i32 : i32, i32
  }
  func.func @transform_1(%arg0: i32) -> (i32, i32) {
    %c0_i32 = arith.constant 0 : i32
    %c0_i32_0 = arith.constant 0 : i32
    return %arg0, %c0_i32 : i32, i32
  }
  func.func @transform_2(%arg0: i32) -> (i32, i32) {
    %c0_i32 = arith.constant 0 : i32
    %c0_i32_0 = arith.constant 0 : i32
    %c0_i32_1 = arith.constant 0 : i32
    return %c0_i32, %c0_i32_0 : i32, i32
  }
  func.func @transform_3(%arg0: i32) -> (i32, i32) {
    %c0_i32 = arith.constant 0 : i32
    %c0_i32_0 = arith.constant 0 : i32
    %c0_i32_1 = arith.constant 0 : i32
    return %c0_i32, %c0_i32_0 : i32, i32
  }
  func.func @transform_4(%arg0: i32) -> (i32, i32) {
    %c0_i32 = arith.constant 0 : i32
    %c0_i32_0 = arith.constant 0 : i32
    %c0_i32_1 = arith.constant 0 : i32
    return %c0_i32, %c0_i32_0 : i32, i32
  }
  func.func @transform_5(%arg0: i32) -> (i32, i32, i32) {
    %c0_i32 = arith.constant 0 : i32
    %c0_i32_0 = arith.constant 0 : i32
    %c0_i32_1 = arith.constant 0 : i32
    return %arg0, %c0_i32, %c0_i32_0 : i32, i32, i32
  }
  func.func @transform_6(%arg0: i32) -> (i32, i32, i32) {
    %c0_i32 = arith.constant 0 : i32
    %c0_i32_0 = arith.constant 0 : i32
    %c0_i32_1 = arith.constant 0 : i32
    return %arg0, %c0_i32, %c0_i32_0 : i32, i32, i32
  }
}

module attributes {stable_mosaic.version = 11 : i64} {
  func.func @_warpper_kernel(%arg0: i32, %arg1: memref<128x8xi32, #tpu.memory_space<vmem>>, %arg2: memref<128x1xi32, #tpu.memory_space<vmem>>, %arg3: memref<128x128xbf16, #tpu.memory_space<vmem>>, %arg4: memref<128x128xbf16, #tpu.memory_space<vmem>>, %arg5: memref<1x128xf32, #tpu.memory_space<vmem>>, %arg6: memref<1x8x128xi32, #tpu.memory_space<vmem>>, %arg7: memref<1x8x128xf32, #tpu.memory_space<vmem>>) attributes {dimension_semantics = [#tpu.dimension_semantics<parallel>], iteration_bounds = array<i64: 2>, scalar_prefetch = 0 : i64, scratch_operands = 0 : i64, tpu.core_type = #tpu.core_type<tc>, window_params = [{transform_indices = @transform_0, window_bounds = array<i64: 128, 8>}, {transform_indices = @transform_1, window_bounds = array<i64: 128, 1>}, {pipeline_mode = #tpu.pipeline_mode<synchronous>, transform_indices = @transform_2, window_bounds = array<i64: 128, 128>}, {pipeline_mode = #tpu.pipeline_mode<synchronous>, transform_indices = @transform_3, window_bounds = array<i64: 128, 128>}, {pipeline_mode = #tpu.pipeline_mode<synchronous>, transform_indices = @transform_4, window_bounds = array<i64: 1, 128>}, {transform_indices = @transform_5, window_bounds = array<i64: 1, 8, 128>}, {transform_indices = @transform_6, window_bounds = array<i64: 1, 8, 128>}]} {
    %c0 = arith.constant 0 : index
    %c0_0 = arith.constant 0 : index
    %0 = vector.load %arg1[%c0, %c0_0] : memref<128x8xi32, #tpu.memory_space<vmem>>, vector<128x8xi32>
    %1 = tpu.iota {dimensions = array<i32: 1>} : vector<128x128xi32>
    %cst = arith.constant 0.000000e+00 : f32
    %2 = vector.broadcast %cst : f32 to vector<128x128xf32>
    %3 = vector.extract_strided_slice %0 {offsets = [0, 0], sizes = [128, 1], strides = [1, 1]} : vector<128x8xi32> to vector<128x1xi32>
    %4 = vector.broadcast %3 : vector<128x1xi32> to vector<128x128xi32>
    %5 = arith.cmpi eq, %4, %1 : vector<128x128xi32>
    %6 = arith.extui %5 : vector<128x128xi1> to vector<128x128xi32>
    %7 = arith.sitofp %6 : vector<128x128xi32> to vector<128x128xf32>
    %8 = arith.addf %2, %7 : vector<128x128xf32>
    %9 = vector.extract_strided_slice %0 {offsets = [0, 1], sizes = [128, 1], strides = [1, 1]} : vector<128x8xi32> to vector<128x1xi32>
    %10 = vector.broadcast %9 : vector<128x1xi32> to vector<128x128xi32>
    %11 = arith.cmpi eq, %10, %1 : vector<128x128xi32>
    %12 = arith.extui %11 : vector<128x128xi1> to vector<128x128xi32>
    %13 = arith.sitofp %12 : vector<128x128xi32> to vector<128x128xf32>
    %14 = arith.addf %8, %13 : vector<128x128xf32>
    %15 = vector.extract_strided_slice %0 {offsets = [0, 2], sizes = [128, 1], strides = [1, 1]} : vector<128x8xi32> to vector<128x1xi32>
    %16 = vector.broadcast %15 : vector<128x1xi32> to vector<128x128xi32>
    %17 = arith.cmpi eq, %16, %1 : vector<128x128xi32>
    %18 = arith.extui %17 : vector<128x128xi1> to vector<128x128xi32>
    %19 = arith.sitofp %18 : vector<128x128xi32> to vector<128x128xf32>
    %20 = arith.addf %14, %19 : vector<128x128xf32>
    %21 = vector.extract_strided_slice %0 {offsets = [0, 3], sizes = [128, 1], strides = [1, 1]} : vector<128x8xi32> to vector<128x1xi32>
    %22 = vector.broadcast %21 : vector<128x1xi32> to vector<128x128xi32>
    %23 = arith.cmpi eq, %22, %1 : vector<128x128xi32>
    %24 = arith.extui %23 : vector<128x128xi1> to vector<128x128xi32>
    %25 = arith.sitofp %24 : vector<128x128xi32> to vector<128x128xf32>
    %26 = arith.addf %20, %25 : vector<128x128xf32>
    %27 = vector.extract_strided_slice %0 {offsets = [0, 4], sizes = [128, 1], strides = [1, 1]} : vector<128x8xi32> to vector<128x1xi32>
    %28 = vector.broadcast %27 : vector<128x1xi32> to vector<128x128xi32>
    %29 = arith.cmpi eq, %28, %1 : vector<128x128xi32>
    %30 = arith.extui %29 : vector<128x128xi1> to vector<128x128xi32>
    %31 = arith.sitofp %30 : vector<128x128xi32> to vector<128x128xf32>
    %32 = arith.addf %26, %31 : vector<128x128xf32>
    %33 = vector.extract_strided_slice %0 {offsets = [0, 5], sizes = [128, 1], strides = [1, 1]} : vector<128x8xi32> to vector<128x1xi32>
    %34 = vector.broadcast %33 : vector<128x1xi32> to vector<128x128xi32>
    %35 = arith.cmpi eq, %34, %1 : vector<128x128xi32>
    %36 = arith.extui %35 : vector<128x128xi1> to vector<128x128xi32>
    %37 = arith.sitofp %36 : vector<128x128xi32> to vector<128x128xf32>
    %38 = arith.addf %32, %37 : vector<128x128xf32>
    %39 = vector.extract_strided_slice %0 {offsets = [0, 6], sizes = [128, 1], strides = [1, 1]} : vector<128x8xi32> to vector<128x1xi32>
    %40 = vector.broadcast %39 : vector<128x1xi32> to vector<128x128xi32>
    %41 = arith.cmpi eq, %40, %1 : vector<128x128xi32>
    %42 = arith.extui %41 : vector<128x128xi1> to vector<128x128xi32>
    %43 = arith.sitofp %42 : vector<128x128xi32> to vector<128x128xf32>
    %44 = arith.addf %38, %43 : vector<128x128xf32>
    %45 = vector.extract_strided_slice %0 {offsets = [0, 7], sizes = [128, 1], strides = [1, 1]} : vector<128x8xi32> to vector<128x1xi32>
    %46 = vector.broadcast %45 : vector<128x1xi32> to vector<128x128xi32>
    %47 = arith.cmpi eq, %46, %1 : vector<128x128xi32>
    %48 = arith.extui %47 : vector<128x128xi1> to vector<128x128xi32>
    %49 = arith.sitofp %48 : vector<128x128xi32> to vector<128x128xf32>
    %50 = arith.addf %44, %49 : vector<128x128xf32>
    %51 = arith.truncf %50 : vector<128x128xf32> to vector<128x128xbf16>
    %c0_1 = arith.constant 0 : index
    %c0_2 = arith.constant 0 : index
    %52 = vector.load %arg3[%c0_1, %c0_2] : memref<128x128xbf16, #tpu.memory_space<vmem>>, vector<128x128xbf16>
    %cst_3 = arith.constant dense<0.000000e+00> : vector<128x128xf32>
    %53 = tpu.matmul %51, %52, %cst_3 {dimension_numbers = #tpu.dot_dimension_numbers<[1], [0], [0], [1], [0, 0, 1, 1], [], []>} : vector<128x128xbf16>, vector<128x128xbf16>, vector<128x128xf32> -> vector<128x128xf32>
    %cst_4 = arith.constant 1.250000e-01 : f32
    %54 = vector.broadcast %cst_4 : f32 to vector<128x128xf32>
    %55 = arith.mulf %53, %54 : vector<128x128xf32>
    %56 = arith.truncf %55 : vector<128x128xf32> to vector<128x128xbf16>
    %c0_5 = arith.constant 0 : index
    %c0_6 = arith.constant 0 : index
    %57 = vector.load %arg4[%c0_5, %c0_6] : memref<128x128xbf16, #tpu.memory_space<vmem>>, vector<128x128xbf16>
    %cst_7 = arith.constant dense<0.000000e+00> : vector<128x128xf32>
    %58 = tpu.matmul %56, %57, %cst_7 {dimension_numbers = #tpu.dot_dimension_numbers<[1], [0], [0], [1], [0, 0, 1, 1], [], []>} : vector<128x128xbf16>, vector<128x128xbf16>, vector<128x128xf32> -> vector<128x128xf32>
    %c0_8 = arith.constant 0 : index
    %c0_9 = arith.constant 0 : index
    %59 = vector.load %arg5[%c0_8, %c0_9] : memref<1x128xf32, #tpu.memory_space<vmem>>, vector<1x128xf32>
    %60 = vector.broadcast %59 : vector<1x128xf32> to vector<128x128xf32>
    %61 = arith.addf %58, %60 : vector<128x128xf32>
    %cst_10 = arith.constant dense<0xFF800000> : vector<128xf32>
    %62 = vector.multi_reduction <maximumf>, %61, %cst_10 [1] : vector<128x128xf32> to vector<128xf32>
    %63 = vector.shape_cast %62 : vector<128xf32> to vector<128x1xf32>
    %64 = vector.broadcast %63 : vector<128x1xf32> to vector<128x128xf32>
    %65 = arith.subf %61, %64 : vector<128x128xf32>
    %66 = math.exp %65 : vector<128x128xf32>
    %cst_11 = arith.constant dense<0.000000e+00> : vector<128xf32>
    %67 = vector.multi_reduction <add>, %66, %cst_11 [1] : vector<128x128xf32> to vector<128xf32>
    %68 = vector.shape_cast %67 : vector<128xf32> to vector<128x1xf32>
    %69 = math.log %68 : vector<128x1xf32>
    %70 = tpu.iota {dimensions = array<i32: 1>} : vector<128x128xi32>
    %c0_12 = arith.constant 0 : index
    %c0_13 = arith.constant 0 : index
    %71 = vector.load %arg2[%c0_12, %c0_13] : memref<128x1xi32, #tpu.memory_space<vmem>>, vector<128x1xi32>
    %72 = vector.broadcast %71 : vector<128x1xi32> to vector<128x128xi32>
    %73 = arith.cmpi eq, %70, %72 : vector<128x128xi32>
    %cst_14 = arith.constant 0.000000e+00 : f32
    %74 = vector.broadcast %cst_14 : f32 to vector<128x128xf32>
    %75 = arith.select %73, %65, %74 : vector<128x128xi1>, vector<128x128xf32>
    %cst_15 = arith.constant dense<0.000000e+00> : vector<128xf32>
    %76 = vector.multi_reduction <add>, %75, %cst_15 [1] : vector<128x128xf32> to vector<128xf32>
    %77 = vector.shape_cast %76 : vector<128xf32> to vector<128x1xf32>
    %c128_i32 = arith.constant 128 : i32
    %78 = arith.muli %arg0, %c128_i32 : i32
    %79 = tpu.iota {dimensions = array<i32: 0>} : vector<128x1xi32>
    %80 = vector.broadcast %78 : i32 to vector<128x1xi32>
    %81 = arith.addi %80, %79 : vector<128x1xi32>
    %c200_i32 = arith.constant 200 : i32
    %82 = vector.broadcast %c200_i32 : i32 to vector<128x1xi32>
    %83 = arith.cmpi slt, %81, %82 : vector<128x1xi32>
    %84 = arith.subf %77, %69 : vector<128x1xf32>
    %cst_16 = arith.constant 0.000000e+00 : f32
    %85 = vector.broadcast %cst_16 : f32 to vector<128x1xf32>
    %86 = arith.select %83, %84, %85 : vector<128x1xi1>, vector<128x1xf32>
    %87 = vector.shape_cast %86 : vector<128x1xf32> to vector<1x128x1xf32>
    %cst_17 = arith.constant dense<0.000000e+00> : vector<1xf32>
    %88 = vector.multi_reduction <add>, %87, %cst_17 [1, 2] : vector<1x128x1xf32> to vector<1xf32>
    %89 = vector.shape_cast %88 : vector<1xf32> to vector<1x1x1xf32>
    %90 = vector.extract %89[0, 0, 0] : f32 from vector<1x1x1xf32>
    %91 = vector.broadcast %63 : vector<128x1xf32> to vector<128x128xf32>
    %92 = arith.cmpf oeq, %61, %91 : vector<128x128xf32>
    %c128_i32_18 = arith.constant 128 : i32
    %93 = vector.broadcast %c128_i32_18 : i32 to vector<128x128xi32>
    %94 = arith.select %92, %70, %93 : vector<128x128xi1>, vector<128x128xi32>
    %cst_19 = arith.constant dense<2147483647> : vector<128xi32>
    %95 = vector.multi_reduction <minsi>, %94, %cst_19 [1] : vector<128x128xi32> to vector<128xi32>
    %96 = vector.shape_cast %95 : vector<128xi32> to vector<128x1xi32>
    %97 = arith.cmpi eq, %96, %71 : vector<128x1xi32>
    %98 = arith.andi %97, %83 : vector<128x1xi1>
    %99 = arith.extui %98 : vector<128x1xi1> to vector<128x1xi32>
    %100 = vector.shape_cast %99 : vector<128x1xi32> to vector<1x128x1xi32>
    %cst_20 = arith.constant dense<0> : vector<1xi32>
    %101 = vector.multi_reduction <add>, %100, %cst_20 [1, 2] : vector<1x128x1xi32> to vector<1xi32>
    %102 = vector.shape_cast %101 : vector<1xi32> to vector<1x1x1xi32>
    %103 = vector.extract %102[0, 0, 0] : i32 from vector<1x1x1xi32>
    %c0_i32 = arith.constant 0 : i32
    %104 = vector.broadcast %c0_i32 : i32 to vector<1x8x128xi32>
    %105 = vector.broadcast %103 : i32 to vector<1x8x128xi32>
    %106 = arith.addi %104, %105 : vector<1x8x128xi32>
    %c0_21 = arith.constant 0 : index
    %c0_22 = arith.constant 0 : index
    %c0_23 = arith.constant 0 : index
    %107 = vector.load %arg6[%c0_21, %c0_22, %c0_23] : memref<1x8x128xi32, #tpu.memory_space<vmem>>, vector<1x8x128xi32>
    tpu.vector_store %arg6[%c0_21, %c0_22, %c0_23], %106 {strides = array<i32>} : memref<1x8x128xi32, #tpu.memory_space<vmem>>, vector<1x8x128xi32>,
    %cst_24 = arith.constant 0.000000e+00 : f32
    %108 = vector.broadcast %cst_24 : f32 to vector<1x8x128xf32>
    %109 = vector.broadcast %90 : f32 to vector<1x8x128xf32>
    %110 = arith.addf %108, %109 : vector<1x8x128xf32>
    %c0_25 = arith.constant 0 : index
    %c0_26 = arith.constant 0 : index
    %c0_27 = arith.constant 0 : index
    %111 = vector.load %arg7[%c0_25, %c0_26, %c0_27] : memref<1x8x128xf32, #tpu.memory_space<vmem>>, vector<1x8x128xf32>
    tpu.vector_store %arg7[%c0_25, %c0_26, %c0_27], %110 {strides = array<i32>} : memref<1x8x128xf32, #tpu.memory_space<vmem>>, vector<1x8x128xf32>,
    return
  }
  func.func @transform_0(%arg0: i32) -> (i32, i32) {
    %c0_i32 = arith.constant 0 : i32
    %c0_i32_0 = arith.constant 0 : i32
    return %arg0, %c0_i32 : i32, i32
  }
  func.func @transform_1(%arg0: i32) -> (i32, i32) {
    %c0_i32 = arith.constant 0 : i32
    %c0_i32_0 = arith.constant 0 : i32
    return %arg0, %c0_i32 : i32, i32
  }
  func.func @transform_2(%arg0: i32) -> (i32, i32) {
    %c0_i32 = arith.constant 0 : i32
    %c0_i32_0 = arith.constant 0 : i32
    %c0_i32_1 = arith.constant 0 : i32
    return %c0_i32, %c0_i32_0 : i32, i32
  }
  func.func @transform_3(%arg0: i32) -> (i32, i32) {
    %c0_i32 = arith.constant 0 : i32
    %c0_i32_0 = arith.constant 0 : i32
    %c0_i32_1 = arith.constant 0 : i32
    return %c0_i32, %c0_i32_0 : i32, i32
  }
  func.func @transform_4(%arg0: i32) -> (i32, i32) {
    %c0_i32 = arith.constant 0 : i32
    %c0_i32_0 = arith.constant 0 : i32
    %c0_i32_1 = arith.constant 0 : i32
    return %c0_i32, %c0_i32_0 : i32, i32
  }
  func.func @transform_5(%arg0: i32) -> (i32, i32, i32) {
    %c0_i32 = arith.constant 0 : i32
    %c0_i32_0 = arith.constant 0 : i32
    %c0_i32_1 = arith.constant 0 : i32
    return %arg0, %c0_i32, %c0_i32_0 : i32, i32, i32
  }
  func.func @transform_6(%arg0: i32) -> (i32, i32, i32) {
    %c0_i32 = arith.constant 0 : i32
    %c0_i32_0 = arith.constant 0 : i32
    %c0_i32_1 = arith.constant 0 : i32
    return %arg0, %c0_i32, %c0_i32_0 : i32, i32, i32
  }
}

</mosaic_0001>

<llo_original>
// kernel: tpu_custom_call.1
$region0: #{tpu_custom_call.1}
  #allocation0 [shape = 'u32[]', space=smem, size = 0x4, offset = 0x4, fixed_abs, tag = 'smem constant byte address 0x4 - core index']
  #allocation1 [shape = 'u32[144,128]{1,0:T(1,128)}', space=vmem, size = 0x12000, scoped, tag = 'internal scratch']
  %s0 = inlined_call_operand.vmem [shape: s32[256,8], index: 0, kind: input, shape index: {}]
  %s1 = inlined_call_operand.vmem [shape: s32[256,1], index: 1, kind: input, shape index: {}]
  %s2 = inlined_call_operand.vmem [shape: bf16[128,128], index: 2, kind: input, shape index: {}]
  %s3 = inlined_call_operand.vmem [shape: bf16[128,128], index: 3, kind: input, shape index: {}]
  %s4 = inlined_call_operand.vmem [shape: f32[1,128], index: 4, kind: input, shape index: {}]
  %s5 = inlined_call_operand.hbm [shape: s32[2,8,128], index: 5, kind: output, shape index: {0}]
  %s6 = inlined_call_operand.hbm [shape: f32[2,8,128], index: 6, kind: output, shape index: {1}]
  %7 = xla_tuple %s5, %s6
  %s8 = sld [smem:[#allocation0]]
  $region61: #{tpu_custom_call.1} parent=0
    _
  %s10 = ssub.s32 1, %s8
  %s11 = scalar_select 0, %s10, %s8
  $region1: #{tpu_custom_call.1} parent=0
    #allocation2 [shape = 'u8[8192]{0}', space=vmem, size = 0x2000, scoped, tag = 'output window, operand 0']
    #allocation3 [shape = 's32[2]{0}', space=sflag, size = 0x8, scoped, tag = 'scoped memory for tpu_custom_call.1']
    #allocation4 [shape = 'u8[8192]{0}', space=vmem, size = 0x2000, scoped, tag = 'output window, operand 1']
    #allocation5 [shape = 's32[2]{0}', space=sflag, size = 0x8, scoped, tag = 'scoped memory for tpu_custom_call.1']
    %12 = vsyncpa [#allocation3], 0
    %s13 = scalar_lea.sflag [#allocation3], 1
    %14 = vsyncpa %s13, 0
    %15 = vsyncpa [#allocation5], 0
    %s16 = scalar_lea.sflag [#allocation5], 1
    %17 = vsyncpa %s16, 0
    loop: start=0, step=1, limit=4
    $region2: #{tpu_custom_call.1} parent=1 // loop_pre_header
      _
    $region3: #{tpu_custom_call.1} parent=1 // loop_header
      %s19 = sphi 0, %s23
      %p20 = scmp.ge.s32.totalorder %s19, 4
      %s29 = sphi 0, %s31
      %s32 = sphi 0, %s29
      %s33 = sphi 0, %s32
      %s49 = sphi 0, %s33
      %s55 = sphi 0, %s57
      %s58 = sphi 0, %s55
      %s59 = sphi 0, %s58
      %s75 = sphi 0, %s59
      %s79 = sphi 0, %s79
      %s81 = sphi 0, %s79
      %s82 = sphi 0, %s81
      %s96 = sphi 0, %s82
      %s100 = sphi 0, %s100
      %s102 = sphi 0, %s100
      %s103 = sphi 0, %s102
      %s117 = sphi 0, %s103
      %s121 = sphi 0, %s121
      %s123 = sphi 0, %s121
      %s124 = sphi 0, %s123
      %s138 = sphi 0, %s124
      %s144 = sphi 0, %s146
      %s147 = sphi 0, %s144
      %s148 = sphi 0, %s147
      %s164 = sphi 0, %s148
      %s170 = sphi 0, %s172
      %s173 = sphi 0, %s170
      %s174 = sphi 0, %s173
      %s190 = sphi 0, %s174
    $region4: #{tpu_custom_call.1} parent=1 // loop_header_branch
      %22 = sbr.rel (%p20) target = $region8
    $region5: #{tpu_custom_call.1} parent=1 // loop_body
      %s24 = ssub.s32 %s19, 1
      %s25 = ssub.s32 %s19, 2
      %s26 = sadd.s32 %s19, 1
      %s27 = ssub.s32 %s19, %s26
      %p28 = scmp.eq.s32.totalorder %s27, 0
      %s30 = sadd.s32 %s29, 1
      %s31 = scalar_select %p28, %s29, %s30
      %p34 = pneg %p28
      %p35 = scmp.eq.s32.totalorder %s19, 1
      %p36 = por %p34, %p35
      %p37 = scmp.ne.s32.totalorder %s29, %s32
      %p38 = scmp.eq.s32.totalorder %s19, 0
      %p39 = por %p37, %p38
      %p40 = scmp.ne.s32.totalorder %s29, %s32
      %p41 = scmp.eq.s32.totalorder %s24, 1
      %p42 = por %p40, %p41
      %p43 = scmp.ne.s32.totalorder %s32, %s33
      %p44 = scmp.eq.s32.totalorder %s24, 0
      %p45 = por %p43, %p44
      %p46 = scmp.ne.s32.totalorder %s32, %s33
      %p47 = scmp.eq.s32.totalorder %s25, 1
      %p48 = por %p46, %p47
      %p50 = scmp.ne.s32.totalorder %s33, %s49
      %p51 = scmp.eq.s32.totalorder %s25, 0
      %p52 = por %p50, %p51
      %s53 = ssub.s32 %s19, %s26
      %p54 = scmp.eq.s32.totalorder %s53, 0
      %s56 = sadd.s32 %s55, 1
      %s57 = scalar_select %p54, %s55, %s56
      %p60 = pneg %p54
      %p61 = scmp.eq.s32.totalorder %s19, 1
      %p62 = por %p60, %p61
      %p63 = scmp.ne.s32.totalorder %s55, %s58
      %p64 = scmp.eq.s32.totalorder %s19, 0
      %p65 = por %p63, %p64
      %p66 = scmp.ne.s32.totalorder %s55, %s58
      %p67 = scmp.eq.s32.totalorder %s24, 1
      %p68 = por %p66, %p67
      %p69 = scmp.ne.s32.totalorder %s58, %s59
      %p70 = scmp.eq.s32.totalorder %s24, 0
      %p71 = por %p69, %p70
      %p72 = scmp.ne.s32.totalorder %s58, %s59
      %p73 = scmp.eq.s32.totalorder %s25, 1
      %p74 = por %p72, %p73
      %p76 = scmp.ne.s32.totalorder %s59, %s75
      %p77 = scmp.eq.s32.totalorder %s25, 0
      %p78 = por %p76, %p77
      %s80 = sadd.s32 %s79, 1
      %p83 = scmp.eq.s32.totalorder %s19, 1
      %p84 = scmp.ne.s32.totalorder %s79, %s81
      %p85 = scmp.eq.s32.totalorder %s19, 0
      %p86 = por %p84, %p85
      %p87 = scmp.ne.s32.totalorder %s79, %s81
      %p88 = scmp.eq.s32.totalorder %s24, 1
      %p89 = por %p87, %p88
      %p90 = scmp.ne.s32.totalorder %s81, %s82
      %p91 = scmp.eq.s32.totalorder %s24, 0
      %p92 = por %p90, %p91
      %p93 = scmp.ne.s32.totalorder %s81, %s82
      %p94 = scmp.eq.s32.totalorder %s25, 1
      %p95 = por %p93, %p94
      %p97 = scmp.ne.s32.totalorder %s82, %s96
      %p98 = scmp.eq.s32.totalorder %s25, 0
      %p99 = por %p97, %p98
      %s101 = sadd.s32 %s100, 1
      %p104 = scmp.eq.s32.totalorder %s19, 1
      %p105 = scmp.ne.s32.totalorder %s100, %s102
      %p106 = scmp.eq.s32.totalorder %s19, 0
      %p107 = por %p105, %p106
      %p108 = scmp.ne.s32.totalorder %s100, %s102
      %p109 = scmp.eq.s32.totalorder %s24, 1
      %p110 = por %p108, %p109
      %p111 = scmp.ne.s32.totalorder %s102, %s103
      %p112 = scmp.eq.s32.totalorder %s24, 0
      %p113 = por %p111, %p112
      %p114 = scmp.ne.s32.totalorder %s102, %s103
      %p115 = scmp.eq.s32.totalorder %s25, 1
      %p116 = por %p114, %p115
      %p118 = scmp.ne.s32.totalorder %s103, %s117
      %p119 = scmp.eq.s32.totalorder %s25, 0
      %p120 = por %p118, %p119
      %s122 = sadd.s32 %s121, 1
      %p125 = scmp.eq.s32.totalorder %s19, 1
      %p126 = scmp.ne.s32.totalorder %s121, %s123
      %p127 = scmp.eq.s32.totalorder %s19, 0
      %p128 = por %p126, %p127
      %p129 = scmp.ne.s32.totalorder %s121, %s123
      %p130 = scmp.eq.s32.totalorder %s24, 1
      %p131 = por %p129, %p130
      %p132 = scmp.ne.s32.totalorder %s123, %s124
      %p133 = scmp.eq.s32.totalorder %s24, 0
      %p134 = por %p132, %p133
      %p135 = scmp.ne.s32.totalorder %s123, %s124
      %p136 = scmp.eq.s32.totalorder %s25, 1
      %p137 = por %p135, %p136
      %p139 = scmp.ne.s32.totalorder %s124, %s138
      %p140 = scmp.eq.s32.totalorder %s25, 0
      %p141 = por %p139, %p140
      %s142 = ssub.s32 %s19, %s26
      %p143 = scmp.eq.s32.totalorder %s142, 0
      %s145 = sadd.s32 %s144, 1
      %s146 = scalar_select %p143, %s144, %s145
      %p149 = pneg %p143
      %p150 = scmp.eq.s32.totalorder %s19, 1
      %p151 = por %p149, %p150
      %p152 = scmp.ne.s32.totalorder %s144, %s147
      %p153 = scmp.eq.s32.totalorder %s19, 0
      %p154 = por %p152, %p153
      %p155 = scmp.ne.s32.totalorder %s144, %s147
      %p156 = scmp.eq.s32.totalorder %s24, 1
      %p157 = por %p155, %p156
      %p158 = scmp.ne.s32.totalorder %s147, %s148
      %p159 = scmp.eq.s32.totalorder %s24, 0
      %p160 = por %p158, %p159
      %p161 = scmp.ne.s32.totalorder %s147, %s148
      %p162 = scmp.eq.s32.totalorder %s25, 1
      %p163 = por %p161, %p162
      %p165 = scmp.ne.s32.totalorder %s148, %s164
      %p166 = scmp.eq.s32.totalorder %s25, 0
      %p167 = por %p165, %p166
      %s168 = ssub.s32 %s19, %s26
      %p169 = scmp.eq.s32.totalorder %s168, 0
      %s171 = sadd.s32 %s170, 1
      %s172 = scalar_select %p169, %s170, %s171
      %p175 = pneg %p169
      %p176 = scmp.eq.s32.totalorder %s19, 1
      %p177 = por %p175, %p176
      %p178 = scmp.ne.s32.totalorder %s170, %s173
      %p179 = scmp.eq.s32.totalorder %s19, 0
      %p180 = por %p178, %p179
      %p181 = scmp.ne.s32.totalorder %s170, %s173
      %p182 = scmp.eq.s32.totalorder %s24, 1
      %p183 = por %p181, %p182
      %p184 = scmp.ne.s32.totalorder %s173, %s174
      %p185 = scmp.eq.s32.totalorder %s24, 0
      %p186 = por %p184, %p185
      %p187 = scmp.ne.s32.totalorder %s173, %s174
      %p188 = scmp.eq.s32.totalorder %s25, 1
      %p189 = por %p187, %p188
      %p191 = scmp.ne.s32.totalorder %s174, %s190
      %p192 = scmp.eq.s32.totalorder %s25, 0
      %p193 = por %p191, %p192
      %p194 = scmp.le.s32.totalorder 1, %s19
      %p195 = scmp.lt.s32.totalorder %s19, 3
      %p196 = pnand %p194, %p195
      %p197 = pneg %p196
      // Predicated region
      $region9: #{tpu_custom_call.1} parent=5 // pred_check
        _
      $region10: #{tpu_custom_call.1} parent=5 // pred_check_branch
        %199 = sbr.rel (%p196) target = $region12
      $region11: #{tpu_custom_call.1} parent=5 // pred_region
        %s200 = ssub.s32 %s19, 1
        // Predicated region
        $region13: #{tpu_custom_call.1} parent=11 // pred_check
          %p201 = pneg %p92
        $region14: #{tpu_custom_call.1} parent=11 // pred_check_branch
          %203 = sbr.rel (%p201) target = $region16
        $region15: #{tpu_custom_call.1} parent=11 // pred_region
          _
        $region16: #{tpu_custom_call.1} parent=11 // pred_fallthru
          _
        // Predicated region
        $region17: #{tpu_custom_call.1} parent=11 // pred_check
          %p204 = pneg %p113
        $region18: #{tpu_custom_call.1} parent=11 // pred_check_branch
          %206 = sbr.rel (%p204) target = $region20
        $region19: #{tpu_custom_call.1} parent=11 // pred_region
          _
        $region20: #{tpu_custom_call.1} parent=11 // pred_fallthru
          _
        // Predicated region
        $region21: #{tpu_custom_call.1} parent=11 // pred_check
          %p207 = pneg %p134
        $region22: #{tpu_custom_call.1} parent=11 // pred_check_branch
          %209 = sbr.rel (%p207) target = $region24
        $region23: #{tpu_custom_call.1} parent=11 // pred_region
          _
        $region24: #{tpu_custom_call.1} parent=11 // pred_fallthru
          _
      $region12: #{tpu_custom_call.1} parent=5 // pred_fallthru
        _
      %p210 = scmp.lt.s32.totalorder %s19, 2
      // Predicated region
      $region25: #{tpu_custom_call.1} parent=5 // pred_check
        %p211 = pneg %p210
      $region26: #{tpu_custom_call.1} parent=5 // pred_check_branch
        %213 = sbr.rel (%p211) target = $region28
      $region27: #{tpu_custom_call.1} parent=5 // pred_region
        // Predicated region
        $region29: #{tpu_custom_call.1} parent=27 // pred_check
          %p214 = pneg %p39
        $region30: #{tpu_custom_call.1} parent=27 // pred_check_branch
          %216 = sbr.rel (%p214) target = $region32
        $region31: #{tpu_custom_call.1} parent=27 // pred_region
          %s217 = smul.u32 16, %s19
          %p218 = scmp.lt.s32.totalorder %s217, 31
          %s219 = scalar_select %p218, %s217, 31
          %s220 = smul.addr %s219, 8
          %s221 = scalar_lea.vmem %s0, %s220
          %s222 = smul.u32 16, %s19
        $region32: #{tpu_custom_call.1} parent=27 // pred_fallthru
          _
        // Predicated region
        $region33: #{tpu_custom_call.1} parent=27 // pred_check
          %p223 = pneg %p65
        $region34: #{tpu_custom_call.1} parent=27 // pred_check_branch
          %225 = sbr.rel (%p223) target = $region36
        $region35: #{tpu_custom_call.1} parent=27 // pred_region
          %s226 = smul.u32 16, %s19
          %p227 = scmp.lt.s32.totalorder %s226, 31
          %s228 = scalar_select %p227, %s226, 31
          %s229 = smul.addr %s228, 8
          %s230 = scalar_lea.vmem %s1, %s229
          %s231 = smul.u32 16, %s19
        $region36: #{tpu_custom_call.1} parent=27 // pred_fallthru
          _
      $region28: #{tpu_custom_call.1} parent=5 // pred_fallthru
        _
      %p232 = scmp.le.s32.totalorder 1, %s19
      %p233 = scmp.lt.s32.totalorder %s19, 3
      %p234 = pnand %p232, %p233
      %p235 = pneg %p234
      // Predicated region
      $region37: #{tpu_custom_call.1} parent=5 // pred_check
        _
      $region38: #{tpu_custom_call.1} parent=5 // pred_check_branch
        %237 = sbr.rel (%p234) target = $region40
      $region39: #{tpu_custom_call.1} parent=5 // pred_region
        %s238 = ssub.s32 %s19, 1
        %s239 = smul.u32 16, %s24
        %p240 = scmp.lt.s32.totalorder %s239, 31
        %s241 = scalar_select %p240, %s239, 31
        %s242 = smul.addr %s241, 8
        %s243 = scalar_lea.vmem %s0, %s242
        %p244 = pneg %p45
        %p245 = pneg %p42
        %s246 = smul.u32 16, %s24
        %p247 = scmp.lt.s32.totalorder %s246, 31
        %s248 = scalar_select %p247, %s246, 31
        %s249 = smul.addr %s248, 8
        %s250 = scalar_lea.vmem %s1, %s249
        %p251 = pneg %p71
        %p252 = pneg %p68
        %p253 = pneg %p92
        %p254 = pneg %p89
        %p255 = pneg %p113
        %p256 = pneg %p110
        %p257 = pneg %p134
        %p258 = pneg %p131
        %p259 = pneg %p160
        %p260 = pneg %p157
        %s261 = sand.u32 %s147, 1
        %s262 = scalar_lea.sflag [#allocation3], %s261
        %s263 = sand.u32 %s147, 1
        %s264 = smul.addr %s263, 8
        %s265 = scalar_lea.vmem [#allocation2], %s264
        %p266 = pneg %p186
        %p267 = pneg %p183
        %s268 = sand.u32 %s173, 1
        %s269 = scalar_lea.sflag [#allocation5], %s268
        %s270 = sand.u32 %s173, 1
        %s271 = smul.addr %s270, 8
        %s272 = scalar_lea.vmem [#allocation4], %s271
        %s273 = smul.u32 16, %s24
        %p274 = scmp.lt.s32.totalorder %s273, 31
        %s275 = scalar_select %p274, %s273, 31
        %s276 = smul.addr %s275, 8
        %s277 = scalar_lea.vmem %s0, %s276
        %s278 = smul.u32 16, %s24
        %s279 = smul.u32 16, %s24
        %p280 = scmp.lt.s32.totalorder %s279, 31
        %s281 = scalar_select %p280, %s279, 31
        %s282 = smul.addr %s281, 8
        %s283 = scalar_lea.vmem %s1, %s282
        %s284 = smul.u32 16, %s24
        %v286 = vld [vmem:[%s277] sm:$0xff]
        %v287 = vld [vmem:[%s277 + $0x8] sm:$0xff]
        %v288 = vld [vmem:[%s277 + $0x10] sm:$0xff]
        %v289 = vld [vmem:[%s277 + $0x18] sm:$0xff]
        %v290 = vld [vmem:[%s277 + $0x20] sm:$0xff]
        %v291 = vld [vmem:[%s277 + $0x28] sm:$0xff]
        %v292 = vld [vmem:[%s277 + $0x30] sm:$0xff]
        %v293 = vld [vmem:[%s277 + $0x38] sm:$0xff]
        %v294 = vld [vmem:[%s277 + $0x40] sm:$0xff]
        %v295 = vld [vmem:[%s277 + $0x48] sm:$0xff]
        %v296 = vld [vmem:[%s277 + $0x50] sm:$0xff]
        %v297 = vld [vmem:[%s277 + $0x58] sm:$0xff]
        %v298 = vld [vmem:[%s277 + $0x60] sm:$0xff]
        %v299 = vld [vmem:[%s277 + $0x68] sm:$0xff]
        %v300 = vld [vmem:[%s277 + $0x70] sm:$0xff]
        %v301 = vld [vmem:[%s277 + $0x78] sm:$0xff]
        %v302 = vlaneseq
        %v303 = vand.u32 %v302, 127
        %304 = vset.pattern.permute.xlu0 0
        %305 = vperm.xlu0 %304, %v286
        %v306 = vpop.permute.xlu0 %305
        %307 = vset.pattern.permute.xlu0 0
        %308 = vperm.xlu0 %307, %v287
        %v309 = vpop.permute.xlu0 %308
        %310 = vset.pattern.permute.xlu0 0
        %311 = vperm.xlu0 %310, %v288
        %v312 = vpop.permute.xlu0 %311
        %313 = vset.pattern.permute.xlu0 0
        %314 = vperm.xlu0 %313, %v289
        %v315 = vpop.permute.xlu0 %314
        %316 = vset.pattern.permute.xlu0 0
        %317 = vperm.xlu0 %316, %v290
        %v318 = vpop.permute.xlu0 %317
        %319 = vset.pattern.permute.xlu0 0
        %320 = vperm.xlu0 %319, %v291
        %v321 = vpop.permute.xlu0 %320
        %322 = vset.pattern.permute.xlu0 0
        %323 = vperm.xlu0 %322, %v292
        %v324 = vpop.permute.xlu0 %323
        %325 = vset.pattern.permute.xlu0 0
        %326 = vperm.xlu0 %325, %v293
        %v327 = vpop.permute.xlu0 %326
        %328 = vset.pattern.permute.xlu0 0
        %329 = vperm.xlu0 %328, %v294
        %v330 = vpop.permute.xlu0 %329
        %331 = vset.pattern.permute.xlu0 0
        %332 = vperm.xlu0 %331, %v295
        %v333 = vpop.permute.xlu0 %332
        %334 = vset.pattern.permute.xlu0 0
        %335 = vperm.xlu0 %334, %v296
        %v336 = vpop.permute.xlu0 %335
        %337 = vset.pattern.permute.xlu0 0
        %338 = vperm.xlu0 %337, %v297
        %v339 = vpop.permute.xlu0 %338
        %340 = vset.pattern.permute.xlu0 0
        %341 = vperm.xlu0 %340, %v298
        %v342 = vpop.permute.xlu0 %341
        %343 = vset.pattern.permute.xlu0 0
        %344 = vperm.xlu0 %343, %v299
        %v345 = vpop.permute.xlu0 %344
        %346 = vset.pattern.permute.xlu0 0
        %347 = vperm.xlu0 %346, %v300
        %v348 = vpop.permute.xlu0 %347
        %349 = vset.pattern.permute.xlu0 0
        %350 = vperm.xlu0 %349, %v301
        %v351 = vpop.permute.xlu0 %350
        %vm352 = vcmp.eq.s32.totalorder %v306, %v303
        %vm353 = vcmp.eq.s32.totalorder %v309, %v303
        %vm354 = vcmp.eq.s32.totalorder %v312, %v303
        %vm355 = vcmp.eq.s32.totalorder %v315, %v303
        %vm356 = vcmp.eq.s32.totalorder %v318, %v303
        %vm357 = vcmp.eq.s32.totalorder %v321, %v303
        %vm358 = vcmp.eq.s32.totalorder %v324, %v303
        %vm359 = vcmp.eq.s32.totalorder %v327, %v303
        %vm360 = vcmp.eq.s32.totalorder %v330, %v303
        %vm361 = vcmp.eq.s32.totalorder %v333, %v303
        %vm362 = vcmp.eq.s32.totalorder %v336, %v303
        %vm363 = vcmp.eq.s32.totalorder %v339, %v303
        %vm364 = vcmp.eq.s32.totalorder %v342, %v303
        %vm365 = vcmp.eq.s32.totalorder %v345, %v303
        %vm366 = vcmp.eq.s32.totalorder %v348, %v303
        %vm367 = vcmp.eq.s32.totalorder %v351, %v303
        %v368 = vsel %vm352, 1, 0
        %v369 = vsel %vm353, 1, 0
        %v370 = vsel %vm354, 1, 0
        %v371 = vsel %vm355, 1, 0
        %v372 = vsel %vm356, 1, 0
        %v373 = vsel %vm357, 1, 0
        %v374 = vsel %vm358, 1, 0
        %v375 = vsel %vm359, 1, 0
        %v376 = vsel %vm360, 1, 0
        %v377 = vsel %vm361, 1, 0
        %v378 = vsel %vm362, 1, 0
        %v379 = vsel %vm363, 1, 0
        %v380 = vsel %vm364, 1, 0
        %v381 = vsel %vm365, 1, 0
        %v382 = vsel %vm366, 1, 0
        %v383 = vsel %vm367, 1, 0
        %v384 = vcvt.s32.f32 %v368
        %v385 = vcvt.s32.f32 %v369
        %v386 = vcvt.s32.f32 %v370
        %v387 = vcvt.s32.f32 %v371
        %v388 = vcvt.s32.f32 %v372
        %v389 = vcvt.s32.f32 %v373
        %v390 = vcvt.s32.f32 %v374
        %v391 = vcvt.s32.f32 %v375
        %v392 = vcvt.s32.f32 %v376
        %v393 = vcvt.s32.f32 %v377
        %v394 = vcvt.s32.f32 %v378
        %v395 = vcvt.s32.f32 %v379
        %v396 = vcvt.s32.f32 %v380
        %v397 = vcvt.s32.f32 %v381
        %v398 = vcvt.s32.f32 %v382
        %v399 = vcvt.s32.f32 %v383
        %v400 = vadd.f32 %v384, 0.0
        %v401 = vadd.f32 %v385, 0.0
        %v402 = vadd.f32 %v386, 0.0
        %v403 = vadd.f32 %v387, 0.0
        %v404 = vadd.f32 %v388, 0.0
        %v405 = vadd.f32 %v389, 0.0
        %v406 = vadd.f32 %v390, 0.0
        %v407 = vadd.f32 %v391, 0.0
        %v408 = vadd.f32 %v392, 0.0
        %v409 = vadd.f32 %v393, 0.0
        %v410 = vadd.f32 %v394, 0.0
        %v411 = vadd.f32 %v395, 0.0
        %v412 = vadd.f32 %v396, 0.0
        %v413 = vadd.f32 %v397, 0.0
        %v414 = vadd.f32 %v398, 0.0
        %v415 = vadd.f32 %v399, 0.0
        %416 = vset.pattern.permute.xlu0 1
        %417 = vperm.xlu0 %416, %v286
        %v418 = vpop.permute.xlu0 %417
        %419 = vset.pattern.permute.xlu0 1
        %420 = vperm.xlu0 %419, %v287
        %v421 = vpop.permute.xlu0 %420
        %422 = vset.pattern.permute.xlu0 1
        %423 = vperm.xlu0 %422, %v288
        %v424 = vpop.permute.xlu0 %423
        %425 = vset.pattern.permute.xlu0 1
        %426 = vperm.xlu0 %425, %v289
        %v427 = vpop.permute.xlu0 %426
        %428 = vset.pattern.permute.xlu0 1
        %429 = vperm.xlu0 %428, %v290
        %v430 = vpop.permute.xlu0 %429
        %431 = vset.pattern.permute.xlu0 1
        %432 = vperm.xlu0 %431, %v291
        %v433 = vpop.permute.xlu0 %432
        %434 = vset.pattern.permute.xlu0 1
        %435 = vperm.xlu0 %434, %v292
        %v436 = vpop.permute.xlu0 %435
        %437 = vset.pattern.permute.xlu0 1
        %438 = vperm.xlu0 %437, %v293
        %v439 = vpop.permute.xlu0 %438
        %440 = vset.pattern.permute.xlu0 1
        %441 = vperm.xlu0 %440, %v294
        %v442 = vpop.permute.xlu0 %441
        %443 = vset.pattern.permute.xlu0 1
        %444 = vperm.xlu0 %443, %v295
        %v445 = vpop.permute.xlu0 %444
        %446 = vset.pattern.permute.xlu0 1
        %447 = vperm.xlu0 %446, %v296
        %v448 = vpop.permute.xlu0 %447
        %449 = vset.pattern.permute.xlu0 1
        %450 = vperm.xlu0 %449, %v297
        %v451 = vpop.permute.xlu0 %450
        %452 = vset.pattern.permute.xlu0 1
        %453 = vperm.xlu0 %452, %v298
        %v454 = vpop.permute.xlu0 %453
        %455 = vset.pattern.permute.xlu0 1
        %456 = vperm.xlu0 %455, %v299
        %v457 = vpop.permute.xlu0 %456
        %458 = vset.pattern.permute.xlu0 1
        %459 = vperm.xlu0 %458, %v300
        %v460 = vpop.permute.xlu0 %459
        %461 = vset.pattern.permute.xlu0 1
        %462 = vperm.xlu0 %461, %v301
        %v463 = vpop.permute.xlu0 %462
        %vm464 = vcmp.eq.s32.totalorder %v418, %v303
        %vm465 = vcmp.eq.s32.totalorder %v421, %v303
        %vm466 = vcmp.eq.s32.totalorder %v424, %v303
        %vm467 = vcmp.eq.s32.totalorder %v427, %v303
        %vm468 = vcmp.eq.s32.totalorder %v430, %v303
        %vm469 = vcmp.eq.s32.totalorder %v433, %v303
        %vm470 = vcmp.eq.s32.totalorder %v436, %v303
        %vm471 = vcmp.eq.s32.totalorder %v439, %v303
        %vm472 = vcmp.eq.s32.totalorder %v442, %v303
        %vm473 = vcmp.eq.s32.totalorder %v445, %v303
        %vm474 = vcmp.eq.s32.totalorder %v448, %v303
        %vm475 = vcmp.eq.s32.totalorder %v451, %v303
        %vm476 = vcmp.eq.s32.totalorder %v454, %v303
        %vm477 = vcmp.eq.s32.totalorder %v457, %v303
        %vm478 = vcmp.eq.s32.totalorder %v460, %v303
        %vm479 = vcmp.eq.s32.totalorder %v463, %v303
        %v480 = vsel %vm464, 1, 0
        %v481 = vsel %vm465, 1, 0
        %v482 = vsel %vm466, 1, 0
        %v483 = vsel %vm467, 1, 0
        %v484 = vsel %vm468, 1, 0
        %v485 = vsel %vm469, 1, 0
        %v486 = vsel %vm470, 1, 0
        %v487 = vsel %vm471, 1, 0
        %v488 = vsel %vm472, 1, 0
        %v489 = vsel %vm473, 1, 0
        %v490 = vsel %vm474, 1, 0
        %v491 = vsel %vm475, 1, 0
        %v492 = vsel %vm476, 1, 0
        %v493 = vsel %vm477, 1, 0
        %v494 = vsel %vm478, 1, 0
        %v495 = vsel %vm479, 1, 0
        %v496 = vcvt.s32.f32 %v480
        %v497 = vcvt.s32.f32 %v481
        %v498 = vcvt.s32.f32 %v482
        %v499 = vcvt.s32.f32 %v483
        %v500 = vcvt.s32.f32 %v484
        %v501 = vcvt.s32.f32 %v485
        %v502 = vcvt.s32.f32 %v486
        %v503 = vcvt.s32.f32 %v487
        %v504 = vcvt.s32.f32 %v488
        %v505 = vcvt.s32.f32 %v489
        %v506 = vcvt.s32.f32 %v490
        %v507 = vcvt.s32.f32 %v491
        %v508 = vcvt.s32.f32 %v492
        %v509 = vcvt.s32.f32 %v493
        %v510 = vcvt.s32.f32 %v494
        %v511 = vcvt.s32.f32 %v495
        %v512 = vadd.f32 %v400, %v496
        %v513 = vadd.f32 %v401, %v497
        %v514 = vadd.f32 %v402, %v498
        %v515 = vadd.f32 %v403, %v499
        %v516 = vadd.f32 %v404, %v500
        %v517 = vadd.f32 %v405, %v501
        %v518 = vadd.f32 %v406, %v502
        %v519 = vadd.f32 %v407, %v503
        %v520 = vadd.f32 %v408, %v504
        %v521 = vadd.f32 %v409, %v505
        %v522 = vadd.f32 %v410, %v506
        %v523 = vadd.f32 %v411, %v507
        %v524 = vadd.f32 %v412, %v508
        %v525 = vadd.f32 %v413, %v509
        %v526 = vadd.f32 %v414, %v510
        %v527 = vadd.f32 %v415, %v511
        %528 = vset.pattern.permute.xlu0 2
        %529 = vperm.xlu0 %528, %v286
        %v530 = vpop.permute.xlu0 %529
        %531 = vset.pattern.permute.xlu0 2
        %532 = vperm.xlu0 %531, %v287
        %v533 = vpop.permute.xlu0 %532
        %534 = vset.pattern.permute.xlu0 2
        %535 = vperm.xlu0 %534, %v288
        %v536 = vpop.permute.xlu0 %535
        %537 = vset.pattern.permute.xlu0 2
        %538 = vperm.xlu0 %537, %v289
        %v539 = vpop.permute.xlu0 %538
        %540 = vset.pattern.permute.xlu0 2
        %541 = vperm.xlu0 %540, %v290
        %v542 = vpop.permute.xlu0 %541
        %543 = vset.pattern.permute.xlu0 2
        %544 = vperm.xlu0 %543, %v291
        %v545 = vpop.permute.xlu0 %544
        %546 = vset.pattern.permute.xlu0 2
        %547 = vperm.xlu0 %546, %v292
        %v548 = vpop.permute.xlu0 %547
        %549 = vset.pattern.permute.xlu0 2
        %550 = vperm.xlu0 %549, %v293
        %v551 = vpop.permute.xlu0 %550
        %552 = vset.pattern.permute.xlu0 2
        %553 = vperm.xlu0 %552, %v294
        %v554 = vpop.permute.xlu0 %553
        %555 = vset.pattern.permute.xlu0 2
        %556 = vperm.xlu0 %555, %v295
        %v557 = vpop.permute.xlu0 %556
        %558 = vset.pattern.permute.xlu0 2
        %559 = vperm.xlu0 %558, %v296
        %v560 = vpop.permute.xlu0 %559
        %561 = vset.pattern.permute.xlu0 2
        %562 = vperm.xlu0 %561, %v297
        %v563 = vpop.permute.xlu0 %562
        %564 = vset.pattern.permute.xlu0 2
        %565 = vperm.xlu0 %564, %v298
        %v566 = vpop.permute.xlu0 %565
        %567 = vset.pattern.permute.xlu0 2
        %568 = vperm.xlu0 %567, %v299
        %v569 = vpop.permute.xlu0 %568
        %570 = vset.pattern.permute.xlu0 2
        %571 = vperm.xlu0 %570, %v300
        %v572 = vpop.permute.xlu0 %571
        %573 = vset.pattern.permute.xlu0 2
        %574 = vperm.xlu0 %573, %v301
        %v575 = vpop.permute.xlu0 %574
        %vm576 = vcmp.eq.s32.totalorder %v530, %v303
        %vm577 = vcmp.eq.s32.totalorder %v533, %v303
        %vm578 = vcmp.eq.s32.totalorder %v536, %v303
        %vm579 = vcmp.eq.s32.totalorder %v539, %v303
        %vm580 = vcmp.eq.s32.totalorder %v542, %v303
        %vm581 = vcmp.eq.s32.totalorder %v545, %v303
        %vm582 = vcmp.eq.s32.totalorder %v548, %v303
        %vm583 = vcmp.eq.s32.totalorder %v551, %v303
        %vm584 = vcmp.eq.s32.totalorder %v554, %v303
        %vm585 = vcmp.eq.s32.totalorder %v557, %v303
        %vm586 = vcmp.eq.s32.totalorder %v560, %v303
        %vm587 = vcmp.eq.s32.totalorder %v563, %v303
        %vm588 = vcmp.eq.s32.totalorder %v566, %v303
        %vm589 = vcmp.eq.s32.totalorder %v569, %v303
        %vm590 = vcmp.eq.s32.totalorder %v572, %v303
        %vm591 = vcmp.eq.s32.totalorder %v575, %v303
        %v592 = vsel %vm576, 1, 0
        %v593 = vsel %vm577, 1, 0
        %v594 = vsel %vm578, 1, 0
        %v595 = vsel %vm579, 1, 0
        %v596 = vsel %vm580, 1, 0
        %v597 = vsel %vm581, 1, 0
        %v598 = vsel %vm582, 1, 0
        %v599 = vsel %vm583, 1, 0
        %v600 = vsel %vm584, 1, 0
        %v601 = vsel %vm585, 1, 0
        %v602 = vsel %vm586, 1, 0
        %v603 = vsel %vm587, 1, 0
        %v604 = vsel %vm588, 1, 0
        %v605 = vsel %vm589, 1, 0
        %v606 = vsel %vm590, 1, 0
        %v607 = vsel %vm591, 1, 0
        %v608 = vcvt.s32.f32 %v592
        %v609 = vcvt.s32.f32 %v593
        %v610 = vcvt.s32.f32 %v594
        %v611 = vcvt.s32.f32 %v595
        %v612 = vcvt.s32.f32 %v596
        %v613 = vcvt.s32.f32 %v597
        %v614 = vcvt.s32.f32 %v598
        %v615 = vcvt.s32.f32 %v599
        %v616 = vcvt.s32.f32 %v600
        %v617 = vcvt.s32.f32 %v601
        %v618 = vcvt.s32.f32 %v602
        %v619 = vcvt.s32.f32 %v603
        %v620 = vcvt.s32.f32 %v604
        %v621 = vcvt.s32.f32 %v605
        %v622 = vcvt.s32.f32 %v606
        %v623 = vcvt.s32.f32 %v607
        %v624 = vadd.f32 %v512, %v608
        %v625 = vadd.f32 %v513, %v609
        %v626 = vadd.f32 %v514, %v610
        %v627 = vadd.f32 %v515, %v611
        %v628 = vadd.f32 %v516, %v612
        %v629 = vadd.f32 %v517, %v613
        %v630 = vadd.f32 %v518, %v614
        %v631 = vadd.f32 %v519, %v615
        %v632 = vadd.f32 %v520, %v616
        %v633 = vadd.f32 %v521, %v617
        %v634 = vadd.f32 %v522, %v618
        %v635 = vadd.f32 %v523, %v619
        %v636 = vadd.f32 %v524, %v620
        %v637 = vadd.f32 %v525, %v621
        %v638 = vadd.f32 %v526, %v622
        %v639 = vadd.f32 %v527, %v623
        %640 = vset.pattern.permute.xlu0 3
        %641 = vperm.xlu0 %640, %v286
        %v642 = vpop.permute.xlu0 %641
        %643 = vset.pattern.permute.xlu0 3
        %644 = vperm.xlu0 %643, %v287
        %v645 = vpop.permute.xlu0 %644
        %646 = vset.pattern.permute.xlu0 3
        %647 = vperm.xlu0 %646, %v288
        %v648 = vpop.permute.xlu0 %647
        %649 = vset.pattern.permute.xlu0 3
        %650 = vperm.xlu0 %649, %v289
        %v651 = vpop.permute.xlu0 %650
        %652 = vset.pattern.permute.xlu0 3
        %653 = vperm.xlu0 %652, %v290
        %v654 = vpop.permute.xlu0 %653
        %655 = vset.pattern.permute.xlu0 3
        %656 = vperm.xlu0 %655, %v291
        %v657 = vpop.permute.xlu0 %656
        %658 = vset.pattern.permute.xlu0 3
        %659 = vperm.xlu0 %658, %v292
        %v660 = vpop.permute.xlu0 %659
        %661 = vset.pattern.permute.xlu0 3
        %662 = vperm.xlu0 %661, %v293
        %v663 = vpop.permute.xlu0 %662
        %664 = vset.pattern.permute.xlu0 3
        %665 = vperm.xlu0 %664, %v294
        %v666 = vpop.permute.xlu0 %665
        %667 = vset.pattern.permute.xlu0 3
        %668 = vperm.xlu0 %667, %v295
        %v669 = vpop.permute.xlu0 %668
        %670 = vset.pattern.permute.xlu0 3
        %671 = vperm.xlu0 %670, %v296
        %v672 = vpop.permute.xlu0 %671
        %673 = vset.pattern.permute.xlu0 3
        %674 = vperm.xlu0 %673, %v297
        %v675 = vpop.permute.xlu0 %674
        %676 = vset.pattern.permute.xlu0 3
        %677 = vperm.xlu0 %676, %v298
        %v678 = vpop.permute.xlu0 %677
        %679 = vset.pattern.permute.xlu0 3
        %680 = vperm.xlu0 %679, %v299
        %v681 = vpop.permute.xlu0 %680
        %682 = vset.pattern.permute.xlu0 3
        %683 = vperm.xlu0 %682, %v300
        %v684 = vpop.permute.xlu0 %683
        %685 = vset.pattern.permute.xlu0 3
        %686 = vperm.xlu0 %685, %v301
        %v687 = vpop.permute.xlu0 %686
        %vm688 = vcmp.eq.s32.totalorder %v642, %v303
        %vm689 = vcmp.eq.s32.totalorder %v645, %v303
        %vm690 = vcmp.eq.s32.totalorder %v648, %v303
        %vm691 = vcmp.eq.s32.totalorder %v651, %v303
        %vm692 = vcmp.eq.s32.totalorder %v654, %v303
        %vm693 = vcmp.eq.s32.totalorder %v657, %v303
        %vm694 = vcmp.eq.s32.totalorder %v660, %v303
        %vm695 = vcmp.eq.s32.totalorder %v663, %v303
        %vm696 = vcmp.eq.s32.totalorder %v666, %v303
        %vm697 = vcmp.eq.s32.totalorder %v669, %v303
        %vm698 = vcmp.eq.s32.totalorder %v672, %v303
        %vm699 = vcmp.eq.s32.totalorder %v675, %v303
        %vm700 = vcmp.eq.s32.totalorder %v678, %v303
        %vm701 = vcmp.eq.s32.totalorder %v681, %v303
        %vm702 = vcmp.eq.s32.totalorder %v684, %v303
        %vm703 = vcmp.eq.s32.totalorder %v687, %v303
        %v704 = vsel %vm688, 1, 0
        %v705 = vsel %vm689, 1, 0
        %v706 = vsel %vm690, 1, 0
        %v707 = vsel %vm691, 1, 0
        %v708 = vsel %vm692, 1, 0
        %v709 = vsel %vm693, 1, 0
        %v710 = vsel %vm694, 1, 0
        %v711 = vsel %vm695, 1, 0
        %v712 = vsel %vm696, 1, 0
        %v713 = vsel %vm697, 1, 0
        %v714 = vsel %vm698, 1, 0
        %v715 = vsel %vm699, 1, 0
        %v716 = vsel %vm700, 1, 0
        %v717 = vsel %vm701, 1, 0
        %v718 = vsel %vm702, 1, 0
        %v719 = vsel %vm703, 1, 0
        %v720 = vcvt.s32.f32 %v704
        %v721 = vcvt.s32.f32 %v705
        %v722 = vcvt.s32.f32 %v706
        %v723 = vcvt.s32.f32 %v707
        %v724 = vcvt.s32.f32 %v708
        %v725 = vcvt.s32.f32 %v709
        %v726 = vcvt.s32.f32 %v710
        %v727 = vcvt.s32.f32 %v711
        %v728 = vcvt.s32.f32 %v712
        %v729 = vcvt.s32.f32 %v713
        %v730 = vcvt.s32.f32 %v714
        %v731 = vcvt.s32.f32 %v715
        %v732 = vcvt.s32.f32 %v716
        %v733 = vcvt.s32.f32 %v717
        %v734 = vcvt.s32.f32 %v718
        %v735 = vcvt.s32.f32 %v719
        %v736 = vadd.f32 %v624, %v720
        %v737 = vadd.f32 %v625, %v721
        %v738 = vadd.f32 %v626, %v722
        %v739 = vadd.f32 %v627, %v723
        %v740 = vadd.f32 %v628, %v724
        %v741 = vadd.f32 %v629, %v725
        %v742 = vadd.f32 %v630, %v726
        %v743 = vadd.f32 %v631, %v727
        %v744 = vadd.f32 %v632, %v728
        %v745 = vadd.f32 %v633, %v729
        %v746 = vadd.f32 %v634, %v730
        %v747 = vadd.f32 %v635, %v731
        %v748 = vadd.f32 %v636, %v732
        %v749 = vadd.f32 %v637, %v733
        %v750 = vadd.f32 %v638, %v734
        %v751 = vadd.f32 %v639, %v735
        %752 = vset.pattern.permute.xlu0 4
        %753 = vperm.xlu0 %752, %v286
        %v754 = vpop.permute.xlu0 %753
        %755 = vset.pattern.permute.xlu0 4
        %756 = vperm.xlu0 %755, %v287
        %v757 = vpop.permute.xlu0 %756
        %758 = vset.pattern.permute.xlu0 4
        %759 = vperm.xlu0 %758, %v288
        %v760 = vpop.permute.xlu0 %759
        %761 = vset.pattern.permute.xlu0 4
        %762 = vperm.xlu0 %761, %v289
        %v763 = vpop.permute.xlu0 %762
        %764 = vset.pattern.permute.xlu0 4
        %765 = vperm.xlu0 %764, %v290
        %v766 = vpop.permute.xlu0 %765
        %767 = vset.pattern.permute.xlu0 4
        %768 = vperm.xlu0 %767, %v291
        %v769 = vpop.permute.xlu0 %768
        %770 = vset.pattern.permute.xlu0 4
        %771 = vperm.xlu0 %770, %v292
        %v772 = vpop.permute.xlu0 %771
        %773 = vset.pattern.permute.xlu0 4
        %774 = vperm.xlu0 %773, %v293
        %v775 = vpop.permute.xlu0 %774
        %776 = vset.pattern.permute.xlu0 4
        %777 = vperm.xlu0 %776, %v294
        %v778 = vpop.permute.xlu0 %777
        %779 = vset.pattern.permute.xlu0 4
        %780 = vperm.xlu0 %779, %v295
        %v781 = vpop.permute.xlu0 %780
        %782 = vset.pattern.permute.xlu0 4
        %783 = vperm.xlu0 %782, %v296
        %v784 = vpop.permute.xlu0 %783
        %785 = vset.pattern.permute.xlu0 4
        %786 = vperm.xlu0 %785, %v297
        %v787 = vpop.permute.xlu0 %786
        %788 = vset.pattern.permute.xlu0 4
        %789 = vperm.xlu0 %788, %v298
        %v790 = vpop.permute.xlu0 %789
        %791 = vset.pattern.permute.xlu0 4
        %792 = vperm.xlu0 %791, %v299
        %v793 = vpop.permute.xlu0 %792
        %794 = vset.pattern.permute.xlu0 4
        %795 = vperm.xlu0 %794, %v300
        %v796 = vpop.permute.xlu0 %795
        %797 = vset.pattern.permute.xlu0 4
        %798 = vperm.xlu0 %797, %v301
        %v799 = vpop.permute.xlu0 %798
        %vm800 = vcmp.eq.s32.totalorder %v754, %v303
        %vm801 = vcmp.eq.s32.totalorder %v757, %v303
        %vm802 = vcmp.eq.s32.totalorder %v760, %v303
        %vm803 = vcmp.eq.s32.totalorder %v763, %v303
        %vm804 = vcmp.eq.s32.totalorder %v766, %v303
        %vm805 = vcmp.eq.s32.totalorder %v769, %v303
        %vm806 = vcmp.eq.s32.totalorder %v772, %v303
        %vm807 = vcmp.eq.s32.totalorder %v775, %v303
        %vm808 = vcmp.eq.s32.totalorder %v778, %v303
        %vm809 = vcmp.eq.s32.totalorder %v781, %v303
        %vm810 = vcmp.eq.s32.totalorder %v784, %v303
        %vm811 = vcmp.eq.s32.totalorder %v787, %v303
        %vm812 = vcmp.eq.s32.totalorder %v790, %v303
        %vm813 = vcmp.eq.s32.totalorder %v793, %v303
        %vm814 = vcmp.eq.s32.totalorder %v796, %v303
        %vm815 = vcmp.eq.s32.totalorder %v799, %v303
        %v816 = vsel %vm800, 1, 0
        %v817 = vsel %vm801, 1, 0
        %v818 = vsel %vm802, 1, 0
        %v819 = vsel %vm803, 1, 0
        %v820 = vsel %vm804, 1, 0
        %v821 = vsel %vm805, 1, 0
        %v822 = vsel %vm806, 1, 0
        %v823 = vsel %vm807, 1, 0
        %v824 = vsel %vm808, 1, 0
        %v825 = vsel %vm809, 1, 0
        %v826 = vsel %vm810, 1, 0
        %v827 = vsel %vm811, 1, 0
        %v828 = vsel %vm812, 1, 0
        %v829 = vsel %vm813, 1, 0
        %v830 = vsel %vm814, 1, 0
        %v831 = vsel %vm815, 1, 0
        %v832 = vcvt.s32.f32 %v816
        %v833 = vcvt.s32.f32 %v817
        %v834 = vcvt.s32.f32 %v818
        %v835 = vcvt.s32.f32 %v819
        %v836 = vcvt.s32.f32 %v820
        %v837 = vcvt.s32.f32 %v821
        %v838 = vcvt.s32.f32 %v822
        %v839 = vcvt.s32.f32 %v823
        %v840 = vcvt.s32.f32 %v824
        %v841 = vcvt.s32.f32 %v825
        %v842 = vcvt.s32.f32 %v826
        %v843 = vcvt.s32.f32 %v827
        %v844 = vcvt.s32.f32 %v828
        %v845 = vcvt.s32.f32 %v829
        %v846 = vcvt.s32.f32 %v830
        %v847 = vcvt.s32.f32 %v831
        %v848 = vadd.f32 %v736, %v832
        %v849 = vadd.f32 %v737, %v833
        %v850 = vadd.f32 %v738, %v834
        %v851 = vadd.f32 %v739, %v835
        %v852 = vadd.f32 %v740, %v836
        %v853 = vadd.f32 %v741, %v837
        %v854 = vadd.f32 %v742, %v838
        %v855 = vadd.f32 %v743, %v839
        %v856 = vadd.f32 %v744, %v840
        %v857 = vadd.f32 %v745, %v841
        %v858 = vadd.f32 %v746, %v842
        %v859 = vadd.f32 %v747, %v843
        %v860 = vadd.f32 %v748, %v844
        %v861 = vadd.f32 %v749, %v845
        %v862 = vadd.f32 %v750, %v846
        %v863 = vadd.f32 %v751, %v847
        %864 = vset.pattern.permute.xlu0 5
        %865 = vperm.xlu0 %864, %v286
        %v866 = vpop.permute.xlu0 %865
        %867 = vset.pattern.permute.xlu0 5
        %868 = vperm.xlu0 %867, %v287
        %v869 = vpop.permute.xlu0 %868
        %870 = vset.pattern.permute.xlu0 5
        %871 = vperm.xlu0 %870, %v288
        %v872 = vpop.permute.xlu0 %871
        %873 = vset.pattern.permute.xlu0 5
        %874 = vperm.xlu0 %873, %v289
        %v875 = vpop.permute.xlu0 %874
        %876 = vset.pattern.permute.xlu0 5
        %877 = vperm.xlu0 %876, %v290
        %v878 = vpop.permute.xlu0 %877
        %879 = vset.pattern.permute.xlu0 5
        %880 = vperm.xlu0 %879, %v291
        %v881 = vpop.permute.xlu0 %880
        %882 = vset.pattern.permute.xlu0 5
        %883 = vperm.xlu0 %882, %v292
        %v884 = vpop.permute.xlu0 %883
        %885 = vset.pattern.permute.xlu0 5
        %886 = vperm.xlu0 %885, %v293
        %v887 = vpop.permute.xlu0 %886
        %888 = vset.pattern.permute.xlu0 5
        %889 = vperm.xlu0 %888, %v294
        %v890 = vpop.permute.xlu0 %889
        %891 = vset.pattern.permute.xlu0 5
        %892 = vperm.xlu0 %891, %v295
        %v893 = vpop.permute.xlu0 %892
        %894 = vset.pattern.permute.xlu0 5
        %895 = vperm.xlu0 %894, %v296
        %v896 = vpop.permute.xlu0 %895
        %897 = vset.pattern.permute.xlu0 5
        %898 = vperm.xlu0 %897, %v297
        %v899 = vpop.permute.xlu0 %898
        %900 = vset.pattern.permute.xlu0 5
        %901 = vperm.xlu0 %900, %v298
        %v902 = vpop.permute.xlu0 %901
        %903 = vset.pattern.permute.xlu0 5
        %904 = vperm.xlu0 %903, %v299
        %v905 = vpop.permute.xlu0 %904
        %906 = vset.pattern.permute.xlu0 5
        %907 = vperm.xlu0 %906, %v300
        %v908 = vpop.permute.xlu0 %907
        %909 = vset.pattern.permute.xlu0 5
        %910 = vperm.xlu0 %909, %v301
        %v911 = vpop.permute.xlu0 %910
        %vm912 = vcmp.eq.s32.totalorder %v866, %v303
        %vm913 = vcmp.eq.s32.totalorder %v869, %v303
        %vm914 = vcmp.eq.s32.totalorder %v872, %v303
        %vm915 = vcmp.eq.s32.totalorder %v875, %v303
        %vm916 = vcmp.eq.s32.totalorder %v878, %v303
        %vm917 = vcmp.eq.s32.totalorder %v881, %v303
        %vm918 = vcmp.eq.s32.totalorder %v884, %v303
        %vm919 = vcmp.eq.s32.totalorder %v887, %v303
        %vm920 = vcmp.eq.s32.totalorder %v890, %v303
        %vm921 = vcmp.eq.s32.totalorder %v893, %v303
        %vm922 = vcmp.eq.s32.totalorder %v896, %v303
        %vm923 = vcmp.eq.s32.totalorder %v899, %v303
        %vm924 = vcmp.eq.s32.totalorder %v902, %v303
        %vm925 = vcmp.eq.s32.totalorder %v905, %v303
        %vm926 = vcmp.eq.s32.totalorder %v908, %v303
        %vm927 = vcmp.eq.s32.totalorder %v911, %v303
        %v928 = vsel %vm912, 1, 0
        %v929 = vsel %vm913, 1, 0
        %v930 = vsel %vm914, 1, 0
        %v931 = vsel %vm915, 1, 0
        %v932 = vsel %vm916, 1, 0
        %v933 = vsel %vm917, 1, 0
        %v934 = vsel %vm918, 1, 0
        %v935 = vsel %vm919, 1, 0
        %v936 = vsel %vm920, 1, 0
        %v937 = vsel %vm921, 1, 0
        %v938 = vsel %vm922, 1, 0
        %v939 = vsel %vm923, 1, 0
        %v940 = vsel %vm924, 1, 0
        %v941 = vsel %vm925, 1, 0
        %v942 = vsel %vm926, 1, 0
        %v943 = vsel %vm927, 1, 0
        %v944 = vcvt.s32.f32 %v928
        %v945 = vcvt.s32.f32 %v929
        %v946 = vcvt.s32.f32 %v930
        %v947 = vcvt.s32.f32 %v931
        %v948 = vcvt.s32.f32 %v932
        %v949 = vcvt.s32.f32 %v933
        %v950 = vcvt.s32.f32 %v934
        %v951 = vcvt.s32.f32 %v935
        %v952 = vcvt.s32.f32 %v936
        %v953 = vcvt.s32.f32 %v937
        %v954 = vcvt.s32.f32 %v938
        %v955 = vcvt.s32.f32 %v939
        %v956 = vcvt.s32.f32 %v940
        %v957 = vcvt.s32.f32 %v941
        %v958 = vcvt.s32.f32 %v942
        %v959 = vcvt.s32.f32 %v943
        %v960 = vadd.f32 %v848, %v944
        %v961 = vadd.f32 %v849, %v945
        %v962 = vadd.f32 %v850, %v946
        %v963 = vadd.f32 %v851, %v947
        %v964 = vadd.f32 %v852, %v948
        %v965 = vadd.f32 %v853, %v949
        %v966 = vadd.f32 %v854, %v950
        %v967 = vadd.f32 %v855, %v951
        %v968 = vadd.f32 %v856, %v952
        %v969 = vadd.f32 %v857, %v953
        %v970 = vadd.f32 %v858, %v954
        %v971 = vadd.f32 %v859, %v955
        %v972 = vadd.f32 %v860, %v956
        %v973 = vadd.f32 %v861, %v957
        %v974 = vadd.f32 %v862, %v958
        %v975 = vadd.f32 %v863, %v959
        %976 = vset.pattern.permute.xlu0 6
        %977 = vperm.xlu0 %976, %v286
        %v978 = vpop.permute.xlu0 %977
        %979 = vset.pattern.permute.xlu0 6
        %980 = vperm.xlu0 %979, %v287
        %v981 = vpop.permute.xlu0 %980
        %982 = vset.pattern.permute.xlu0 6
        %983 = vperm.xlu0 %982, %v288
        %v984 = vpop.permute.xlu0 %983
        %985 = vset.pattern.permute.xlu0 6
        %986 = vperm.xlu0 %985, %v289
        %v987 = vpop.permute.xlu0 %986
        %988 = vset.pattern.permute.xlu0 6
        %989 = vperm.xlu0 %988, %v290
        %v990 = vpop.permute.xlu0 %989
        %991 = vset.pattern.permute.xlu0 6
        %992 = vperm.xlu0 %991, %v291
        %v993 = vpop.permute.xlu0 %992
        %994 = vset.pattern.permute.xlu0 6
        %995 = vperm.xlu0 %994, %v292
        %v996 = vpop.permute.xlu0 %995
        %997 = vset.pattern.permute.xlu0 6
        %998 = vperm.xlu0 %997, %v293
        %v999 = vpop.permute.xlu0 %998
        %1000 = vset.pattern.permute.xlu0 6
        %1001 = vperm.xlu0 %1000, %v294
        %v1002 = vpop.permute.xlu0 %1001
        %1003 = vset.pattern.permute.xlu0 6
        %1004 = vperm.xlu0 %1003, %v295
        %v1005 = vpop.permute.xlu0 %1004
        %1006 = vset.pattern.permute.xlu0 6
        %1007 = vperm.xlu0 %1006, %v296
        %v1008 = vpop.permute.xlu0 %1007
        %1009 = vset.pattern.permute.xlu0 6
        %1010 = vperm.xlu0 %1009, %v297
        %v1011 = vpop.permute.xlu0 %1010
        %1012 = vset.pattern.permute.xlu0 6
        %1013 = vperm.xlu0 %1012, %v298
        %v1014 = vpop.permute.xlu0 %1013
        %1015 = vset.pattern.permute.xlu0 6
        %1016 = vperm.xlu0 %1015, %v299
        %v1017 = vpop.permute.xlu0 %1016
        %1018 = vset.pattern.permute.xlu0 6
        %1019 = vperm.xlu0 %1018, %v300
        %v1020 = vpop.permute.xlu0 %1019
        %1021 = vset.pattern.permute.xlu0 6
        %1022 = vperm.xlu0 %1021, %v301
        %v1023 = vpop.permute.xlu0 %1022
        %vm1024 = vcmp.eq.s32.totalorder %v978, %v303
        %vm1025 = vcmp.eq.s32.totalorder %v981, %v303
        %vm1026 = vcmp.eq.s32.totalorder %v984, %v303
        %vm1027 = vcmp.eq.s32.totalorder %v987, %v303
        %vm1028 = vcmp.eq.s32.totalorder %v990, %v303
        %vm1029 = vcmp.eq.s32.totalorder %v993, %v303
        %vm1030 = vcmp.eq.s32.totalorder %v996, %v303
        %vm1031 = vcmp.eq.s32.totalorder %v999, %v303
        %vm1032 = vcmp.eq.s32.totalorder %v1002, %v303
        %vm1033 = vcmp.eq.s32.totalorder %v1005, %v303
        %vm1034 = vcmp.eq.s32.totalorder %v1008, %v303
        %vm1035 = vcmp.eq.s32.totalorder %v1011, %v303
        %vm1036 = vcmp.eq.s32.totalorder %v1014, %v303
        %vm1037 = vcmp.eq.s32.totalorder %v1017, %v303
        %vm1038 = vcmp.eq.s32.totalorder %v1020, %v303
        %vm1039 = vcmp.eq.s32.totalorder %v1023, %v303
        %v1040 = vsel %vm1024, 1, 0
        %v1041 = vsel %vm1025, 1, 0
        %v1042 = vsel %vm1026, 1, 0
        %v1043 = vsel %vm1027, 1, 0
        %v1044 = vsel %vm1028, 1, 0
        %v1045 = vsel %vm1029, 1, 0
        %v1046 = vsel %vm1030, 1, 0
        %v1047 = vsel %vm1031, 1, 0
        %v1048 = vsel %vm1032, 1, 0
        %v1049 = vsel %vm1033, 1, 0
        %v1050 = vsel %vm1034, 1, 0
        %v1051 = vsel %vm1035, 1, 0
        %v1052 = vsel %vm1036, 1, 0
        %v1053 = vsel %vm1037, 1, 0
        %v1054 = vsel %vm1038, 1, 0
        %v1055 = vsel %vm1039, 1, 0
        %v1056 = vcvt.s32.f32 %v1040
        %v1057 = vcvt.s32.f32 %v1041
        %v1058 = vcvt.s32.f32 %v1042
        %v1059 = vcvt.s32.f32 %v1043
        %v1060 = vcvt.s32.f32 %v1044
        %v1061 = vcvt.s32.f32 %v1045
        %v1062 = vcvt.s32.f32 %v1046
        %v1063 = vcvt.s32.f32 %v1047
        %v1064 = vcvt.s32.f32 %v1048
        %v1065 = vcvt.s32.f32 %v1049
        %v1066 = vcvt.s32.f32 %v1050
        %v1067 = vcvt.s32.f32 %v1051
        %v1068 = vcvt.s32.f32 %v1052
        %v1069 = vcvt.s32.f32 %v1053
        %v1070 = vcvt.s32.f32 %v1054
        %v1071 = vcvt.s32.f32 %v1055
        %v1072 = vadd.f32 %v960, %v1056
        %v1073 = vadd.f32 %v961, %v1057
        %v1074 = vadd.f32 %v962, %v1058
        %v1075 = vadd.f32 %v963, %v1059
        %v1076 = vadd.f32 %v964, %v1060
        %v1077 = vadd.f32 %v965, %v1061
        %v1078 = vadd.f32 %v966, %v1062
        %v1079 = vadd.f32 %v967, %v1063
        %v1080 = vadd.f32 %v968, %v1064
        %v1081 = vadd.f32 %v969, %v1065
        %v1082 = vadd.f32 %v970, %v1066
        %v1083 = vadd.f32 %v971, %v1067
        %v1084 = vadd.f32 %v972, %v1068
        %v1085 = vadd.f32 %v973, %v1069
        %v1086 = vadd.f32 %v974, %v1070
        %v1087 = vadd.f32 %v975, %v1071
        %1088 = vset.pattern.permute.xlu0 7
        %1089 = vperm.xlu0 %1088, %v286
        %v1090 = vpop.permute.xlu0 %1089
        %1091 = vset.pattern.permute.xlu0 7
        %1092 = vperm.xlu0 %1091, %v287
        %v1093 = vpop.permute.xlu0 %1092
        %1094 = vset.pattern.permute.xlu0 7
        %1095 = vperm.xlu0 %1094, %v288
        %v1096 = vpop.permute.xlu0 %1095
        %1097 = vset.pattern.permute.xlu0 7
        %1098 = vperm.xlu0 %1097, %v289
        %v1099 = vpop.permute.xlu0 %1098
        %1100 = vset.pattern.permute.xlu0 7
        %1101 = vperm.xlu0 %1100, %v290
        %v1102 = vpop.permute.xlu0 %1101
        %1103 = vset.pattern.permute.xlu0 7
        %1104 = vperm.xlu0 %1103, %v291
        %v1105 = vpop.permute.xlu0 %1104
        %1106 = vset.pattern.permute.xlu0 7
        %1107 = vperm.xlu0 %1106, %v292
        %v1108 = vpop.permute.xlu0 %1107
        %1109 = vset.pattern.permute.xlu0 7
        %1110 = vperm.xlu0 %1109, %v293
        %v1111 = vpop.permute.xlu0 %1110
        %1112 = vset.pattern.permute.xlu0 7
        %1113 = vperm.xlu0 %1112, %v294
        %v1114 = vpop.permute.xlu0 %1113
        %1115 = vset.pattern.permute.xlu0 7
        %1116 = vperm.xlu0 %1115, %v295
        %v1117 = vpop.permute.xlu0 %1116
        %1118 = vset.pattern.permute.xlu0 7
        %1119 = vperm.xlu0 %1118, %v296
        %v1120 = vpop.permute.xlu0 %1119
        %1121 = vset.pattern.permute.xlu0 7
        %1122 = vperm.xlu0 %1121, %v297
        %v1123 = vpop.permute.xlu0 %1122
        %1124 = vset.pattern.permute.xlu0 7
        %1125 = vperm.xlu0 %1124, %v298
        %v1126 = vpop.permute.xlu0 %1125
        %1127 = vset.pattern.permute.xlu0 7
        %1128 = vperm.xlu0 %1127, %v299
        %v1129 = vpop.permute.xlu0 %1128
        %1130 = vset.pattern.permute.xlu0 7
        %1131 = vperm.xlu0 %1130, %v300
        %v1132 = vpop.permute.xlu0 %1131
        %1133 = vset.pattern.permute.xlu0 7
        %1134 = vperm.xlu0 %1133, %v301
        %v1135 = vpop.permute.xlu0 %1134
        %vm1136 = vcmp.eq.s32.totalorder %v1090, %v303
        %vm1137 = vcmp.eq.s32.totalorder %v1093, %v303
        %vm1138 = vcmp.eq.s32.totalorder %v1096, %v303
        %vm1139 = vcmp.eq.s32.totalorder %v1099, %v303
        %vm1140 = vcmp.eq.s32.totalorder %v1102, %v303
        %vm1141 = vcmp.eq.s32.totalorder %v1105, %v303
        %vm1142 = vcmp.eq.s32.totalorder %v1108, %v303
        %vm1143 = vcmp.eq.s32.totalorder %v1111, %v303
        %vm1144 = vcmp.eq.s32.totalorder %v1114, %v303
        %vm1145 = vcmp.eq.s32.totalorder %v1117, %v303
        %vm1146 = vcmp.eq.s32.totalorder %v1120, %v303
        %vm1147 = vcmp.eq.s32.totalorder %v1123, %v303
        %vm1148 = vcmp.eq.s32.totalorder %v1126, %v303
        %vm1149 = vcmp.eq.s32.totalorder %v1129, %v303
        %vm1150 = vcmp.eq.s32.totalorder %v1132, %v303
        %vm1151 = vcmp.eq.s32.totalorder %v1135, %v303
        %v1152 = vsel %vm1136, 1, 0
        %v1153 = vsel %vm1137, 1, 0
        %v1154 = vsel %vm1138, 1, 0
        %v1155 = vsel %vm1139, 1, 0
        %v1156 = vsel %vm1140, 1, 0
        %v1157 = vsel %vm1141, 1, 0
        %v1158 = vsel %vm1142, 1, 0
        %v1159 = vsel %vm1143, 1, 0
        %v1160 = vsel %vm1144, 1, 0
        %v1161 = vsel %vm1145, 1, 0
        %v1162 = vsel %vm1146, 1, 0
        %v1163 = vsel %vm1147, 1, 0
        %v1164 = vsel %vm1148, 1, 0
        %v1165 = vsel %vm1149, 1, 0
        %v1166 = vsel %vm1150, 1, 0
        %v1167 = vsel %vm1151, 1, 0
        %v1168 = vcvt.s32.f32 %v1152
        %v1169 = vcvt.s32.f32 %v1153
        %v1170 = vcvt.s32.f32 %v1154
        %v1171 = vcvt.s32.f32 %v1155
        %v1172 = vcvt.s32.f32 %v1156
        %v1173 = vcvt.s32.f32 %v1157
        %v1174 = vcvt.s32.f32 %v1158
        %v1175 = vcvt.s32.f32 %v1159
        %v1176 = vcvt.s32.f32 %v1160
        %v1177 = vcvt.s32.f32 %v1161
        %v1178 = vcvt.s32.f32 %v1162
        %v1179 = vcvt.s32.f32 %v1163
        %v1180 = vcvt.s32.f32 %v1164
        %v1181 = vcvt.s32.f32 %v1165
        %v1182 = vcvt.s32.f32 %v1166
        %v1183 = vcvt.s32.f32 %v1167
        %v1184 = vadd.f32 %v1072, %v1168
        %v1185 = vadd.f32 %v1073, %v1169
        %v1186 = vadd.f32 %v1074, %v1170
        %v1187 = vadd.f32 %v1075, %v1171
        %v1188 = vadd.f32 %v1076, %v1172
        %v1189 = vadd.f32 %v1077, %v1173
        %v1190 = vadd.f32 %v1078, %v1174
        %v1191 = vadd.f32 %v1079, %v1175
        %v1192 = vadd.f32 %v1080, %v1176
        %v1193 = vadd.f32 %v1081, %v1177
        %v1194 = vadd.f32 %v1082, %v1178
        %v1195 = vadd.f32 %v1083, %v1179
        %v1196 = vadd.f32 %v1084, %v1180
        %v1197 = vadd.f32 %v1085, %v1181
        %v1198 = vadd.f32 %v1086, %v1182
        %v1199 = vadd.f32 %v1087, %v1183
        %v1200 = vpack.c.bf16 %v1185, %v1184
        %v1201 = vpack.c.bf16 %v1187, %v1186
        %v1202 = vpack.c.bf16 %v1189, %v1188
        %v1203 = vpack.c.bf16 %v1191, %v1190
        %v1204 = vpack.c.bf16 %v1193, %v1192
        %v1205 = vpack.c.bf16 %v1195, %v1194
        %v1206 = vpack.c.bf16 %v1197, %v1196
        %v1207 = vpack.c.bf16 %v1199, %v1198
        %v1208 = vld [vmem:[%s2] sm:$0xf]
        %v1209 = vld [vmem:[%s2 + $0x4] sm:$0xf]
        %v1210 = vld [vmem:[%s2 + $0x8] sm:$0xf]
        %v1211 = vld [vmem:[%s2 + $0xc] sm:$0xf]
        %v1212 = vld [vmem:[%s2 + $0x10] sm:$0xf]
        %v1213 = vld [vmem:[%s2 + $0x14] sm:$0xf]
        %v1214 = vld [vmem:[%s2 + $0x18] sm:$0xf]
        %v1215 = vld [vmem:[%s2 + $0x1c] sm:$0xf]
        %v1216 = vld [vmem:[%s2 + $0x20] sm:$0xf]
        %v1217 = vld [vmem:[%s2 + $0x24] sm:$0xf]
        %v1218 = vld [vmem:[%s2 + $0x28] sm:$0xf]
        %v1219 = vld [vmem:[%s2 + $0x2c] sm:$0xf]
        %v1220 = vld [vmem:[%s2 + $0x30] sm:$0xf]
        %v1221 = vld [vmem:[%s2 + $0x34] sm:$0xf]
        %v1222 = vld [vmem:[%s2 + $0x38] sm:$0xf]
        %v1223 = vld [vmem:[%s2 + $0x3c] sm:$0xf]
        %v1240 = vunpack.c.l.b16 %v1208
        %v1241 = vunpack.c.l.b16 %v1209
        %v1242 = vunpack.c.l.b16 %v1210
        %v1243 = vunpack.c.l.b16 %v1211
        %v1244 = vunpack.c.l.b16 %v1212
        %v1245 = vunpack.c.l.b16 %v1213
        %v1246 = vunpack.c.l.b16 %v1214
        %v1247 = vunpack.c.l.b16 %v1215
        %v1248 = vunpack.c.l.b16 %v1216
        %v1249 = vunpack.c.l.b16 %v1217
        %v1250 = vunpack.c.l.b16 %v1218
        %v1251 = vunpack.c.l.b16 %v1219
        %v1252 = vunpack.c.l.b16 %v1220
        %v1253 = vunpack.c.l.b16 %v1221
        %v1254 = vunpack.c.l.b16 %v1222
        %v1255 = vunpack.c.l.b16 %v1223
        %v1256 = vpack.c.b16 %v1241, %v1240
        %v1257 = vpack.c.b16 %v1243, %v1242
        %v1258 = vpack.c.b16 %v1245, %v1244
        %v1259 = vpack.c.b16 %v1247, %v1246
        %v1260 = vpack.c.b16 %v1249, %v1248
        %v1261 = vpack.c.b16 %v1251, %v1250
        %v1262 = vpack.c.b16 %v1253, %v1252
        %v1263 = vpack.c.b16 %v1255, %v1254
        %1272 = vmatprep.subr.bf16.mxu0 0
        %1273 = vmatpush1.bf16.msra.mxu0 %v1256
        %1274 = vmatprep.subr.bf16.mxu0 0
        %1275 = vmatpush1.bf16.msra.mxu0 %v1257
        %1276 = vmatprep.subr.bf16.mxu0 0
        %1277 = vmatpush1.bf16.msra.mxu0 %v1258
        %1278 = vmatprep.subr.bf16.mxu0 0
        %1279 = vmatpush1.bf16.msra.mxu0 %v1259
        %1280 = vmatprep.subr.bf16.mxu0 0
        %1281 = vmatpush1.bf16.msra.mxu0 %v1260
        %1282 = vmatprep.subr.bf16.mxu0 0
        %1283 = vmatpush1.bf16.msra.mxu0 %v1261
        %1284 = vmatprep.subr.bf16.mxu0 0
        %1285 = vmatpush1.bf16.msra.mxu0 %v1262
        %1286 = vmatprep.subr.bf16.mxu0 0
        %1287 = vmatpush1.bf16.msra.mxu0 %v1263
        %1288 = vmatprep.subr.bf16.mxu0 0
        %1289 = vmatpush1.bf16.msra.mxu0 0
        %1290 = vmatprep.subr.bf16.mxu0 0
        %1291 = vmatpush1.bf16.msra.mxu0 0
        %1292 = vmatprep.subr.bf16.mxu0 0
        %1293 = vmatpush1.bf16.msra.mxu0 0
        %1294 = vmatprep.subr.bf16.mxu0 0
        %1295 = vmatpush1.bf16.msra.mxu0 0
        %1296 = vmatprep.subr.bf16.mxu0 0
        %1297 = vmatpush1.bf16.msra.mxu0 0
        %1298 = vmatprep.subr.bf16.mxu0 0
        %1299 = vmatpush1.bf16.msra.mxu0 0
        %1300 = vmatprep.subr.bf16.mxu0 0
        %1301 = vmatpush1.bf16.msra.mxu0 0
        %1302 = vmatprep.subr.bf16.mxu0 0
        %1303 = vmatpush1.bf16.msra.mxu0 0
        %1304 = vmatprep.mubr.bf16.mxu0 0
        %1305 = vmatmul.mubr.bf16.gmra.mrb[0].mxu0 %v1200
        %v1306 = vpop.f32.mrb[0].mxu0
        %v1307 = vadd.f32 0.0, %v1306
        %v1308 = vpop.f32.mrb[0].mxu0
        %v1309 = vpop.f32.mrb[0].mxu0
        %v1310 = vadd.f32 0.0, %v1309
        %v1311 = vpop.f32.mrb[0].mxu0
        %1312 = vmatprep.mubr.bf16.mxu0 0
        %1313 = vmatmul.mubr.bf16.gmra.mrb[0].mxu0 %v1201
        %v1314 = vpop.f32.mrb[0].mxu0
        %v1315 = vadd.f32 0.0, %v1314
        %v1316 = vpop.f32.mrb[0].mxu0
        %v1317 = vpop.f32.mrb[0].mxu0
        %v1318 = vadd.f32 0.0, %v1317
        %v1319 = vpop.f32.mrb[0].mxu0
        %1320 = vmatprep.mubr.bf16.mxu0 0
        %1321 = vmatmul.mubr.bf16.gmra.mrb[0].mxu0 %v1202
        %v1322 = vpop.f32.mrb[0].mxu0
        %v1323 = vadd.f32 0.0, %v1322
        %v1324 = vpop.f32.mrb[0].mxu0
        %v1325 = vpop.f32.mrb[0].mxu0
        %v1326 = vadd.f32 0.0, %v1325
        %v1327 = vpop.f32.mrb[0].mxu0
        %1328 = vmatprep.mubr.bf16.mxu0 0
        %1329 = vmatmul.mubr.bf16.gmra.mrb[0].mxu0 %v1203
        %v1330 = vpop.f32.mrb[0].mxu0
        %v1331 = vadd.f32 0.0, %v1330
        %v1332 = vpop.f32.mrb[0].mxu0
        %v1333 = vpop.f32.mrb[0].mxu0
        %v1334 = vadd.f32 0.0, %v1333
        %v1335 = vpop.f32.mrb[0].mxu0
        %1336 = vmatprep.mubr.bf16.mxu0 0
        %1337 = vmatmul.mubr.bf16.gmra.mrb[0].mxu0 %v1204
        %v1338 = vpop.f32.mrb[0].mxu0
        %v1339 = vadd.f32 0.0, %v1338
        %v1340 = vpop.f32.mrb[0].mxu0
        %v1341 = vpop.f32.mrb[0].mxu0
        %v1342 = vadd.f32 0.0, %v1341
        %v1343 = vpop.f32.mrb[0].mxu0
        %1344 = vmatprep.mubr.bf16.mxu0 0
        %1345 = vmatmul.mubr.bf16.gmra.mrb[0].mxu0 %v1205
        %v1346 = vpop.f32.mrb[0].mxu0
        %v1347 = vadd.f32 0.0, %v1346
        %v1348 = vpop.f32.mrb[0].mxu0
        %v1349 = vpop.f32.mrb[0].mxu0
        %v1350 = vadd.f32 0.0, %v1349
        %v1351 = vpop.f32.mrb[0].mxu0
        %1352 = vmatprep.mubr.bf16.mxu0 0
        %1353 = vmatmul.mubr.bf16.gmra.mrb[0].mxu0 %v1206
        %v1354 = vpop.f32.mrb[0].mxu0
        %v1355 = vadd.f32 0.0, %v1354
        %v1356 = vpop.f32.mrb[0].mxu0
        %v1357 = vpop.f32.mrb[0].mxu0
        %v1358 = vadd.f32 0.0, %v1357
        %v1359 = vpop.f32.mrb[0].mxu0
        %1360 = vmatprep.mubr.bf16.mxu0 0
        %1361 = vmatmul.mubr.bf16.gmra.mrb[0].mxu0 %v1207
        %v1362 = vpop.f32.mrb[0].mxu0
        %v1363 = vadd.f32 0.0, %v1362
        %v1364 = vpop.f32.mrb[0].mxu0
        %v1365 = vpop.f32.mrb[0].mxu0
        %v1366 = vadd.f32 0.0, %v1365
        %v1367 = vpop.f32.mrb[0].mxu0
        %1368 = vdwg.mxu0
        %v1369 = vmul.f32 %v1307, 0.125
        %v1370 = vmul.f32 %v1310, 0.125
        %v1371 = vmul.f32 %v1315, 0.125
        %v1372 = vmul.f32 %v1318, 0.125
        %v1373 = vmul.f32 %v1323, 0.125
        %v1374 = vmul.f32 %v1326, 0.125
        %v1375 = vmul.f32 %v1331, 0.125
        %v1376 = vmul.f32 %v1334, 0.125
        %v1377 = vmul.f32 %v1339, 0.125
        %v1378 = vmul.f32 %v1342, 0.125
        %v1379 = vmul.f32 %v1347, 0.125
        %v1380 = vmul.f32 %v1350, 0.125
        %v1381 = vmul.f32 %v1355, 0.125
        %v1382 = vmul.f32 %v1358, 0.125
        %v1383 = vmul.f32 %v1363, 0.125
        %v1384 = vmul.f32 %v1366, 0.125
        %v1385 = vpack.c.bf16 %v1370, %v1369
        %v1386 = vpack.c.bf16 %v1372, %v1371
        %v1387 = vpack.c.bf16 %v1374, %v1373
        %v1388 = vpack.c.bf16 %v1376, %v1375
        %v1389 = vpack.c.bf16 %v1378, %v1377
        %v1390 = vpack.c.bf16 %v1380, %v1379
        %v1391 = vpack.c.bf16 %v1382, %v1381
        %v1392 = vpack.c.bf16 %v1384, %v1383
        %v1393 = vld [vmem:[%s3] sm:$0xf]
        %v1394 = vld [vmem:[%s3 + $0x4] sm:$0xf]
        %v1395 = vld [vmem:[%s3 + $0x8] sm:$0xf]
        %v1396 = vld [vmem:[%s3 + $0xc] sm:$0xf]
        %v1397 = vld [vmem:[%s3 + $0x10] sm:$0xf]
        %v1398 = vld [vmem:[%s3 + $0x14] sm:$0xf]
        %v1399 = vld [vmem:[%s3 + $0x18] sm:$0xf]
        %v1400 = vld [vmem:[%s3 + $0x1c] sm:$0xf]
        %v1401 = vld [vmem:[%s3 + $0x20] sm:$0xf]
        %v1402 = vld [vmem:[%s3 + $0x24] sm:$0xf]
        %v1403 = vld [vmem:[%s3 + $0x28] sm:$0xf]
        %v1404 = vld [vmem:[%s3 + $0x2c] sm:$0xf]
        %v1405 = vld [vmem:[%s3 + $0x30] sm:$0xf]
        %v1406 = vld [vmem:[%s3 + $0x34] sm:$0xf]
        %v1407 = vld [vmem:[%s3 + $0x38] sm:$0xf]
        %v1408 = vld [vmem:[%s3 + $0x3c] sm:$0xf]
        %v1409 = vld [vmem:[%s4] sm:$0x1]
        %v1411 = vlaneseq
        %v1412 = vshrl.u32 %v1411, 7
        %v1413 = vsub.s32 0, %v1412
        %v1414 = vrot.slane %v1409, %v1413
        %v1432 = vunpack.c.l.b16 %v1393
        %v1433 = vunpack.c.l.b16 %v1394
        %v1434 = vunpack.c.l.b16 %v1395
        %v1435 = vunpack.c.l.b16 %v1396
        %v1436 = vunpack.c.l.b16 %v1397
        %v1437 = vunpack.c.l.b16 %v1398
        %v1438 = vunpack.c.l.b16 %v1399
        %v1439 = vunpack.c.l.b16 %v1400
        %v1440 = vunpack.c.l.b16 %v1401
        %v1441 = vunpack.c.l.b16 %v1402
        %v1442 = vunpack.c.l.b16 %v1403
        %v1443 = vunpack.c.l.b16 %v1404
        %v1444 = vunpack.c.l.b16 %v1405
        %v1445 = vunpack.c.l.b16 %v1406
        %v1446 = vunpack.c.l.b16 %v1407
        %v1447 = vunpack.c.l.b16 %v1408
        %v1448 = vpack.c.b16 %v1433, %v1432
        %v1449 = vpack.c.b16 %v1435, %v1434
        %v1450 = vpack.c.b16 %v1437, %v1436
        %v1451 = vpack.c.b16 %v1439, %v1438
        %v1452 = vpack.c.b16 %v1441, %v1440
        %v1453 = vpack.c.b16 %v1443, %v1442
        %v1454 = vpack.c.b16 %v1445, %v1444
        %v1455 = vpack.c.b16 %v1447, %v1446
        %1464 = vmatprep.subr.bf16.mxu0 0
        %1465 = vmatpush1.bf16.msra.mxu0 %v1448
        %1466 = vmatprep.subr.bf16.mxu0 0
        %1467 = vmatpush1.bf16.msra.mxu0 %v1449
        %1468 = vmatprep.subr.bf16.mxu0 0
        %1469 = vmatpush1.bf16.msra.mxu0 %v1450
        %1470 = vmatprep.subr.bf16.mxu0 0
        %1471 = vmatpush1.bf16.msra.mxu0 %v1451
        %1472 = vmatprep.subr.bf16.mxu0 0
        %1473 = vmatpush1.bf16.msra.mxu0 %v1452
        %1474 = vmatprep.subr.bf16.mxu0 0
        %1475 = vmatpush1.bf16.msra.mxu0 %v1453
        %1476 = vmatprep.subr.bf16.mxu0 0
        %1477 = vmatpush1.bf16.msra.mxu0 %v1454
        %1478 = vmatprep.subr.bf16.mxu0 0
        %1479 = vmatpush1.bf16.msra.mxu0 %v1455
        %1480 = vmatprep.subr.bf16.mxu0 0
        %1481 = vmatpush1.bf16.msra.mxu0 0
        %1482 = vmatprep.subr.bf16.mxu0 0
        %1483 = vmatpush1.bf16.msra.mxu0 0
        %1484 = vmatprep.subr.bf16.mxu0 0
        %1485 = vmatpush1.bf16.msra.mxu0 0
        %1486 = vmatprep.subr.bf16.mxu0 0
        %1487 = vmatpush1.bf16.msra.mxu0 0
        %1488 = vmatprep.subr.bf16.mxu0 0
        %1489 = vmatpush1.bf16.msra.mxu0 0
        %1490 = vmatprep.subr.bf16.mxu0 0
        %1491 = vmatpush1.bf16.msra.mxu0 0
        %1492 = vmatprep.subr.bf16.mxu0 0
        %1493 = vmatpush1.bf16.msra.mxu0 0
        %1494 = vmatprep.subr.bf16.mxu0 0
        %1495 = vmatpush1.bf16.msra.mxu0 0
        %1496 = vmatprep.mubr.bf16.mxu0 0
        %1497 = vmatmul.mubr.bf16.gmra.mrb[0].mxu0 %v1385
        %v1498 = vpop.f32.mrb[0].mxu0
        %v1499 = vadd.f32 %v1414, %v1498
        %v1500 = vpop.f32.mrb[0].mxu0
        %v1501 = vpop.f32.mrb[0].mxu0
        %v1502 = vadd.f32 %v1414, %v1501
        %v1503 = vpop.f32.mrb[0].mxu0
        %1504 = vmatprep.mubr.bf16.mxu0 0
        %1505 = vmatmul.mubr.bf16.gmra.mrb[0].mxu0 %v1386
        %v1506 = vpop.f32.mrb[0].mxu0
        %v1507 = vadd.f32 %v1414, %v1506
        %v1508 = vpop.f32.mrb[0].mxu0
        %v1509 = vpop.f32.mrb[0].mxu0
        %v1510 = vadd.f32 %v1414, %v1509
        %v1511 = vpop.f32.mrb[0].mxu0
        %1512 = vmatprep.mubr.bf16.mxu0 0
        %1513 = vmatmul.mubr.bf16.gmra.mrb[0].mxu0 %v1387
        %v1514 = vpop.f32.mrb[0].mxu0
        %v1515 = vadd.f32 %v1414, %v1514
        %v1516 = vpop.f32.mrb[0].mxu0
        %v1517 = vpop.f32.mrb[0].mxu0
        %v1518 = vadd.f32 %v1414, %v1517
        %v1519 = vpop.f32.mrb[0].mxu0
        %1520 = vmatprep.mubr.bf16.mxu0 0
        %1521 = vmatmul.mubr.bf16.gmra.mrb[0].mxu0 %v1388
        %v1522 = vpop.f32.mrb[0].mxu0
        %v1523 = vadd.f32 %v1414, %v1522
        %v1524 = vpop.f32.mrb[0].mxu0
        %v1525 = vpop.f32.mrb[0].mxu0
        %v1526 = vadd.f32 %v1414, %v1525
        %v1527 = vpop.f32.mrb[0].mxu0
        %1528 = vmatprep.mubr.bf16.mxu0 0
        %1529 = vmatmul.mubr.bf16.gmra.mrb[0].mxu0 %v1389
        %v1530 = vpop.f32.mrb[0].mxu0
        %v1531 = vadd.f32 %v1414, %v1530
        %v1532 = vpop.f32.mrb[0].mxu0
        %v1533 = vpop.f32.mrb[0].mxu0
        %v1534 = vadd.f32 %v1414, %v1533
        %v1535 = vpop.f32.mrb[0].mxu0
        %1536 = vmatprep.mubr.bf16.mxu0 0
        %1537 = vmatmul.mubr.bf16.gmra.mrb[0].mxu0 %v1390
        %v1538 = vpop.f32.mrb[0].mxu0
        %v1539 = vadd.f32 %v1414, %v1538
        %v1540 = vpop.f32.mrb[0].mxu0
        %v1541 = vpop.f32.mrb[0].mxu0
        %v1542 = vadd.f32 %v1414, %v1541
        %v1543 = vpop.f32.mrb[0].mxu0
        %1544 = vmatprep.mubr.bf16.mxu0 0
        %1545 = vmatmul.mubr.bf16.gmra.mrb[0].mxu0 %v1391
        %v1546 = vpop.f32.mrb[0].mxu0
        %v1547 = vadd.f32 %v1414, %v1546
        %v1548 = vpop.f32.mrb[0].mxu0
        %v1549 = vpop.f32.mrb[0].mxu0
        %v1550 = vadd.f32 %v1414, %v1549
        %v1551 = vpop.f32.mrb[0].mxu0
        %1552 = vmatprep.mubr.bf16.mxu0 0
        %1553 = vmatmul.mubr.bf16.gmra.mrb[0].mxu0 %v1392
        %v1554 = vpop.f32.mrb[0].mxu0
        %v1555 = vadd.f32 %v1414, %v1554
        %v1556 = vpop.f32.mrb[0].mxu0
        %v1557 = vpop.f32.mrb[0].mxu0
        %v1558 = vadd.f32 %v1414, %v1557
        %v1559 = vpop.f32.mrb[0].mxu0
        %1560 = vdwg.mxu0
        %1561 = vmax.xlane.f32.xlu0 %v1499
        %v1562 = vpop.xlane.xlu0 %1561
        %1563 = vmax.xlane.f32.xlu0 %v1502
        %v1564 = vpop.xlane.xlu0 %1563
        %1565 = vmax.xlane.f32.xlu0 %v1507
        %v1566 = vpop.xlane.xlu0 %1565
        %1567 = vmax.xlane.f32.xlu0 %v1510
        %v1568 = vpop.xlane.xlu0 %1567
        %1569 = vmax.xlane.f32.xlu0 %v1515
        %v1570 = vpop.xlane.xlu0 %1569
        %1571 = vmax.xlane.f32.xlu0 %v1518
        %v1572 = vpop.xlane.xlu0 %1571
        %1573 = vmax.xlane.f32.xlu0 %v1523
        %v1574 = vpop.xlane.xlu0 %1573
        %1575 = vmax.xlane.f32.xlu0 %v1526
        %v1576 = vpop.xlane.xlu0 %1575
        %1577 = vmax.xlane.f32.xlu0 %v1531
        %v1578 = vpop.xlane.xlu0 %1577
        %1579 = vmax.xlane.f32.xlu0 %v1534
        %v1580 = vpop.xlane.xlu0 %1579
        %1581 = vmax.xlane.f32.xlu0 %v1539
        %v1582 = vpop.xlane.xlu0 %1581
        %1583 = vmax.xlane.f32.xlu0 %v1542
        %v1584 = vpop.xlane.xlu0 %1583
        %1585 = vmax.xlane.f32.xlu0 %v1547
        %v1586 = vpop.xlane.xlu0 %1585
        %1587 = vmax.xlane.f32.xlu0 %v1550
        %v1588 = vpop.xlane.xlu0 %1587
        %1589 = vmax.xlane.f32.xlu0 %v1555
        %v1590 = vpop.xlane.xlu0 %1589
        %1591 = vmax.xlane.f32.xlu0 %v1558
        %v1592 = vpop.xlane.xlu0 %1591
        %v1593 = vsub.f32 %v1499, %v1562
        %v1594 = vsub.f32 %v1502, %v1564
        %v1595 = vsub.f32 %v1507, %v1566
        %v1596 = vsub.f32 %v1510, %v1568
        %v1597 = vsub.f32 %v1515, %v1570
        %v1598 = vsub.f32 %v1518, %v1572
        %v1599 = vsub.f32 %v1523, %v1574
        %v1600 = vsub.f32 %v1526, %v1576
        %v1601 = vsub.f32 %v1531, %v1578
        %v1602 = vsub.f32 %v1534, %v1580
        %v1603 = vsub.f32 %v1539, %v1582
        %v1604 = vsub.f32 %v1542, %v1584
        %v1605 = vsub.f32 %v1547, %v1586
        %v1606 = vsub.f32 %v1550, %v1588
        %v1607 = vsub.f32 %v1555, %v1590
        %v1608 = vsub.f32 %v1558, %v1592
        %v1609 = vmul.f32 %v1593, 1.442695
        %v1610 = vpow.pop %v1609
        %v1611 = vmul.f32 %v1594, 1.442695
        %v1612 = vpow.pop %v1611
        %v1613 = vmul.f32 %v1595, 1.442695
        %v1614 = vpow.pop %v1613
        %v1615 = vmul.f32 %v1596, 1.442695
        %v1616 = vpow.pop %v1615
        %v1617 = vmul.f32 %v1597, 1.442695
        %v1618 = vpow.pop %v1617
        %v1619 = vmul.f32 %v1598, 1.442695
        %v1620 = vpow.pop %v1619
        %v1621 = vmul.f32 %v1599, 1.442695
        %v1622 = vpow.pop %v1621
        %v1623 = vmul.f32 %v1600, 1.442695
        %v1624 = vpow.pop %v1623
        %v1625 = vmul.f32 %v1601, 1.442695
        %v1626 = vpow.pop %v1625
        %v1627 = vmul.f32 %v1602, 1.442695
        %v1628 = vpow.pop %v1627
        %v1629 = vmul.f32 %v1603, 1.442695
        %v1630 = vpow.pop %v1629
        %v1631 = vmul.f32 %v1604, 1.442695
        %v1632 = vpow.pop %v1631
        %v1633 = vmul.f32 %v1605, 1.442695
        %v1634 = vpow.pop %v1633
        %v1635 = vmul.f32 %v1606, 1.442695
        %v1636 = vpow.pop %v1635
        %v1637 = vmul.f32 %v1607, 1.442695
        %v1638 = vpow.pop %v1637
        %v1639 = vmul.f32 %v1608, 1.442695
        %v1640 = vpow.pop %v1639
        %1641 = vadd.xlane.f32.xlu0 %v1610
        %v1642 = vpop.xlane.xlu0 %1641
        %1643 = vadd.xlane.f32.xlu0 %v1612
        %v1644 = vpop.xlane.xlu0 %1643
        %1645 = vadd.xlane.f32.xlu0 %v1614
        %v1646 = vpop.xlane.xlu0 %1645
        %1647 = vadd.xlane.f32.xlu0 %v1616
        %v1648 = vpop.xlane.xlu0 %1647
        %1649 = vadd.xlane.f32.xlu0 %v1618
        %v1650 = vpop.xlane.xlu0 %1649
        %1651 = vadd.xlane.f32.xlu0 %v1620
        %v1652 = vpop.xlane.xlu0 %1651
        %1653 = vadd.xlane.f32.xlu0 %v1622
        %v1654 = vpop.xlane.xlu0 %1653
        %1655 = vadd.xlane.f32.xlu0 %v1624
        %v1656 = vpop.xlane.xlu0 %1655
        %1657 = vadd.xlane.f32.xlu0 %v1626
        %v1658 = vpop.xlane.xlu0 %1657
        %1659 = vadd.xlane.f32.xlu0 %v1628
        %v1660 = vpop.xlane.xlu0 %1659
        %1661 = vadd.xlane.f32.xlu0 %v1630
        %v1662 = vpop.xlane.xlu0 %1661
        %1663 = vadd.xlane.f32.xlu0 %v1632
        %v1664 = vpop.xlane.xlu0 %1663
        %1665 = vadd.xlane.f32.xlu0 %v1634
        %v1666 = vpop.xlane.xlu0 %1665
        %1667 = vadd.xlane.f32.xlu0 %v1636
        %v1668 = vpop.xlane.xlu0 %1667
        %1669 = vadd.xlane.f32.xlu0 %v1638
        %v1670 = vpop.xlane.xlu0 %1669
        %1671 = vadd.xlane.f32.xlu0 %v1640
        %v1672 = vpop.xlane.xlu0 %1671
        %v1673 = vlog2.pop %v1642
        %v1674 = vmul.f32 %v1673, 0.6931472
        %v1675 = vlog2.pop %v1644
        %v1676 = vmul.f32 %v1675, 0.6931472
        %v1677 = vlog2.pop %v1646
        %v1678 = vmul.f32 %v1677, 0.6931472
        %v1679 = vlog2.pop %v1648
        %v1680 = vmul.f32 %v1679, 0.6931472
        %v1681 = vlog2.pop %v1650
        %v1682 = vmul.f32 %v1681, 0.6931472
        %v1683 = vlog2.pop %v1652
        %v1684 = vmul.f32 %v1683, 0.6931472
        %v1685 = vlog2.pop %v1654
        %v1686 = vmul.f32 %v1685, 0.6931472
        %v1687 = vlog2.pop %v1656
        %v1688 = vmul.f32 %v1687, 0.6931472
        %v1689 = vlog2.pop %v1658
        %v1690 = vmul.f32 %v1689, 0.6931472
        %v1691 = vlog2.pop %v1660
        %v1692 = vmul.f32 %v1691, 0.6931472
        %v1693 = vlog2.pop %v1662
        %v1694 = vmul.f32 %v1693, 0.6931472
        %v1695 = vlog2.pop %v1664
        %v1696 = vmul.f32 %v1695, 0.6931472
        %v1697 = vlog2.pop %v1666
        %v1698 = vmul.f32 %v1697, 0.6931472
        %v1699 = vlog2.pop %v1668
        %v1700 = vmul.f32 %v1699, 0.6931472
        %v1701 = vlog2.pop %v1670
        %v1702 = vmul.f32 %v1701, 0.6931472
        %v1703 = vlog2.pop %v1672
        %v1704 = vmul.f32 %v1703, 0.6931472
        %v1705 = vld [vmem:[%s283] sm:$0xff]
        %v1706 = vld [vmem:[%s283 + $0x8] sm:$0xff]
        %v1707 = vld [vmem:[%s283 + $0x10] sm:$0xff]
        %v1708 = vld [vmem:[%s283 + $0x18] sm:$0xff]
        %v1709 = vld [vmem:[%s283 + $0x20] sm:$0xff]
        %v1710 = vld [vmem:[%s283 + $0x28] sm:$0xff]
        %v1711 = vld [vmem:[%s283 + $0x30] sm:$0xff]
        %v1712 = vld [vmem:[%s283 + $0x38] sm:$0xff]
        %v1713 = vld [vmem:[%s283 + $0x40] sm:$0xff]
        %v1714 = vld [vmem:[%s283 + $0x48] sm:$0xff]
        %v1715 = vld [vmem:[%s283 + $0x50] sm:$0xff]
        %v1716 = vld [vmem:[%s283 + $0x58] sm:$0xff]
        %v1717 = vld [vmem:[%s283 + $0x60] sm:$0xff]
        %v1718 = vld [vmem:[%s283 + $0x68] sm:$0xff]
        %v1719 = vld [vmem:[%s283 + $0x70] sm:$0xff]
        %v1720 = vld [vmem:[%s283 + $0x78] sm:$0xff]
        %1721 = vset.pattern.permute.xlu0 0
        %1722 = vperm.xlu0 %1721, %v1705
        %v1723 = vpop.permute.xlu0 %1722
        %1724 = vset.pattern.permute.xlu0 0
        %1725 = vperm.xlu0 %1724, %v1706
        %v1726 = vpop.permute.xlu0 %1725
        %1727 = vset.pattern.permute.xlu0 0
        %1728 = vperm.xlu0 %1727, %v1707
        %v1729 = vpop.permute.xlu0 %1728
        %1730 = vset.pattern.permute.xlu0 0
        %1731 = vperm.xlu0 %1730, %v1708
        %v1732 = vpop.permute.xlu0 %1731
        %1733 = vset.pattern.permute.xlu0 0
        %1734 = vperm.xlu0 %1733, %v1709
        %v1735 = vpop.permute.xlu0 %1734
        %1736 = vset.pattern.permute.xlu0 0
        %1737 = vperm.xlu0 %1736, %v1710
        %v1738 = vpop.permute.xlu0 %1737
        %1739 = vset.pattern.permute.xlu0 0
        %1740 = vperm.xlu0 %1739, %v1711
        %v1741 = vpop.permute.xlu0 %1740
        %1742 = vset.pattern.permute.xlu0 0
        %1743 = vperm.xlu0 %1742, %v1712
        %v1744 = vpop.permute.xlu0 %1743
        %1745 = vset.pattern.permute.xlu0 0
        %1746 = vperm.xlu0 %1745, %v1713
        %v1747 = vpop.permute.xlu0 %1746
        %1748 = vset.pattern.permute.xlu0 0
        %1749 = vperm.xlu0 %1748, %v1714
        %v1750 = vpop.permute.xlu0 %1749
        %1751 = vset.pattern.permute.xlu0 0
        %1752 = vperm.xlu0 %1751, %v1715
        %v1753 = vpop.permute.xlu0 %1752
        %1754 = vset.pattern.permute.xlu0 0
        %1755 = vperm.xlu0 %1754, %v1716
        %v1756 = vpop.permute.xlu0 %1755
        %1757 = vset.pattern.permute.xlu0 0
        %1758 = vperm.xlu0 %1757, %v1717
        %v1759 = vpop.permute.xlu0 %1758
        %1760 = vset.pattern.permute.xlu0 0
        %1761 = vperm.xlu0 %1760, %v1718
        %v1762 = vpop.permute.xlu0 %1761
        %1763 = vset.pattern.permute.xlu0 0
        %1764 = vperm.xlu0 %1763, %v1719
        %v1765 = vpop.permute.xlu0 %1764
        %1766 = vset.pattern.permute.xlu0 0
        %1767 = vperm.xlu0 %1766, %v1720
        %v1768 = vpop.permute.xlu0 %1767
        %vm1769 = vcmp.eq.s32.totalorder %v303, %v1723
        %vm1770 = vcmp.eq.s32.totalorder %v303, %v1726
        %vm1771 = vcmp.eq.s32.totalorder %v303, %v1729
        %vm1772 = vcmp.eq.s32.totalorder %v303, %v1732
        %vm1773 = vcmp.eq.s32.totalorder %v303, %v1735
        %vm1774 = vcmp.eq.s32.totalorder %v303, %v1738
        %vm1775 = vcmp.eq.s32.totalorder %v303, %v1741
        %vm1776 = vcmp.eq.s32.totalorder %v303, %v1744
        %vm1777 = vcmp.eq.s32.totalorder %v303, %v1747
        %vm1778 = vcmp.eq.s32.totalorder %v303, %v1750
        %vm1779 = vcmp.eq.s32.totalorder %v303, %v1753
        %vm1780 = vcmp.eq.s32.totalorder %v303, %v1756
        %vm1781 = vcmp.eq.s32.totalorder %v303, %v1759
        %vm1782 = vcmp.eq.s32.totalorder %v303, %v1762
        %vm1783 = vcmp.eq.s32.totalorder %v303, %v1765
        %vm1784 = vcmp.eq.s32.totalorder %v303, %v1768
        %v1785 = vsel %vm1769, %v1593, 0.0
        %v1786 = vsel %vm1770, %v1594, 0.0
        %v1787 = vsel %vm1771, %v1595, 0.0
        %v1788 = vsel %vm1772, %v1596, 0.0
        %v1789 = vsel %vm1773, %v1597, 0.0
        %v1790 = vsel %vm1774, %v1598, 0.0
        %v1791 = vsel %vm1775, %v1599, 0.0
        %v1792 = vsel %vm1776, %v1600, 0.0
        %v1793 = vsel %vm1777, %v1601, 0.0
        %v1794 = vsel %vm1778, %v1602, 0.0
        %v1795 = vsel %vm1779, %v1603, 0.0
        %v1796 = vsel %vm1780, %v1604, 0.0
        %v1797 = vsel %vm1781, %v1605, 0.0
        %v1798 = vsel %vm1782, %v1606, 0.0
        %v1799 = vsel %vm1783, %v1607, 0.0
        %v1800 = vsel %vm1784, %v1608, 0.0
        %1801 = vadd.xlane.f32.xlu0 %v1785
        %v1802 = vpop.xlane.xlu0 %1801
        %1803 = vadd.xlane.f32.xlu0 %v1786
        %v1804 = vpop.xlane.xlu0 %1803
        %1805 = vadd.xlane.f32.xlu0 %v1787
        %v1806 = vpop.xlane.xlu0 %1805
        %1807 = vadd.xlane.f32.xlu0 %v1788
        %v1808 = vpop.xlane.xlu0 %1807
        %1809 = vadd.xlane.f32.xlu0 %v1789
        %v1810 = vpop.xlane.xlu0 %1809
        %1811 = vadd.xlane.f32.xlu0 %v1790
        %v1812 = vpop.xlane.xlu0 %1811
        %1813 = vadd.xlane.f32.xlu0 %v1791
        %v1814 = vpop.xlane.xlu0 %1813
        %1815 = vadd.xlane.f32.xlu0 %v1792
        %v1816 = vpop.xlane.xlu0 %1815
        %1817 = vadd.xlane.f32.xlu0 %v1793
        %v1818 = vpop.xlane.xlu0 %1817
        %1819 = vadd.xlane.f32.xlu0 %v1794
        %v1820 = vpop.xlane.xlu0 %1819
        %1821 = vadd.xlane.f32.xlu0 %v1795
        %v1822 = vpop.xlane.xlu0 %1821
        %1823 = vadd.xlane.f32.xlu0 %v1796
        %v1824 = vpop.xlane.xlu0 %1823
        %1825 = vadd.xlane.f32.xlu0 %v1797
        %v1826 = vpop.xlane.xlu0 %1825
        %1827 = vadd.xlane.f32.xlu0 %v1798
        %v1828 = vpop.xlane.xlu0 %1827
        %1829 = vadd.xlane.f32.xlu0 %v1799
        %v1830 = vpop.xlane.xlu0 %1829
        %1831 = vadd.xlane.f32.xlu0 %v1800
        %v1832 = vpop.xlane.xlu0 %1831
        %s1833 = smul.u32 %s24, 128
        %v1834 = vlaneseq
        %v1835 = vshrl.u32 %v1834, 7
        %v1836 = vadd.s32 %v1835, 8
        %v1837 = vadd.s32 %v1835, 16
        %v1838 = vadd.s32 %v1835, 24
        %v1839 = vadd.s32 %v1835, 32
        %v1840 = vadd.s32 %v1835, 40
        %v1841 = vadd.s32 %v1835, 48
        %v1842 = vadd.s32 %v1835, 56
        %v1843 = vadd.s32 %v1835, 64
        %v1844 = vadd.s32 %v1835, 72
        %v1845 = vadd.s32 %v1835, 80
        %v1846 = vadd.s32 %v1835, 88
        %v1847 = vadd.s32 %v1835, 96
        %v1848 = vadd.s32 %v1835, 104
        %v1849 = vadd.s32 %v1835, 112
        %v1850 = vadd.s32 %v1835, 120
        %v1851 = vstv %s1833
        %v1852 = vadd.s32 %v1851, %v1835
        %v1853 = vadd.s32 %v1851, %v1836
        %v1854 = vadd.s32 %v1851, %v1837
        %v1855 = vadd.s32 %v1851, %v1838
        %v1856 = vadd.s32 %v1851, %v1839
        %v1857 = vadd.s32 %v1851, %v1840
        %v1858 = vadd.s32 %v1851, %v1841
        %v1859 = vadd.s32 %v1851, %v1842
        %v1860 = vadd.s32 %v1851, %v1843
        %v1861 = vadd.s32 %v1851, %v1844
        %v1862 = vadd.s32 %v1851, %v1845
        %v1863 = vadd.s32 %v1851, %v1846
        %v1864 = vadd.s32 %v1851, %v1847
        %v1865 = vadd.s32 %v1851, %v1848
        %v1866 = vadd.s32 %v1851, %v1849
        %v1867 = vadd.s32 %v1851, %v1850
        %vm1868 = vcmp.lt.s32.totalorder %v1852, 200
        %vm1869 = vcmp.lt.s32.totalorder %v1853, 200
        %vm1870 = vcmp.lt.s32.totalorder %v1854, 200
        %vm1871 = vcmp.lt.s32.totalorder %v1855, 200
        %vm1872 = vcmp.lt.s32.totalorder %v1856, 200
        %vm1873 = vcmp.lt.s32.totalorder %v1857, 200
        %vm1874 = vcmp.lt.s32.totalorder %v1858, 200
        %vm1875 = vcmp.lt.s32.totalorder %v1859, 200
        %vm1876 = vcmp.lt.s32.totalorder %v1860, 200
        %vm1877 = vcmp.lt.s32.totalorder %v1861, 200
        %vm1878 = vcmp.lt.s32.totalorder %v1862, 200
        %vm1879 = vcmp.lt.s32.totalorder %v1863, 200
        %vm1880 = vcmp.lt.s32.totalorder %v1864, 200
        %vm1881 = vcmp.lt.s32.totalorder %v1865, 200
        %vm1882 = vcmp.lt.s32.totalorder %v1866, 200
        %vm1883 = vcmp.lt.s32.totalorder %v1867, 200
        %v1884 = vsub.f32 %v1802, %v1674
        %v1885 = vsub.f32 %v1804, %v1676
        %v1886 = vsub.f32 %v1806, %v1678
        %v1887 = vsub.f32 %v1808, %v1680
        %v1888 = vsub.f32 %v1810, %v1682
        %v1889 = vsub.f32 %v1812, %v1684
        %v1890 = vsub.f32 %v1814, %v1686
        %v1891 = vsub.f32 %v1816, %v1688
        %v1892 = vsub.f32 %v1818, %v1690
        %v1893 = vsub.f32 %v1820, %v1692
        %v1894 = vsub.f32 %v1822, %v1694
        %v1895 = vsub.f32 %v1824, %v1696
        %v1896 = vsub.f32 %v1826, %v1698
        %v1897 = vsub.f32 %v1828, %v1700
        %v1898 = vsub.f32 %v1830, %v1702
        %v1899 = vsub.f32 %v1832, %v1704
        %v1900 = vsel %vm1868, %v1884, 0.0
        %v1901 = vsel %vm1869, %v1885, 0.0
        %v1902 = vsel %vm1870, %v1886, 0.0
        %v1903 = vsel %vm1871, %v1887, 0.0
        %v1904 = vsel %vm1872, %v1888, 0.0
        %v1905 = vsel %vm1873, %v1889, 0.0
        %v1906 = vsel %vm1874, %v1890, 0.0
        %v1907 = vsel %vm1875, %v1891, 0.0
        %v1908 = vsel %vm1876, %v1892, 0.0
        %v1909 = vsel %vm1877, %v1893, 0.0
        %v1910 = vsel %vm1878, %v1894, 0.0
        %v1911 = vsel %vm1879, %v1895, 0.0
        %v1912 = vsel %vm1880, %v1896, 0.0
        %v1913 = vsel %vm1881, %v1897, 0.0
        %v1914 = vsel %vm1882, %v1898, 0.0
        %v1915 = vsel %vm1883, %v1899, 0.0
        %vm1916 = vcmask 7168
        %v1917 = vsel %vm1916, %v1900, 0.0
        %v1918 = vsel %vm1916, %v1901, 0.0
        %v1919 = vadd.f32 %v1917, %v1918
        %v1920 = vsel %vm1916, %v1902, 0.0
        %v1921 = vadd.f32 %v1919, %v1920
        %v1922 = vsel %vm1916, %v1903, 0.0
        %v1923 = vadd.f32 %v1921, %v1922
        %v1924 = vsel %vm1916, %v1904, 0.0
        %v1925 = vadd.f32 %v1923, %v1924
        %v1926 = vsel %vm1916, %v1905, 0.0
        %v1927 = vadd.f32 %v1925, %v1926
        %v1928 = vsel %vm1916, %v1906, 0.0
        %v1929 = vadd.f32 %v1927, %v1928
        %v1930 = vsel %vm1916, %v1907, 0.0
        %v1931 = vadd.f32 %v1929, %v1930
        %v1932 = vsel %vm1916, %v1908, 0.0
        %v1933 = vadd.f32 %v1931, %v1932
        %v1934 = vsel %vm1916, %v1909, 0.0
        %v1935 = vadd.f32 %v1933, %v1934
        %v1936 = vsel %vm1916, %v1910, 0.0
        %v1937 = vadd.f32 %v1935, %v1936
        %v1938 = vsel %vm1916, %v1911, 0.0
        %v1939 = vadd.f32 %v1937, %v1938
        %v1940 = vsel %vm1916, %v1912, 0.0
        %v1941 = vadd.f32 %v1939, %v1940
        %v1942 = vsel %vm1916, %v1913, 0.0
        %v1943 = vadd.f32 %v1941, %v1942
        %v1944 = vsel %vm1916, %v1914, 0.0
        %v1945 = vadd.f32 %v1943, %v1944
        %v1946 = vsel %vm1916, %v1915, 0.0
        %v1947 = vadd.f32 %v1945, %v1946
        %1948 = vadd.xlane.f32.xlu0 %v1947
        %v1949 = vpop.xlane.xlu0 %1948
        %v1950 = vrot.slane %v1949, 4
        %v1951 = vadd.f32 %v1949, %v1950
        %v1952 = vrot.slane %v1951, 2
        %v1953 = vadd.f32 %v1951, %v1952
        %v1954 = vrot.slane %v1953, 1
        %v1955 = vadd.f32 %v1953, %v1954
        %s1956 = vtos %v1955
        %vm1957 = vcmp.eq.f32.partialorder %v1499, %v1562
        %vm1958 = vcmp.eq.f32.partialorder %v1502, %v1564
        %vm1959 = vcmp.eq.f32.partialorder %v1507, %v1566
        %vm1960 = vcmp.eq.f32.partialorder %v1510, %v1568
        %vm1961 = vcmp.eq.f32.partialorder %v1515, %v1570
        %vm1962 = vcmp.eq.f32.partialorder %v1518, %v1572
        %vm1963 = vcmp.eq.f32.partialorder %v1523, %v1574
        %vm1964 = vcmp.eq.f32.partialorder %v1526, %v1576
        %vm1965 = vcmp.eq.f32.partialorder %v1531, %v1578
        %vm1966 = vcmp.eq.f32.partialorder %v1534, %v1580
        %vm1967 = vcmp.eq.f32.partialorder %v1539, %v1582
        %vm1968 = vcmp.eq.f32.partialorder %v1542, %v1584
        %vm1969 = vcmp.eq.f32.partialorder %v1547, %v1586
        %vm1970 = vcmp.eq.f32.partialorder %v1550, %v1588
        %vm1971 = vcmp.eq.f32.partialorder %v1555, %v1590
        %vm1972 = vcmp.eq.f32.partialorder %v1558, %v1592
        %v1973 = vsel %vm1957, %v303, 128
        %v1974 = vsel %vm1958, %v303, 128
        %v1975 = vsel %vm1959, %v303, 128
        %v1976 = vsel %vm1960, %v303, 128
        %v1977 = vsel %vm1961, %v303, 128
        %v1978 = vsel %vm1962, %v303, 128
        %v1979 = vsel %vm1963, %v303, 128
        %v1980 = vsel %vm1964, %v303, 128
        %v1981 = vsel %vm1965, %v303, 128
        %v1982 = vsel %vm1966, %v303, 128
        %v1983 = vsel %vm1967, %v303, 128
        %v1984 = vsel %vm1968, %v303, 128
        %v1985 = vsel %vm1969, %v303, 128
        %v1986 = vsel %vm1970, %v303, 128
        %v1987 = vsel %vm1971, %v303, 128
        %v1988 = vsel %vm1972, %v303, 128
        %v1989 = vand.u32 %v1973, 65535
        %v1990 = vshra.s32 %v1973, 16
        %v1991 = vcvt.s32.f32 %v1989
        %v1992 = vcvt.s32.f32 %v1990
        %1993 = vmin.xlane.f32.xlu0 %v1992
        %v1994 = vpop.xlane.xlu0 %1993
        %vm1995 = vcmp.eq.f32.partialorder %v1992, %v1994
        %v1996 = vsel %vm1995, %v1991, inf
        %1997 = vmin.xlane.f32.xlu0 %v1996
        %v1998 = vpop.xlane.xlu0 %1997
        %v1999 = vcvt.f32.s32 %v1998
        %v2000 = vcvt.f32.s32 %v1994
        %v2001 = vshll.u32 %v2000, 16
        %v2002 = vadd.s32 %v2001, %v1999
        %v2003 = vand.u32 %v1974, 65535
        %v2004 = vshra.s32 %v1974, 16
        %v2005 = vcvt.s32.f32 %v2003
        %v2006 = vcvt.s32.f32 %v2004
        %2007 = vmin.xlane.f32.xlu0 %v2006
        %v2008 = vpop.xlane.xlu0 %2007
        %vm2009 = vcmp.eq.f32.partialorder %v2006, %v2008
        %v2010 = vsel %vm2009, %v2005, inf
        %2011 = vmin.xlane.f32.xlu0 %v2010
        %v2012 = vpop.xlane.xlu0 %2011
        %v2013 = vcvt.f32.s32 %v2012
        %v2014 = vcvt.f32.s32 %v2008
        %v2015 = vshll.u32 %v2014, 16
        %v2016 = vadd.s32 %v2015, %v2013
        %v2017 = vand.u32 %v1975, 65535
        %v2018 = vshra.s32 %v1975, 16
        %v2019 = vcvt.s32.f32 %v2017
        %v2020 = vcvt.s32.f32 %v2018
        %2021 = vmin.xlane.f32.xlu0 %v2020
        %v2022 = vpop.xlane.xlu0 %2021
        %vm2023 = vcmp.eq.f32.partialorder %v2020, %v2022
        %v2024 = vsel %vm2023, %v2019, inf
        %2025 = vmin.xlane.f32.xlu0 %v2024
        %v2026 = vpop.xlane.xlu0 %2025
        %v2027 = vcvt.f32.s32 %v2026
        %v2028 = vcvt.f32.s32 %v2022
        %v2029 = vshll.u32 %v2028, 16
        %v2030 = vadd.s32 %v2029, %v2027
        %v2031 = vand.u32 %v1976, 65535
        %v2032 = vshra.s32 %v1976, 16
        %v2033 = vcvt.s32.f32 %v2031
        %v2034 = vcvt.s32.f32 %v2032
        %2035 = vmin.xlane.f32.xlu0 %v2034
        %v2036 = vpop.xlane.xlu0 %2035
        %vm2037 = vcmp.eq.f32.partialorder %v2034, %v2036
        %v2038 = vsel %vm2037, %v2033, inf
        %2039 = vmin.xlane.f32.xlu0 %v2038
        %v2040 = vpop.xlane.xlu0 %2039
        %v2041 = vcvt.f32.s32 %v2040
        %v2042 = vcvt.f32.s32 %v2036
        %v2043 = vshll.u32 %v2042, 16
        %v2044 = vadd.s32 %v2043, %v2041
        %v2045 = vand.u32 %v1977, 65535
        %v2046 = vshra.s32 %v1977, 16
        %v2047 = vcvt.s32.f32 %v2045
        %v2048 = vcvt.s32.f32 %v2046
        %2049 = vmin.xlane.f32.xlu0 %v2048
        %v2050 = vpop.xlane.xlu0 %2049
        %vm2051 = vcmp.eq.f32.partialorder %v2048, %v2050
        %v2052 = vsel %vm2051, %v2047, inf
        %2053 = vmin.xlane.f32.xlu0 %v2052
        %v2054 = vpop.xlane.xlu0 %2053
        %v2055 = vcvt.f32.s32 %v2054
        %v2056 = vcvt.f32.s32 %v2050
        %v2057 = vshll.u32 %v2056, 16
        %v2058 = vadd.s32 %v2057, %v2055
        %v2059 = vand.u32 %v1978, 65535
        %v2060 = vshra.s32 %v1978, 16
        %v2061 = vcvt.s32.f32 %v2059
        %v2062 = vcvt.s32.f32 %v2060
        %2063 = vmin.xlane.f32.xlu0 %v2062
        %v2064 = vpop.xlane.xlu0 %2063
        %vm2065 = vcmp.eq.f32.partialorder %v2062, %v2064
        %v2066 = vsel %vm2065, %v2061, inf
        %2067 = vmin.xlane.f32.xlu0 %v2066
        %v2068 = vpop.xlane.xlu0 %2067
        %v2069 = vcvt.f32.s32 %v2068
        %v2070 = vcvt.f32.s32 %v2064
        %v2071 = vshll.u32 %v2070, 16
        %v2072 = vadd.s32 %v2071, %v2069
        %v2073 = vand.u32 %v1979, 65535
        %v2074 = vshra.s32 %v1979, 16
        %v2075 = vcvt.s32.f32 %v2073
        %v2076 = vcvt.s32.f32 %v2074
        %2077 = vmin.xlane.f32.xlu0 %v2076
        %v2078 = vpop.xlane.xlu0 %2077
        %vm2079 = vcmp.eq.f32.partialorder %v2076, %v2078
        %v2080 = vsel %vm2079, %v2075, inf
        %2081 = vmin.xlane.f32.xlu0 %v2080
        %v2082 = vpop.xlane.xlu0 %2081
        %v2083 = vcvt.f32.s32 %v2082
        %v2084 = vcvt.f32.s32 %v2078
        %v2085 = vshll.u32 %v2084, 16
        %v2086 = vadd.s32 %v2085, %v2083
        %v2087 = vand.u32 %v1980, 65535
        %v2088 = vshra.s32 %v1980, 16
        %v2089 = vcvt.s32.f32 %v2087
        %v2090 = vcvt.s32.f32 %v2088
        %2091 = vmin.xlane.f32.xlu0 %v2090
        %v2092 = vpop.xlane.xlu0 %2091
        %vm2093 = vcmp.eq.f32.partialorder %v2090, %v2092
        %v2094 = vsel %vm2093, %v2089, inf
        %2095 = vmin.xlane.f32.xlu0 %v2094
        %v2096 = vpop.xlane.xlu0 %2095
        %v2097 = vcvt.f32.s32 %v2096
        %v2098 = vcvt.f32.s32 %v2092
        %v2099 = vshll.u32 %v2098, 16
        %v2100 = vadd.s32 %v2099, %v2097
        %v2101 = vand.u32 %v1981, 65535
        %v2102 = vshra.s32 %v1981, 16
        %v2103 = vcvt.s32.f32 %v2101
        %v2104 = vcvt.s32.f32 %v2102
        %2105 = vmin.xlane.f32.xlu0 %v2104
        %v2106 = vpop.xlane.xlu0 %2105
        %vm2107 = vcmp.eq.f32.partialorder %v2104, %v2106
        %v2108 = vsel %vm2107, %v2103, inf
        %2109 = vmin.xlane.f32.xlu0 %v2108
        %v2110 = vpop.xlane.xlu0 %2109
        %v2111 = vcvt.f32.s32 %v2110
        %v2112 = vcvt.f32.s32 %v2106
        %v2113 = vshll.u32 %v2112, 16
        %v2114 = vadd.s32 %v2113, %v2111
        %v2115 = vand.u32 %v1982, 65535
        %v2116 = vshra.s32 %v1982, 16
        %v2117 = vcvt.s32.f32 %v2115
        %v2118 = vcvt.s32.f32 %v2116
        %2119 = vmin.xlane.f32.xlu0 %v2118
        %v2120 = vpop.xlane.xlu0 %2119
        %vm2121 = vcmp.eq.f32.partialorder %v2118, %v2120
        %v2122 = vsel %vm2121, %v2117, inf
        %2123 = vmin.xlane.f32.xlu0 %v2122
        %v2124 = vpop.xlane.xlu0 %2123
        %v2125 = vcvt.f32.s32 %v2124
        %v2126 = vcvt.f32.s32 %v2120
        %v2127 = vshll.u32 %v2126, 16
        %v2128 = vadd.s32 %v2127, %v2125
        %v2129 = vand.u32 %v1983, 65535
        %v2130 = vshra.s32 %v1983, 16
        %v2131 = vcvt.s32.f32 %v2129
        %v2132 = vcvt.s32.f32 %v2130
        %2133 = vmin.xlane.f32.xlu0 %v2132
        %v2134 = vpop.xlane.xlu0 %2133
        %vm2135 = vcmp.eq.f32.partialorder %v2132, %v2134
        %v2136 = vsel %vm2135, %v2131, inf
        %2137 = vmin.xlane.f32.xlu0 %v2136
        %v2138 = vpop.xlane.xlu0 %2137
        %v2139 = vcvt.f32.s32 %v2138
        %v2140 = vcvt.f32.s32 %v2134
        %v2141 = vshll.u32 %v2140, 16
        %v2142 = vadd.s32 %v2141, %v2139
        %v2143 = vand.u32 %v1984, 65535
        %v2144 = vshra.s32 %v1984, 16
        %v2145 = vcvt.s32.f32 %v2143
        %v2146 = vcvt.s32.f32 %v2144
        %2147 = vmin.xlane.f32.xlu0 %v2146
        %v2148 = vpop.xlane.xlu0 %2147
        %vm2149 = vcmp.eq.f32.partialorder %v2146, %v2148
        %v2150 = vsel %vm2149, %v2145, inf
        %2151 = vmin.xlane.f32.xlu0 %v2150
        %v2152 = vpop.xlane.xlu0 %2151
        %v2153 = vcvt.f32.s32 %v2152
        %v2154 = vcvt.f32.s32 %v2148
        %v2155 = vshll.u32 %v2154, 16
        %v2156 = vadd.s32 %v2155, %v2153
        %v2157 = vand.u32 %v1985, 65535
        %v2158 = vshra.s32 %v1985, 16
        %v2159 = vcvt.s32.f32 %v2157
        %v2160 = vcvt.s32.f32 %v2158
        %2161 = vmin.xlane.f32.xlu0 %v2160
        %v2162 = vpop.xlane.xlu0 %2161
        %vm2163 = vcmp.eq.f32.partialorder %v2160, %v2162
        %v2164 = vsel %vm2163, %v2159, inf
        %2165 = vmin.xlane.f32.xlu0 %v2164
        %v2166 = vpop.xlane.xlu0 %2165
        %v2167 = vcvt.f32.s32 %v2166
        %v2168 = vcvt.f32.s32 %v2162
        %v2169 = vshll.u32 %v2168, 16
        %v2170 = vadd.s32 %v2169, %v2167
        %v2171 = vand.u32 %v1986, 65535
        %v2172 = vshra.s32 %v1986, 16
        %v2173 = vcvt.s32.f32 %v2171
        %v2174 = vcvt.s32.f32 %v2172
        %2175 = vmin.xlane.f32.xlu0 %v2174
        %v2176 = vpop.xlane.xlu0 %2175
        %vm2177 = vcmp.eq.f32.partialorder %v2174, %v2176
        %v2178 = vsel %vm2177, %v2173, inf
        %2179 = vmin.xlane.f32.xlu0 %v2178
        %v2180 = vpop.xlane.xlu0 %2179
        %v2181 = vcvt.f32.s32 %v2180
        %v2182 = vcvt.f32.s32 %v2176
        %v2183 = vshll.u32 %v2182, 16
        %v2184 = vadd.s32 %v2183, %v2181
        %v2185 = vand.u32 %v1987, 65535
        %v2186 = vshra.s32 %v1987, 16
        %v2187 = vcvt.s32.f32 %v2185
        %v2188 = vcvt.s32.f32 %v2186
        %2189 = vmin.xlane.f32.xlu0 %v2188
        %v2190 = vpop.xlane.xlu0 %2189
        %vm2191 = vcmp.eq.f32.partialorder %v2188, %v2190
        %v2192 = vsel %vm2191, %v2187, inf
        %2193 = vmin.xlane.f32.xlu0 %v2192
        %v2194 = vpop.xlane.xlu0 %2193
        %v2195 = vcvt.f32.s32 %v2194
        %v2196 = vcvt.f32.s32 %v2190
        %v2197 = vshll.u32 %v2196, 16
        %v2198 = vadd.s32 %v2197, %v2195
        %v2199 = vand.u32 %v1988, 65535
        %v2200 = vshra.s32 %v1988, 16
        %v2201 = vcvt.s32.f32 %v2199
        %v2202 = vcvt.s32.f32 %v2200
        %2203 = vmin.xlane.f32.xlu0 %v2202
        %v2204 = vpop.xlane.xlu0 %2203
        %vm2205 = vcmp.eq.f32.partialorder %v2202, %v2204
        %v2206 = vsel %vm2205, %v2201, inf
        %2207 = vmin.xlane.f32.xlu0 %v2206
        %v2208 = vpop.xlane.xlu0 %2207
        %v2209 = vcvt.f32.s32 %v2208
        %v2210 = vcvt.f32.s32 %v2204
        %v2211 = vshll.u32 %v2210, 16
        %v2212 = vadd.s32 %v2211, %v2209
        %vm2213 = vcmp.eq.s32.totalorder %v2002, %v1705
        %vm2214 = vcmp.eq.s32.totalorder %v2016, %v1706
        %vm2215 = vcmp.eq.s32.totalorder %v2030, %v1707
        %vm2216 = vcmp.eq.s32.totalorder %v2044, %v1708
        %vm2217 = vcmp.eq.s32.totalorder %v2058, %v1709
        %vm2218 = vcmp.eq.s32.totalorder %v2072, %v1710
        %vm2219 = vcmp.eq.s32.totalorder %v2086, %v1711
        %vm2220 = vcmp.eq.s32.totalorder %v2100, %v1712
        %vm2221 = vcmp.eq.s32.totalorder %v2114, %v1713
        %vm2222 = vcmp.eq.s32.totalorder %v2128, %v1714
        %vm2223 = vcmp.eq.s32.totalorder %v2142, %v1715
        %vm2224 = vcmp.eq.s32.totalorder %v2156, %v1716
        %vm2225 = vcmp.eq.s32.totalorder %v2170, %v1717
        %vm2226 = vcmp.eq.s32.totalorder %v2184, %v1718
        %vm2227 = vcmp.eq.s32.totalorder %v2198, %v1719
        %vm2228 = vcmp.eq.s32.totalorder %v2212, %v1720
        %vm2229 = vmand %vm2213, %vm1868
        %vm2230 = vmand %vm2214, %vm1869
        %vm2231 = vmand %vm2215, %vm1870
        %vm2232 = vmand %vm2216, %vm1871
        %vm2233 = vmand %vm2217, %vm1872
        %vm2234 = vmand %vm2218, %vm1873
        %vm2235 = vmand %vm2219, %vm1874
        %vm2236 = vmand %vm2220, %vm1875
        %vm2237 = vmand %vm2221, %vm1876
        %vm2238 = vmand %vm2222, %vm1877
        %vm2239 = vmand %vm2223, %vm1878
        %vm2240 = vmand %vm2224, %vm1879
        %vm2241 = vmand %vm2225, %vm1880
        %vm2242 = vmand %vm2226, %vm1881
        %vm2243 = vmand %vm2227, %vm1882
        %vm2244 = vmand %vm2228, %vm1883
        %v2245 = vsel %vm2229, 1, 0
        %v2246 = vsel %vm2230, 1, 0
        %v2247 = vsel %vm2231, 1, 0
        %v2248 = vsel %vm2232, 1, 0
        %v2249 = vsel %vm2233, 1, 0
        %v2250 = vsel %vm2234, 1, 0
        %v2251 = vsel %vm2235, 1, 0
        %v2252 = vsel %vm2236, 1, 0
        %v2253 = vsel %vm2237, 1, 0
        %v2254 = vsel %vm2238, 1, 0
        %v2255 = vsel %vm2239, 1, 0
        %v2256 = vsel %vm2240, 1, 0
        %v2257 = vsel %vm2241, 1, 0
        %v2258 = vsel %vm2242, 1, 0
        %v2259 = vsel %vm2243, 1, 0
        %v2260 = vsel %vm2244, 1, 0
        %v2261 = vsel %vm1916, %v2245, 0
        %v2262 = vsel %vm1916, %v2246, 0
        %v2263 = vsel %vm1916, %v2247, 0
        %v2264 = vsel %vm1916, %v2248, 0
        %v2265 = vsel %vm1916, %v2249, 0
        %v2266 = vadd.s32 %v2261, %v2265
        %v2267 = vsel %vm1916, %v2250, 0
        %v2268 = vadd.s32 %v2262, %v2267
        %v2269 = vsel %vm1916, %v2251, 0
        %v2270 = vadd.s32 %v2263, %v2269
        %v2271 = vsel %vm1916, %v2252, 0
        %v2272 = vadd.s32 %v2264, %v2271
        %v2273 = vsel %vm1916, %v2253, 0
        %v2274 = vadd.s32 %v2266, %v2273
        %v2275 = vsel %vm1916, %v2254, 0
        %v2276 = vadd.s32 %v2268, %v2275
        %v2277 = vsel %vm1916, %v2255, 0
        %v2278 = vadd.s32 %v2270, %v2277
        %v2279 = vsel %vm1916, %v2256, 0
        %v2280 = vadd.s32 %v2272, %v2279
        %v2281 = vsel %vm1916, %v2257, 0
        %v2282 = vadd.s32 %v2274, %v2281
        %v2283 = vsel %vm1916, %v2258, 0
        %v2284 = vadd.s32 %v2276, %v2283
        %v2285 = vsel %vm1916, %v2259, 0
        %v2286 = vadd.s32 %v2278, %v2285
        %v2287 = vsel %vm1916, %v2260, 0
        %v2288 = vadd.s32 %v2280, %v2287
        %v2289 = vadd.s32 %v2282, %v2284
        %v2290 = vadd.s32 %v2286, %v2288
        %v2291 = vadd.s32 %v2289, %v2290
        %v2292 = vand.u32 %v2291, 65535
        %v2293 = vshrl.u32 %v2291, 16
        %v2294 = vcvt.s32.f32 %v2292
        %v2295 = vcvt.s32.f32 %v2293
        %2296 = vadd.xlane.f32.xlu0 %v2294
        %v2297 = vpop.xlane.xlu0 %2296
        %2298 = vadd.xlane.f32.xlu0 %v2295
        %v2299 = vpop.xlane.xlu0 %2298
        %v2300 = vcvt.f32.s32 %v2297
        %v2301 = vcvt.f32.s32 %v2299
        %v2302 = vshll.u32 %v2301, 16
        %v2303 = vadd.s32 %v2302, %v2300
        %v2304 = vrot.slane %v2303, 4
        %v2305 = vadd.s32 %v2303, %v2304
        %v2306 = vrot.slane %v2305, 2
        %v2307 = vadd.s32 %v2305, %v2306
        %v2308 = vrot.slane %v2307, 1
        %v2309 = vadd.s32 %v2307, %v2308
        %s2310 = vtos %v2309
        %v2311 = vstv %s2310
        %2312 = vst [vmem:[%s265] sm:$0xff] %v2311
        %v2313 = vstv %s1956
        %v2314 = vadd.f32 %v2313, 0.0
        %2315 = vst [vmem:[%s272] sm:$0xff] %v2314
        %s2316 = sand.u32 %s147, 1
        %s2317 = scalar_lea.sflag [#allocation3], %s2316
        %s2318 = sand.u32 %s147, 1
        %s2319 = smul.addr %s2318, 8
        %s2320 = scalar_lea.vmem [#allocation2], %s2319
        %s2321 = sand.u32 %s173, 1
        %s2322 = scalar_lea.sflag [#allocation5], %s2321
        %s2323 = sand.u32 %s173, 1
        %s2324 = smul.addr %s2323, 8
        %s2325 = scalar_lea.vmem [#allocation4], %s2324
        // Predicated region
        $region41: #{tpu_custom_call.1} parent=39 // pred_check
          %p2326 = pneg %p157
        $region42: #{tpu_custom_call.1} parent=39 // pred_check_branch
          %2328 = sbr.rel (%p2326) target = $region44
        $region43: #{tpu_custom_call.1} parent=39 // pred_region
          %s2330 = ssub.s32 128, 128
          %2331 = vsyncadd %s2317, %s2330
          %s2332 = smul.addr %s24, 128
          %s2333 = scalar_lea.hbm %s5, %s2332
          %s2335 = sshll.u32 %s2320, 4
          %s2336 = int_to_ptr.vmem [resolvable:$true] %s2335
          %2338 = dma.vmem_to_hbm [thread:$0]  %s2336, 128, %s2333, %s2317
        $region44: #{tpu_custom_call.1} parent=39 // pred_fallthru
          _
        // Predicated region
        $region45: #{tpu_custom_call.1} parent=39 // pred_check
          %p2339 = pneg %p183
        $region46: #{tpu_custom_call.1} parent=39 // pred_check_branch
          %2341 = sbr.rel (%p2339) target = $region48
        $region47: #{tpu_custom_call.1} parent=39 // pred_region
          %s2343 = ssub.s32 128, 128
          %2344 = vsyncadd %s2322, %s2343
          %s2345 = smul.addr %s24, 128
          %s2346 = scalar_lea.hbm %s6, %s2345
          %s2348 = sshll.u32 %s2325, 4
          %s2349 = int_to_ptr.vmem [resolvable:$true] %s2348
          %2351 = dma.vmem_to_hbm [thread:$0]  %s2349, 128, %s2346, %s2322
        $region48: #{tpu_custom_call.1} parent=39 // pred_fallthru
          _
      $region40: #{tpu_custom_call.1} parent=5 // pred_fallthru
        _
      %p2352 = scmp.le.s32.totalorder 2, %s19
      // Predicated region
      $region49: #{tpu_custom_call.1} parent=5 // pred_check
        %p2353 = pneg %p2352
      $region50: #{tpu_custom_call.1} parent=5 // pred_check_branch
        %2355 = sbr.rel (%p2353) target = $region52
      $region51: #{tpu_custom_call.1} parent=5 // pred_region
        %s2356 = ssub.s32 %s19, 2
        // Predicated region
        $region53: #{tpu_custom_call.1} parent=51 // pred_check
          %p2357 = pneg %p163
        $region54: #{tpu_custom_call.1} parent=51 // pred_check_branch
          %2359 = sbr.rel (%p2357) target = $region56
        $region55: #{tpu_custom_call.1} parent=51 // pred_region
          %s2360 = sand.u32 %s148, 1
          %s2361 = scalar_lea.sflag [#allocation3], %s2360
          %s2362 = sand.u32 %s148, 1
          %s2363 = smul.addr %s2362, 8
          %s2364 = scalar_lea.vmem [#allocation2], %s2363
          %2365 = dma.done %s2361, 128
        $region56: #{tpu_custom_call.1} parent=51 // pred_fallthru
          _
        // Predicated region
        $region57: #{tpu_custom_call.1} parent=51 // pred_check
          %p2366 = pneg %p189
        $region58: #{tpu_custom_call.1} parent=51 // pred_check_branch
          %2368 = sbr.rel (%p2366) target = $region60
        $region59: #{tpu_custom_call.1} parent=51 // pred_region
          %s2369 = sand.u32 %s174, 1
          %s2370 = scalar_lea.sflag [#allocation5], %s2369
          %s2371 = sand.u32 %s174, 1
          %s2372 = smul.addr %s2371, 8
          %s2373 = scalar_lea.vmem [#allocation4], %s2372
          %2374 = dma.done %s2370, 128
        $region60: #{tpu_custom_call.1} parent=51 // pred_fallthru
          _
      $region52: #{tpu_custom_call.1} parent=5 // pred_fallthru
        _
    $region6: #{tpu_custom_call.1} parent=1 // loop_footer
      %s23 = sadd.s32 1, %s19
    $region7: #{tpu_custom_call.1} parent=1 // loop_footer_branch
      %18 = sbr.rel target = $region3
    $region8: #{tpu_custom_call.1} parent=1 // loop_exit
      _
    %2375 = vsyncpa [#allocation3], 1
    %s2376 = scalar_lea.sflag [#allocation3], 1
    %2377 = vsyncpa %s2376, 1
    %2378 = vsyncpa [#allocation5], 1
    %s2379 = scalar_lea.sflag [#allocation5], 1
    %2380 = vsyncpa %s2379, 1

// kernel: tpu_custom_call.1
$region0: #{tpu_custom_call.1}
  #allocation0 [shape = 'u32[]', space=smem, size = 0x4, offset = 0x4, fixed_abs, tag = 'smem constant byte address 0x4 - core index']
  #allocation1 [shape = 'u32[144,128]{1,0:T(1,128)}', space=vmem, size = 0x12000, scoped, tag = 'internal scratch']
  %s0 = inlined_call_operand.vmem [shape: s32[256,8], index: 0, kind: input, shape index: {}]
  %s1 = inlined_call_operand.vmem [shape: s32[256,1], index: 1, kind: input, shape index: {}]
  %s2 = inlined_call_operand.vmem [shape: bf16[128,128], index: 2, kind: input, shape index: {}]
  %s3 = inlined_call_operand.vmem [shape: bf16[128,128], index: 3, kind: input, shape index: {}]
  %s4 = inlined_call_operand.vmem [shape: f32[1,128], index: 4, kind: input, shape index: {}]
  %s5 = inlined_call_operand.hbm [shape: s32[2,8,128], index: 5, kind: output, shape index: {0}]
  %s6 = inlined_call_operand.hbm [shape: f32[2,8,128], index: 6, kind: output, shape index: {1}]
  %7 = xla_tuple %s5, %s6
  %s8 = sld [smem:[#allocation0]]
  $region61: #{tpu_custom_call.1} parent=0
    _
  %s10 = ssub.s32 1, %s8
  %s11 = scalar_select 0, %s10, %s8
  $region1: #{tpu_custom_call.1} parent=0
    #allocation2 [shape = 'u8[8192]{0}', space=vmem, size = 0x2000, scoped, tag = 'output window, operand 0']
    #allocation3 [shape = 's32[2]{0}', space=sflag, size = 0x8, scoped, tag = 'scoped memory for tpu_custom_call.1']
    #allocation4 [shape = 'u8[8192]{0}', space=vmem, size = 0x2000, scoped, tag = 'output window, operand 1']
    #allocation5 [shape = 's32[2]{0}', space=sflag, size = 0x8, scoped, tag = 'scoped memory for tpu_custom_call.1']
    %12 = vsyncpa [#allocation3], 0
    %s13 = scalar_lea.sflag [#allocation3], 1
    %14 = vsyncpa %s13, 0
    %15 = vsyncpa [#allocation5], 0
    %s16 = scalar_lea.sflag [#allocation5], 1
    %17 = vsyncpa %s16, 0
    loop: start=0, step=1, limit=4
    $region2: #{tpu_custom_call.1} parent=1 // loop_pre_header
      _
    $region3: #{tpu_custom_call.1} parent=1 // loop_header
      %s19 = sphi 0, %s23
      %p20 = scmp.ge.s32.totalorder %s19, 4
      %s29 = sphi 0, %s31
      %s32 = sphi 0, %s29
      %s33 = sphi 0, %s32
      %s49 = sphi 0, %s33
      %s55 = sphi 0, %s57
      %s58 = sphi 0, %s55
      %s59 = sphi 0, %s58
      %s75 = sphi 0, %s59
      %s79 = sphi 0, %s79
      %s81 = sphi 0, %s79
      %s82 = sphi 0, %s81
      %s96 = sphi 0, %s82
      %s100 = sphi 0, %s100
      %s102 = sphi 0, %s100
      %s103 = sphi 0, %s102
      %s117 = sphi 0, %s103
      %s121 = sphi 0, %s121
      %s123 = sphi 0, %s121
      %s124 = sphi 0, %s123
      %s138 = sphi 0, %s124
      %s144 = sphi 0, %s146
      %s147 = sphi 0, %s144
      %s148 = sphi 0, %s147
      %s164 = sphi 0, %s148
      %s170 = sphi 0, %s172
      %s173 = sphi 0, %s170
      %s174 = sphi 0, %s173
      %s190 = sphi 0, %s174
    $region4: #{tpu_custom_call.1} parent=1 // loop_header_branch
      %22 = sbr.rel (%p20) target = $region8
    $region5: #{tpu_custom_call.1} parent=1 // loop_body
      %s24 = ssub.s32 %s19, 1
      %s25 = ssub.s32 %s19, 2
      %s26 = sadd.s32 %s19, 1
      %s27 = ssub.s32 %s19, %s26
      %p28 = scmp.eq.s32.totalorder %s27, 0
      %s30 = sadd.s32 %s29, 1
      %s31 = scalar_select %p28, %s29, %s30
      %p34 = pneg %p28
      %p35 = scmp.eq.s32.totalorder %s19, 1
      %p36 = por %p34, %p35
      %p37 = scmp.ne.s32.totalorder %s29, %s32
      %p38 = scmp.eq.s32.totalorder %s19, 0
      %p39 = por %p37, %p38
      %p40 = scmp.ne.s32.totalorder %s29, %s32
      %p41 = scmp.eq.s32.totalorder %s24, 1
      %p42 = por %p40, %p41
      %p43 = scmp.ne.s32.totalorder %s32, %s33
      %p44 = scmp.eq.s32.totalorder %s24, 0
      %p45 = por %p43, %p44
      %p46 = scmp.ne.s32.totalorder %s32, %s33
      %p47 = scmp.eq.s32.totalorder %s25, 1
      %p48 = por %p46, %p47
      %p50 = scmp.ne.s32.totalorder %s33, %s49
      %p51 = scmp.eq.s32.totalorder %s25, 0
      %p52 = por %p50, %p51
      %s53 = ssub.s32 %s19, %s26
      %p54 = scmp.eq.s32.totalorder %s53, 0
      %s56 = sadd.s32 %s55, 1
      %s57 = scalar_select %p54, %s55, %s56
      %p60 = pneg %p54
      %p61 = scmp.eq.s32.totalorder %s19, 1
      %p62 = por %p60, %p61
      %p63 = scmp.ne.s32.totalorder %s55, %s58
      %p64 = scmp.eq.s32.totalorder %s19, 0
      %p65 = por %p63, %p64
      %p66 = scmp.ne.s32.totalorder %s55, %s58
      %p67 = scmp.eq.s32.totalorder %s24, 1
      %p68 = por %p66, %p67
      %p69 = scmp.ne.s32.totalorder %s58, %s59
      %p70 = scmp.eq.s32.totalorder %s24, 0
      %p71 = por %p69, %p70
      %p72 = scmp.ne.s32.totalorder %s58, %s59
      %p73 = scmp.eq.s32.totalorder %s25, 1
      %p74 = por %p72, %p73
      %p76 = scmp.ne.s32.totalorder %s59, %s75
      %p77 = scmp.eq.s32.totalorder %s25, 0
      %p78 = por %p76, %p77
      %s80 = sadd.s32 %s79, 1
      %p83 = scmp.eq.s32.totalorder %s19, 1
      %p84 = scmp.ne.s32.totalorder %s79, %s81
      %p85 = scmp.eq.s32.totalorder %s19, 0
      %p86 = por %p84, %p85
      %p87 = scmp.ne.s32.totalorder %s79, %s81
      %p88 = scmp.eq.s32.totalorder %s24, 1
      %p89 = por %p87, %p88
      %p90 = scmp.ne.s32.totalorder %s81, %s82
      %p91 = scmp.eq.s32.totalorder %s24, 0
      %p92 = por %p90, %p91
      %p93 = scmp.ne.s32.totalorder %s81, %s82
      %p94 = scmp.eq.s32.totalorder %s25, 1
      %p95 = por %p93, %p94
      %p97 = scmp.ne.s32.totalorder %s82, %s96
      %p98 = scmp.eq.s32.totalorder %s25, 0
      %p99 = por %p97, %p98
      %s101 = sadd.s32 %s100, 1
      %p104 = scmp.eq.s32.totalorder %s19, 1
      %p105 = scmp.ne.s32.totalorder %s100, %s102
      %p106 = scmp.eq.s32.totalorder %s19, 0
      %p107 = por %p105, %p106
      %p108 = scmp.ne.s32.totalorder %s100, %s102
      %p109 = scmp.eq.s32.totalorder %s24, 1
      %p110 = por %p108, %p109
      %p111 = scmp.ne.s32.totalorder %s102, %s103
      %p112 = scmp.eq.s32.totalorder %s24, 0
      %p113 = por %p111, %p112
      %p114 = scmp.ne.s32.totalorder %s102, %s103
      %p115 = scmp.eq.s32.totalorder %s25, 1
      %p116 = por %p114, %p115
      %p118 = scmp.ne.s32.totalorder %s103, %s117
      %p119 = scmp.eq.s32.totalorder %s25, 0
      %p120 = por %p118, %p119
      %s122 = sadd.s32 %s121, 1
      %p125 = scmp.eq.s32.totalorder %s19, 1
      %p126 = scmp.ne.s32.totalorder %s121, %s123
      %p127 = scmp.eq.s32.totalorder %s19, 0
      %p128 = por %p126, %p127
      %p129 = scmp.ne.s32.totalorder %s121, %s123
      %p130 = scmp.eq.s32.totalorder %s24, 1
      %p131 = por %p129, %p130
      %p132 = scmp.ne.s32.totalorder %s123, %s124
      %p133 = scmp.eq.s32.totalorder %s24, 0
      %p134 = por %p132, %p133
      %p135 = scmp.ne.s32.totalorder %s123, %s124
      %p136 = scmp.eq.s32.totalorder %s25, 1
      %p137 = por %p135, %p136
      %p139 = scmp.ne.s32.totalorder %s124, %s138
      %p140 = scmp.eq.s32.totalorder %s25, 0
      %p141 = por %p139, %p140
      %s142 = ssub.s32 %s19, %s26
      %p143 = scmp.eq.s32.totalorder %s142, 0
      %s145 = sadd.s32 %s144, 1
      %s146 = scalar_select %p143, %s144, %s145
      %p149 = pneg %p143
      %p150 = scmp.eq.s32.totalorder %s19, 1
      %p151 = por %p149, %p150
      %p152 = scmp.ne.s32.totalorder %s144, %s147
      %p153 = scmp.eq.s32.totalorder %s19, 0
      %p154 = por %p152, %p153
      %p155 = scmp.ne.s32.totalorder %s144, %s147
      %p156 = scmp.eq.s32.totalorder %s24, 1
      %p157 = por %p155, %p156
      %p158 = scmp.ne.s32.totalorder %s147, %s148
      %p159 = scmp.eq.s32.totalorder %s24, 0
      %p160 = por %p158, %p159
      %p161 = scmp.ne.s32.totalorder %s147, %s148
      %p162 = scmp.eq.s32.totalorder %s25, 1
      %p163 = por %p161, %p162
      %p165 = scmp.ne.s32.totalorder %s148, %s164
      %p166 = scmp.eq.s32.totalorder %s25, 0
      %p167 = por %p165, %p166
      %s168 = ssub.s32 %s19, %s26
      %p169 = scmp.eq.s32.totalorder %s168, 0
      %s171 = sadd.s32 %s170, 1
      %s172 = scalar_select %p169, %s170, %s171
      %p175 = pneg %p169
      %p176 = scmp.eq.s32.totalorder %s19, 1
      %p177 = por %p175, %p176
      %p178 = scmp.ne.s32.totalorder %s170, %s173
      %p179 = scmp.eq.s32.totalorder %s19, 0
      %p180 = por %p178, %p179
      %p181 = scmp.ne.s32.totalorder %s170, %s173
      %p182 = scmp.eq.s32.totalorder %s24, 1
      %p183 = por %p181, %p182
      %p184 = scmp.ne.s32.totalorder %s173, %s174
      %p185 = scmp.eq.s32.totalorder %s24, 0
      %p186 = por %p184, %p185
      %p187 = scmp.ne.s32.totalorder %s173, %s174
      %p188 = scmp.eq.s32.totalorder %s25, 1
      %p189 = por %p187, %p188
      %p191 = scmp.ne.s32.totalorder %s174, %s190
      %p192 = scmp.eq.s32.totalorder %s25, 0
      %p193 = por %p191, %p192
      %p194 = scmp.le.s32.totalorder 1, %s19
      %p195 = scmp.lt.s32.totalorder %s19, 3
      %p196 = pnand %p194, %p195
      %p197 = pneg %p196
      // Predicated region
      $region9: #{tpu_custom_call.1} parent=5 // pred_check
        _
      $region10: #{tpu_custom_call.1} parent=5 // pred_check_branch
        %199 = sbr.rel (%p196) target = $region12
      $region11: #{tpu_custom_call.1} parent=5 // pred_region
        %s200 = ssub.s32 %s19, 1
        // Predicated region
        $region13: #{tpu_custom_call.1} parent=11 // pred_check
          %p201 = pneg %p92
        $region14: #{tpu_custom_call.1} parent=11 // pred_check_branch
          %203 = sbr.rel (%p201) target = $region16
        $region15: #{tpu_custom_call.1} parent=11 // pred_region
          _
        $region16: #{tpu_custom_call.1} parent=11 // pred_fallthru
          _
        // Predicated region
        $region17: #{tpu_custom_call.1} parent=11 // pred_check
          %p204 = pneg %p113
        $region18: #{tpu_custom_call.1} parent=11 // pred_check_branch
          %206 = sbr.rel (%p204) target = $region20
        $region19: #{tpu_custom_call.1} parent=11 // pred_region
          _
        $region20: #{tpu_custom_call.1} parent=11 // pred_fallthru
          _
        // Predicated region
        $region21: #{tpu_custom_call.1} parent=11 // pred_check
          %p207 = pneg %p134
        $region22: #{tpu_custom_call.1} parent=11 // pred_check_branch
          %209 = sbr.rel (%p207) target = $region24
        $region23: #{tpu_custom_call.1} parent=11 // pred_region
          _
        $region24: #{tpu_custom_call.1} parent=11 // pred_fallthru
          _
      $region12: #{tpu_custom_call.1} parent=5 // pred_fallthru
        _
      %p210 = scmp.lt.s32.totalorder %s19, 2
      // Predicated region
      $region25: #{tpu_custom_call.1} parent=5 // pred_check
        %p211 = pneg %p210
      $region26: #{tpu_custom_call.1} parent=5 // pred_check_branch
        %213 = sbr.rel (%p211) target = $region28
      $region27: #{tpu_custom_call.1} parent=5 // pred_region
        // Predicated region
        $region29: #{tpu_custom_call.1} parent=27 // pred_check
          %p214 = pneg %p39
        $region30: #{tpu_custom_call.1} parent=27 // pred_check_branch
          %216 = sbr.rel (%p214) target = $region32
        $region31: #{tpu_custom_call.1} parent=27 // pred_region
          %s217 = smul.u32 16, %s19
          %p218 = scmp.lt.s32.totalorder %s217, 31
          %s219 = scalar_select %p218, %s217, 31
          %s220 = smul.addr %s219, 8
          %s221 = scalar_lea.vmem %s0, %s220
          %s222 = smul.u32 16, %s19
        $region32: #{tpu_custom_call.1} parent=27 // pred_fallthru
          _
        // Predicated region
        $region33: #{tpu_custom_call.1} parent=27 // pred_check
          %p223 = pneg %p65
        $region34: #{tpu_custom_call.1} parent=27 // pred_check_branch
          %225 = sbr.rel (%p223) target = $region36
        $region35: #{tpu_custom_call.1} parent=27 // pred_region
          %s226 = smul.u32 16, %s19
          %p227 = scmp.lt.s32.totalorder %s226, 31
          %s228 = scalar_select %p227, %s226, 31
          %s229 = smul.addr %s228, 8
          %s230 = scalar_lea.vmem %s1, %s229
          %s231 = smul.u32 16, %s19
        $region36: #{tpu_custom_call.1} parent=27 // pred_fallthru
          _
      $region28: #{tpu_custom_call.1} parent=5 // pred_fallthru
        _
      %p232 = scmp.le.s32.totalorder 1, %s19
      %p233 = scmp.lt.s32.totalorder %s19, 3
      %p234 = pnand %p232, %p233
      %p235 = pneg %p234
      // Predicated region
      $region37: #{tpu_custom_call.1} parent=5 // pred_check
        _
      $region38: #{tpu_custom_call.1} parent=5 // pred_check_branch
        %237 = sbr.rel (%p234) target = $region40
      $region39: #{tpu_custom_call.1} parent=5 // pred_region
        %s238 = ssub.s32 %s19, 1
        %s239 = smul.u32 16, %s24
        %p240 = scmp.lt.s32.totalorder %s239, 31
        %s241 = scalar_select %p240, %s239, 31
        %s242 = smul.addr %s241, 8
        %s243 = scalar_lea.vmem %s0, %s242
        %p244 = pneg %p45
        %p245 = pneg %p42
        %s246 = smul.u32 16, %s24
        %p247 = scmp.lt.s32.totalorder %s246, 31
        %s248 = scalar_select %p247, %s246, 31
        %s249 = smul.addr %s248, 8
        %s250 = scalar_lea.vmem %s1, %s249
        %p251 = pneg %p71
        %p252 = pneg %p68
        %p253 = pneg %p92
        %p254 = pneg %p89
        %p255 = pneg %p113
        %p256 = pneg %p110
        %p257 = pneg %p134
        %p258 = pneg %p131
        %p259 = pneg %p160
        %p260 = pneg %p157
        %s261 = sand.u32 %s147, 1
        %s262 = scalar_lea.sflag [#allocation3], %s261
        %s263 = sand.u32 %s147, 1
        %s264 = smul.addr %s263, 8
        %s265 = scalar_lea.vmem [#allocation2], %s264
        %p266 = pneg %p186
        %p267 = pneg %p183
        %s268 = sand.u32 %s173, 1
        %s269 = scalar_lea.sflag [#allocation5], %s268
        %s270 = sand.u32 %s173, 1
        %s271 = smul.addr %s270, 8
        %s272 = scalar_lea.vmem [#allocation4], %s271
        %s273 = smul.u32 16, %s24
        %p274 = scmp.lt.s32.totalorder %s273, 31
        %s275 = scalar_select %p274, %s273, 31
        %s276 = smul.addr %s275, 8
        %s277 = scalar_lea.vmem %s0, %s276
        %s278 = smul.u32 16, %s24
        %s279 = smul.u32 16, %s24
        %p280 = scmp.lt.s32.totalorder %s279, 31
        %s281 = scalar_select %p280, %s279, 31
        %s282 = smul.addr %s281, 8
        %s283 = scalar_lea.vmem %s1, %s282
        %s284 = smul.u32 16, %s24
        %v286 = vld [vmem:[%s277] sm:$0xff]
        %v287 = vld [vmem:[%s277 + $0x8] sm:$0xff]
        %v288 = vld [vmem:[%s277 + $0x10] sm:$0xff]
        %v289 = vld [vmem:[%s277 + $0x18] sm:$0xff]
        %v290 = vld [vmem:[%s277 + $0x20] sm:$0xff]
        %v291 = vld [vmem:[%s277 + $0x28] sm:$0xff]
        %v292 = vld [vmem:[%s277 + $0x30] sm:$0xff]
        %v293 = vld [vmem:[%s277 + $0x38] sm:$0xff]
        %v294 = vld [vmem:[%s277 + $0x40] sm:$0xff]
        %v295 = vld [vmem:[%s277 + $0x48] sm:$0xff]
        %v296 = vld [vmem:[%s277 + $0x50] sm:$0xff]
        %v297 = vld [vmem:[%s277 + $0x58] sm:$0xff]
        %v298 = vld [vmem:[%s277 + $0x60] sm:$0xff]
        %v299 = vld [vmem:[%s277 + $0x68] sm:$0xff]
        %v300 = vld [vmem:[%s277 + $0x70] sm:$0xff]
        %v301 = vld [vmem:[%s277 + $0x78] sm:$0xff]
        %v302 = vlaneseq
        %v303 = vand.u32 %v302, 127
        %304 = vset.pattern.permute.xlu0 0
        %305 = vperm.xlu0 %304, %v286
        %v306 = vpop.permute.xlu0 %305
        %307 = vset.pattern.permute.xlu0 0
        %308 = vperm.xlu0 %307, %v287
        %v309 = vpop.permute.xlu0 %308
        %310 = vset.pattern.permute.xlu0 0
        %311 = vperm.xlu0 %310, %v288
        %v312 = vpop.permute.xlu0 %311
        %313 = vset.pattern.permute.xlu0 0
        %314 = vperm.xlu0 %313, %v289
        %v315 = vpop.permute.xlu0 %314
        %316 = vset.pattern.permute.xlu0 0
        %317 = vperm.xlu0 %316, %v290
        %v318 = vpop.permute.xlu0 %317
        %319 = vset.pattern.permute.xlu0 0
        %320 = vperm.xlu0 %319, %v291
        %v321 = vpop.permute.xlu0 %320
        %322 = vset.pattern.permute.xlu0 0
        %323 = vperm.xlu0 %322, %v292
        %v324 = vpop.permute.xlu0 %323
        %325 = vset.pattern.permute.xlu0 0
        %326 = vperm.xlu0 %325, %v293
        %v327 = vpop.permute.xlu0 %326
        %328 = vset.pattern.permute.xlu0 0
        %329 = vperm.xlu0 %328, %v294
        %v330 = vpop.permute.xlu0 %329
        %331 = vset.pattern.permute.xlu0 0
        %332 = vperm.xlu0 %331, %v295
        %v333 = vpop.permute.xlu0 %332
        %334 = vset.pattern.permute.xlu0 0
        %335 = vperm.xlu0 %334, %v296
        %v336 = vpop.permute.xlu0 %335
        %337 = vset.pattern.permute.xlu0 0
        %338 = vperm.xlu0 %337, %v297
        %v339 = vpop.permute.xlu0 %338
        %340 = vset.pattern.permute.xlu0 0
        %341 = vperm.xlu0 %340, %v298
        %v342 = vpop.permute.xlu0 %341
        %343 = vset.pattern.permute.xlu0 0
        %344 = vperm.xlu0 %343, %v299
        %v345 = vpop.permute.xlu0 %344
        %346 = vset.pattern.permute.xlu0 0
        %347 = vperm.xlu0 %346, %v300
        %v348 = vpop.permute.xlu0 %347
        %349 = vset.pattern.permute.xlu0 0
        %350 = vperm.xlu0 %349, %v301
        %v351 = vpop.permute.xlu0 %350
        %vm352 = vcmp.eq.s32.totalorder %v306, %v303
        %vm353 = vcmp.eq.s32.totalorder %v309, %v303
        %vm354 = vcmp.eq.s32.totalorder %v312, %v303
        %vm355 = vcmp.eq.s32.totalorder %v315, %v303
        %vm356 = vcmp.eq.s32.totalorder %v318, %v303
        %vm357 = vcmp.eq.s32.totalorder %v321, %v303
        %vm358 = vcmp.eq.s32.totalorder %v324, %v303
        %vm359 = vcmp.eq.s32.totalorder %v327, %v303
        %vm360 = vcmp.eq.s32.totalorder %v330, %v303
        %vm361 = vcmp.eq.s32.totalorder %v333, %v303
        %vm362 = vcmp.eq.s32.totalorder %v336, %v303
        %vm363 = vcmp.eq.s32.totalorder %v339, %v303
        %vm364 = vcmp.eq.s32.totalorder %v342, %v303
        %vm365 = vcmp.eq.s32.totalorder %v345, %v303
        %vm366 = vcmp.eq.s32.totalorder %v348, %v303
        %vm367 = vcmp.eq.s32.totalorder %v351, %v303
        %v368 = vsel %vm352, 1, 0
        %v369 = vsel %vm353, 1, 0
        %v370 = vsel %vm354, 1, 0
        %v371 = vsel %vm355, 1, 0
        %v372 = vsel %vm356, 1, 0
        %v373 = vsel %vm357, 1, 0
        %v374 = vsel %vm358, 1, 0
        %v375 = vsel %vm359, 1, 0
        %v376 = vsel %vm360, 1, 0
        %v377 = vsel %vm361, 1, 0
        %v378 = vsel %vm362, 1, 0
        %v379 = vsel %vm363, 1, 0
        %v380 = vsel %vm364, 1, 0
        %v381 = vsel %vm365, 1, 0
        %v382 = vsel %vm366, 1, 0
        %v383 = vsel %vm367, 1, 0
        %v384 = vcvt.s32.f32 %v368
        %v385 = vcvt.s32.f32 %v369
        %v386 = vcvt.s32.f32 %v370
        %v387 = vcvt.s32.f32 %v371
        %v388 = vcvt.s32.f32 %v372
        %v389 = vcvt.s32.f32 %v373
        %v390 = vcvt.s32.f32 %v374
        %v391 = vcvt.s32.f32 %v375
        %v392 = vcvt.s32.f32 %v376
        %v393 = vcvt.s32.f32 %v377
        %v394 = vcvt.s32.f32 %v378
        %v395 = vcvt.s32.f32 %v379
        %v396 = vcvt.s32.f32 %v380
        %v397 = vcvt.s32.f32 %v381
        %v398 = vcvt.s32.f32 %v382
        %v399 = vcvt.s32.f32 %v383
        %v400 = vadd.f32 %v384, 0.0
        %v401 = vadd.f32 %v385, 0.0
        %v402 = vadd.f32 %v386, 0.0
        %v403 = vadd.f32 %v387, 0.0
        %v404 = vadd.f32 %v388, 0.0
        %v405 = vadd.f32 %v389, 0.0
        %v406 = vadd.f32 %v390, 0.0
        %v407 = vadd.f32 %v391, 0.0
        %v408 = vadd.f32 %v392, 0.0
        %v409 = vadd.f32 %v393, 0.0
        %v410 = vadd.f32 %v394, 0.0
        %v411 = vadd.f32 %v395, 0.0
        %v412 = vadd.f32 %v396, 0.0
        %v413 = vadd.f32 %v397, 0.0
        %v414 = vadd.f32 %v398, 0.0
        %v415 = vadd.f32 %v399, 0.0
        %416 = vset.pattern.permute.xlu0 1
        %417 = vperm.xlu0 %416, %v286
        %v418 = vpop.permute.xlu0 %417
        %419 = vset.pattern.permute.xlu0 1
        %420 = vperm.xlu0 %419, %v287
        %v421 = vpop.permute.xlu0 %420
        %422 = vset.pattern.permute.xlu0 1
        %423 = vperm.xlu0 %422, %v288
        %v424 = vpop.permute.xlu0 %423
        %425 = vset.pattern.permute.xlu0 1
        %426 = vperm.xlu0 %425, %v289
        %v427 = vpop.permute.xlu0 %426
        %428 = vset.pattern.permute.xlu0 1
        %429 = vperm.xlu0 %428, %v290
        %v430 = vpop.permute.xlu0 %429
        %431 = vset.pattern.permute.xlu0 1
        %432 = vperm.xlu0 %431, %v291
        %v433 = vpop.permute.xlu0 %432
        %434 = vset.pattern.permute.xlu0 1
        %435 = vperm.xlu0 %434, %v292
        %v436 = vpop.permute.xlu0 %435
        %437 = vset.pattern.permute.xlu0 1
        %438 = vperm.xlu0 %437, %v293
        %v439 = vpop.permute.xlu0 %438
        %440 = vset.pattern.permute.xlu0 1
        %441 = vperm.xlu0 %440, %v294
        %v442 = vpop.permute.xlu0 %441
        %443 = vset.pattern.permute.xlu0 1
        %444 = vperm.xlu0 %443, %v295
        %v445 = vpop.permute.xlu0 %444
        %446 = vset.pattern.permute.xlu0 1
        %447 = vperm.xlu0 %446, %v296
        %v448 = vpop.permute.xlu0 %447
        %449 = vset.pattern.permute.xlu0 1
        %450 = vperm.xlu0 %449, %v297
        %v451 = vpop.permute.xlu0 %450
        %452 = vset.pattern.permute.xlu0 1
        %453 = vperm.xlu0 %452, %v298
        %v454 = vpop.permute.xlu0 %453
        %455 = vset.pattern.permute.xlu0 1
        %456 = vperm.xlu0 %455, %v299
        %v457 = vpop.permute.xlu0 %456
        %458 = vset.pattern.permute.xlu0 1
        %459 = vperm.xlu0 %458, %v300
        %v460 = vpop.permute.xlu0 %459
        %461 = vset.pattern.permute.xlu0 1
        %462 = vperm.xlu0 %461, %v301
        %v463 = vpop.permute.xlu0 %462
        %vm464 = vcmp.eq.s32.totalorder %v418, %v303
        %vm465 = vcmp.eq.s32.totalorder %v421, %v303
        %vm466 = vcmp.eq.s32.totalorder %v424, %v303
        %vm467 = vcmp.eq.s32.totalorder %v427, %v303
        %vm468 = vcmp.eq.s32.totalorder %v430, %v303
        %vm469 = vcmp.eq.s32.totalorder %v433, %v303
        %vm470 = vcmp.eq.s32.totalorder %v436, %v303
        %vm471 = vcmp.eq.s32.totalorder %v439, %v303
        %vm472 = vcmp.eq.s32.totalorder %v442, %v303
        %vm473 = vcmp.eq.s32.totalorder %v445, %v303
        %vm474 = vcmp.eq.s32.totalorder %v448, %v303
        %vm475 = vcmp.eq.s32.totalorder %v451, %v303
        %vm476 = vcmp.eq.s32.totalorder %v454, %v303
        %vm477 = vcmp.eq.s32.totalorder %v457, %v303
        %vm478 = vcmp.eq.s32.totalorder %v460, %v303
        %vm479 = vcmp.eq.s32.totalorder %v463, %v303
        %v480 = vsel %vm464, 1, 0
        %v481 = vsel %vm465, 1, 0
        %v482 = vsel %vm466, 1, 0
        %v483 = vsel %vm467, 1, 0
        %v484 = vsel %vm468, 1, 0
        %v485 = vsel %vm469, 1, 0
        %v486 = vsel %vm470, 1, 0
        %v487 = vsel %vm471, 1, 0
        %v488 = vsel %vm472, 1, 0
        %v489 = vsel %vm473, 1, 0
        %v490 = vsel %vm474, 1, 0
        %v491 = vsel %vm475, 1, 0
        %v492 = vsel %vm476, 1, 0
        %v493 = vsel %vm477, 1, 0
        %v494 = vsel %vm478, 1, 0
        %v495 = vsel %vm479, 1, 0
        %v496 = vcvt.s32.f32 %v480
        %v497 = vcvt.s32.f32 %v481
        %v498 = vcvt.s32.f32 %v482
        %v499 = vcvt.s32.f32 %v483
        %v500 = vcvt.s32.f32 %v484
        %v501 = vcvt.s32.f32 %v485
        %v502 = vcvt.s32.f32 %v486
        %v503 = vcvt.s32.f32 %v487
        %v504 = vcvt.s32.f32 %v488
        %v505 = vcvt.s32.f32 %v489
        %v506 = vcvt.s32.f32 %v490
        %v507 = vcvt.s32.f32 %v491
        %v508 = vcvt.s32.f32 %v492
        %v509 = vcvt.s32.f32 %v493
        %v510 = vcvt.s32.f32 %v494
        %v511 = vcvt.s32.f32 %v495
        %v512 = vadd.f32 %v400, %v496
        %v513 = vadd.f32 %v401, %v497
        %v514 = vadd.f32 %v402, %v498
        %v515 = vadd.f32 %v403, %v499
        %v516 = vadd.f32 %v404, %v500
        %v517 = vadd.f32 %v405, %v501
        %v518 = vadd.f32 %v406, %v502
        %v519 = vadd.f32 %v407, %v503
        %v520 = vadd.f32 %v408, %v504
        %v521 = vadd.f32 %v409, %v505
        %v522 = vadd.f32 %v410, %v506
        %v523 = vadd.f32 %v411, %v507
        %v524 = vadd.f32 %v412, %v508
        %v525 = vadd.f32 %v413, %v509
        %v526 = vadd.f32 %v414, %v510
        %v527 = vadd.f32 %v415, %v511
        %528 = vset.pattern.permute.xlu0 2
        %529 = vperm.xlu0 %528, %v286
        %v530 = vpop.permute.xlu0 %529
        %531 = vset.pattern.permute.xlu0 2
        %532 = vperm.xlu0 %531, %v287
        %v533 = vpop.permute.xlu0 %532
        %534 = vset.pattern.permute.xlu0 2
        %535 = vperm.xlu0 %534, %v288
        %v536 = vpop.permute.xlu0 %535
        %537 = vset.pattern.permute.xlu0 2
        %538 = vperm.xlu0 %537, %v289
        %v539 = vpop.permute.xlu0 %538
        %540 = vset.pattern.permute.xlu0 2
        %541 = vperm.xlu0 %540, %v290
        %v542 = vpop.permute.xlu0 %541
        %543 = vset.pattern.permute.xlu0 2
        %544 = vperm.xlu0 %543, %v291
        %v545 = vpop.permute.xlu0 %544
        %546 = vset.pattern.permute.xlu0 2
        %547 = vperm.xlu0 %546, %v292
        %v548 = vpop.permute.xlu0 %547
        %549 = vset.pattern.permute.xlu0 2
        %550 = vperm.xlu0 %549, %v293
        %v551 = vpop.permute.xlu0 %550
        %552 = vset.pattern.permute.xlu0 2
        %553 = vperm.xlu0 %552, %v294
        %v554 = vpop.permute.xlu0 %553
        %555 = vset.pattern.permute.xlu0 2
        %556 = vperm.xlu0 %555, %v295
        %v557 = vpop.permute.xlu0 %556
        %558 = vset.pattern.permute.xlu0 2
        %559 = vperm.xlu0 %558, %v296
        %v560 = vpop.permute.xlu0 %559
        %561 = vset.pattern.permute.xlu0 2
        %562 = vperm.xlu0 %561, %v297
        %v563 = vpop.permute.xlu0 %562
        %564 = vset.pattern.permute.xlu0 2
        %565 = vperm.xlu0 %564, %v298
        %v566 = vpop.permute.xlu0 %565
        %567 = vset.pattern.permute.xlu0 2
        %568 = vperm.xlu0 %567, %v299
        %v569 = vpop.permute.xlu0 %568
        %570 = vset.pattern.permute.xlu0 2
        %571 = vperm.xlu0 %570, %v300
        %v572 = vpop.permute.xlu0 %571
        %573 = vset.pattern.permute.xlu0 2
        %574 = vperm.xlu0 %573, %v301
        %v575 = vpop.permute.xlu0 %574
        %vm576 = vcmp.eq.s32.totalorder %v530, %v303
        %vm577 = vcmp.eq.s32.totalorder %v533, %v303
        %vm578 = vcmp.eq.s32.totalorder %v536, %v303
        %vm579 = vcmp.eq.s32.totalorder %v539, %v303
        %vm580 = vcmp.eq.s32.totalorder %v542, %v303
        %vm581 = vcmp.eq.s32.totalorder %v545, %v303
        %vm582 = vcmp.eq.s32.totalorder %v548, %v303
        %vm583 = vcmp.eq.s32.totalorder %v551, %v303
        %vm584 = vcmp.eq.s32.totalorder %v554, %v303
        %vm585 = vcmp.eq.s32.totalorder %v557, %v303
        %vm586 = vcmp.eq.s32.totalorder %v560, %v303
        %vm587 = vcmp.eq.s32.totalorder %v563, %v303
        %vm588 = vcmp.eq.s32.totalorder %v566, %v303
        %vm589 = vcmp.eq.s32.totalorder %v569, %v303
        %vm590 = vcmp.eq.s32.totalorder %v572, %v303
        %vm591 = vcmp.eq.s32.totalorder %v575, %v303
        %v592 = vsel %vm576, 1, 0
        %v593 = vsel %vm577, 1, 0
        %v594 = vsel %vm578, 1, 0
        %v595 = vsel %vm579, 1, 0
        %v596 = vsel %vm580, 1, 0
        %v597 = vsel %vm581, 1, 0
        %v598 = vsel %vm582, 1, 0
        %v599 = vsel %vm583, 1, 0
        %v600 = vsel %vm584, 1, 0
        %v601 = vsel %vm585, 1, 0
        %v602 = vsel %vm586, 1, 0
        %v603 = vsel %vm587, 1, 0
        %v604 = vsel %vm588, 1, 0
        %v605 = vsel %vm589, 1, 0
        %v606 = vsel %vm590, 1, 0
        %v607 = vsel %vm591, 1, 0
        %v608 = vcvt.s32.f32 %v592
        %v609 = vcvt.s32.f32 %v593
        %v610 = vcvt.s32.f32 %v594
        %v611 = vcvt.s32.f32 %v595
        %v612 = vcvt.s32.f32 %v596
        %v613 = vcvt.s32.f32 %v597
        %v614 = vcvt.s32.f32 %v598
        %v615 = vcvt.s32.f32 %v599
        %v616 = vcvt.s32.f32 %v600
        %v617 = vcvt.s32.f32 %v601
        %v618 = vcvt.s32.f32 %v602
        %v619 = vcvt.s32.f32 %v603
        %v620 = vcvt.s32.f32 %v604
        %v621 = vcvt.s32.f32 %v605
        %v622 = vcvt.s32.f32 %v606
        %v623 = vcvt.s32.f32 %v607
        %v624 = vadd.f32 %v512, %v608
        %v625 = vadd.f32 %v513, %v609
        %v626 = vadd.f32 %v514, %v610
        %v627 = vadd.f32 %v515, %v611
        %v628 = vadd.f32 %v516, %v612
        %v629 = vadd.f32 %v517, %v613
        %v630 = vadd.f32 %v518, %v614
        %v631 = vadd.f32 %v519, %v615
        %v632 = vadd.f32 %v520, %v616
        %v633 = vadd.f32 %v521, %v617
        %v634 = vadd.f32 %v522, %v618
        %v635 = vadd.f32 %v523, %v619
        %v636 = vadd.f32 %v524, %v620
        %v637 = vadd.f32 %v525, %v621
        %v638 = vadd.f32 %v526, %v622
        %v639 = vadd.f32 %v527, %v623
        %640 = vset.pattern.permute.xlu0 3
        %641 = vperm.xlu0 %640, %v286
        %v642 = vpop.permute.xlu0 %641
        %643 = vset.pattern.permute.xlu0 3
        %644 = vperm.xlu0 %643, %v287
        %v645 = vpop.permute.xlu0 %644
        %646 = vset.pattern.permute.xlu0 3
        %647 = vperm.xlu0 %646, %v288
        %v648 = vpop.permute.xlu0 %647
        %649 = vset.pattern.permute.xlu0 3
        %650 = vperm.xlu0 %649, %v289
        %v651 = vpop.permute.xlu0 %650
        %652 = vset.pattern.permute.xlu0 3
        %653 = vperm.xlu0 %652, %v290
        %v654 = vpop.permute.xlu0 %653
        %655 = vset.pattern.permute.xlu0 3
        %656 = vperm.xlu0 %655, %v291
        %v657 = vpop.permute.xlu0 %656
        %658 = vset.pattern.permute.xlu0 3
        %659 = vperm.xlu0 %658, %v292
        %v660 = vpop.permute.xlu0 %659
        %661 = vset.pattern.permute.xlu0 3
        %662 = vperm.xlu0 %661, %v293
        %v663 = vpop.permute.xlu0 %662
        %664 = vset.pattern.permute.xlu0 3
        %665 = vperm.xlu0 %664, %v294
        %v666 = vpop.permute.xlu0 %665
        %667 = vset.pattern.permute.xlu0 3
        %668 = vperm.xlu0 %667, %v295
        %v669 = vpop.permute.xlu0 %668
        %670 = vset.pattern.permute.xlu0 3
        %671 = vperm.xlu0 %670, %v296
        %v672 = vpop.permute.xlu0 %671
        %673 = vset.pattern.permute.xlu0 3
        %674 = vperm.xlu0 %673, %v297
        %v675 = vpop.permute.xlu0 %674
        %676 = vset.pattern.permute.xlu0 3
        %677 = vperm.xlu0 %676, %v298
        %v678 = vpop.permute.xlu0 %677
        %679 = vset.pattern.permute.xlu0 3
        %680 = vperm.xlu0 %679, %v299
        %v681 = vpop.permute.xlu0 %680
        %682 = vset.pattern.permute.xlu0 3
        %683 = vperm.xlu0 %682, %v300
        %v684 = vpop.permute.xlu0 %683
        %685 = vset.pattern.permute.xlu0 3
        %686 = vperm.xlu0 %685, %v301
        %v687 = vpop.permute.xlu0 %686
        %vm688 = vcmp.eq.s32.totalorder %v642, %v303
        %vm689 = vcmp.eq.s32.totalorder %v645, %v303
        %vm690 = vcmp.eq.s32.totalorder %v648, %v303
        %vm691 = vcmp.eq.s32.totalorder %v651, %v303
        %vm692 = vcmp.eq.s32.totalorder %v654, %v303
        %vm693 = vcmp.eq.s32.totalorder %v657, %v303
        %vm694 = vcmp.eq.s32.totalorder %v660, %v303
        %vm695 = vcmp.eq.s32.totalorder %v663, %v303
        %vm696 = vcmp.eq.s32.totalorder %v666, %v303
        %vm697 = vcmp.eq.s32.totalorder %v669, %v303
        %vm698 = vcmp.eq.s32.totalorder %v672, %v303
        %vm699 = vcmp.eq.s32.totalorder %v675, %v303
        %vm700 = vcmp.eq.s32.totalorder %v678, %v303
        %vm701 = vcmp.eq.s32.totalorder %v681, %v303
        %vm702 = vcmp.eq.s32.totalorder %v684, %v303
        %vm703 = vcmp.eq.s32.totalorder %v687, %v303
        %v704 = vsel %vm688, 1, 0
        %v705 = vsel %vm689, 1, 0
        %v706 = vsel %vm690, 1, 0
        %v707 = vsel %vm691, 1, 0
        %v708 = vsel %vm692, 1, 0
        %v709 = vsel %vm693, 1, 0
        %v710 = vsel %vm694, 1, 0
        %v711 = vsel %vm695, 1, 0
        %v712 = vsel %vm696, 1, 0
        %v713 = vsel %vm697, 1, 0
        %v714 = vsel %vm698, 1, 0
        %v715 = vsel %vm699, 1, 0
        %v716 = vsel %vm700, 1, 0
        %v717 = vsel %vm701, 1, 0
        %v718 = vsel %vm702, 1, 0
        %v719 = vsel %vm703, 1, 0
        %v720 = vcvt.s32.f32 %v704
        %v721 = vcvt.s32.f32 %v705
        %v722 = vcvt.s32.f32 %v706
        %v723 = vcvt.s32.f32 %v707
        %v724 = vcvt.s32.f32 %v708
        %v725 = vcvt.s32.f32 %v709
        %v726 = vcvt.s32.f32 %v710
        %v727 = vcvt.s32.f32 %v711
        %v728 = vcvt.s32.f32 %v712
        %v729 = vcvt.s32.f32 %v713
        %v730 = vcvt.s32.f32 %v714
        %v731 = vcvt.s32.f32 %v715
        %v732 = vcvt.s32.f32 %v716
        %v733 = vcvt.s32.f32 %v717
        %v734 = vcvt.s32.f32 %v718
        %v735 = vcvt.s32.f32 %v719
        %v736 = vadd.f32 %v624, %v720
        %v737 = vadd.f32 %v625, %v721
        %v738 = vadd.f32 %v626, %v722
        %v739 = vadd.f32 %v627, %v723
        %v740 = vadd.f32 %v628, %v724
        %v741 = vadd.f32 %v629, %v725
        %v742 = vadd.f32 %v630, %v726
        %v743 = vadd.f32 %v631, %v727
        %v744 = vadd.f32 %v632, %v728
        %v745 = vadd.f32 %v633, %v729
        %v746 = vadd.f32 %v634, %v730
        %v747 = vadd.f32 %v635, %v731
        %v748 = vadd.f32 %v636, %v732
        %v749 = vadd.f32 %v637, %v733
        %v750 = vadd.f32 %v638, %v734
        %v751 = vadd.f32 %v639, %v735
        %752 = vset.pattern.permute.xlu0 4
        %753 = vperm.xlu0 %752, %v286
        %v754 = vpop.permute.xlu0 %753
        %755 = vset.pattern.permute.xlu0 4
        %756 = vperm.xlu0 %755, %v287
        %v757 = vpop.permute.xlu0 %756
        %758 = vset.pattern.permute.xlu0 4
        %759 = vperm.xlu0 %758, %v288
        %v760 = vpop.permute.xlu0 %759
        %761 = vset.pattern.permute.xlu0 4
        %762 = vperm.xlu0 %761, %v289
        %v763 = vpop.permute.xlu0 %762
        %764 = vset.pattern.permute.xlu0 4
        %765 = vperm.xlu0 %764, %v290
        %v766 = vpop.permute.xlu0 %765
        %767 = vset.pattern.permute.xlu0 4
        %768 = vperm.xlu0 %767, %v291
        %v769 = vpop.permute.xlu0 %768
        %770 = vset.pattern.permute.xlu0 4
        %771 = vperm.xlu0 %770, %v292
        %v772 = vpop.permute.xlu0 %771
        %773 = vset.pattern.permute.xlu0 4
        %774 = vperm.xlu0 %773, %v293
        %v775 = vpop.permute.xlu0 %774
        %776 = vset.pattern.permute.xlu0 4
        %777 = vperm.xlu0 %776, %v294
        %v778 = vpop.permute.xlu0 %777
        %779 = vset.pattern.permute.xlu0 4
        %780 = vperm.xlu0 %779, %v295
        %v781 = vpop.permute.xlu0 %780
        %782 = vset.pattern.permute.xlu0 4
        %783 = vperm.xlu0 %782, %v296
        %v784 = vpop.permute.xlu0 %783
        %785 = vset.pattern.permute.xlu0 4
        %786 = vperm.xlu0 %785, %v297
        %v787 = vpop.permute.xlu0 %786
        %788 = vset.pattern.permute.xlu0 4
        %789 = vperm.xlu0 %788, %v298
        %v790 = vpop.permute.xlu0 %789
        %791 = vset.pattern.permute.xlu0 4
        %792 = vperm.xlu0 %791, %v299
        %v793 = vpop.permute.xlu0 %792
        %794 = vset.pattern.permute.xlu0 4
        %795 = vperm.xlu0 %794, %v300
        %v796 = vpop.permute.xlu0 %795
        %797 = vset.pattern.permute.xlu0 4
        %798 = vperm.xlu0 %797, %v301
        %v799 = vpop.permute.xlu0 %798
        %vm800 = vcmp.eq.s32.totalorder %v754, %v303
        %vm801 = vcmp.eq.s32.totalorder %v757, %v303
        %vm802 = vcmp.eq.s32.totalorder %v760, %v303
        %vm803 = vcmp.eq.s32.totalorder %v763, %v303
        %vm804 = vcmp.eq.s32.totalorder %v766, %v303
        %vm805 = vcmp.eq.s32.totalorder %v769, %v303
        %vm806 = vcmp.eq.s32.totalorder %v772, %v303
        %vm807 = vcmp.eq.s32.totalorder %v775, %v303
        %vm808 = vcmp.eq.s32.totalorder %v778, %v303
        %vm809 = vcmp.eq.s32.totalorder %v781, %v303
        %vm810 = vcmp.eq.s32.totalorder %v784, %v303
        %vm811 = vcmp.eq.s32.totalorder %v787, %v303
        %vm812 = vcmp.eq.s32.totalorder %v790, %v303
        %vm813 = vcmp.eq.s32.totalorder %v793, %v303
        %vm814 = vcmp.eq.s32.totalorder %v796, %v303
        %vm815 = vcmp.eq.s32.totalorder %v799, %v303
        %v816 = vsel %vm800, 1, 0
        %v817 = vsel %vm801, 1, 0
        %v818 = vsel %vm802, 1, 0
        %v819 = vsel %vm803, 1, 0
        %v820 = vsel %vm804, 1, 0
        %v821 = vsel %vm805, 1, 0
        %v822 = vsel %vm806, 1, 0
        %v823 = vsel %vm807, 1, 0
        %v824 = vsel %vm808, 1, 0
        %v825 = vsel %vm809, 1, 0
        %v826 = vsel %vm810, 1, 0
        %v827 = vsel %vm811, 1, 0
        %v828 = vsel %vm812, 1, 0
        %v829 = vsel %vm813, 1, 0
        %v830 = vsel %vm814, 1, 0
        %v831 = vsel %vm815, 1, 0
        %v832 = vcvt.s32.f32 %v816
        %v833 = vcvt.s32.f32 %v817
        %v834 = vcvt.s32.f32 %v818
        %v835 = vcvt.s32.f32 %v819
        %v836 = vcvt.s32.f32 %v820
        %v837 = vcvt.s32.f32 %v821
        %v838 = vcvt.s32.f32 %v822
        %v839 = vcvt.s32.f32 %v823
        %v840 = vcvt.s32.f32 %v824
        %v841 = vcvt.s32.f32 %v825
        %v842 = vcvt.s32.f32 %v826
        %v843 = vcvt.s32.f32 %v827
        %v844 = vcvt.s32.f32 %v828
        %v845 = vcvt.s32.f32 %v829
        %v846 = vcvt.s32.f32 %v830
        %v847 = vcvt.s32.f32 %v831
        %v848 = vadd.f32 %v736, %v832
        %v849 = vadd.f32 %v737, %v833
        %v850 = vadd.f32 %v738, %v834
        %v851 = vadd.f32 %v739, %v835
        %v852 = vadd.f32 %v740, %v836
        %v853 = vadd.f32 %v741, %v837
        %v854 = vadd.f32 %v742, %v838
        %v855 = vadd.f32 %v743, %v839
        %v856 = vadd.f32 %v744, %v840
        %v857 = vadd.f32 %v745, %v841
        %v858 = vadd.f32 %v746, %v842
        %v859 = vadd.f32 %v747, %v843
        %v860 = vadd.f32 %v748, %v844
        %v861 = vadd.f32 %v749, %v845
        %v862 = vadd.f32 %v750, %v846
        %v863 = vadd.f32 %v751, %v847
        %864 = vset.pattern.permute.xlu0 5
        %865 = vperm.xlu0 %864, %v286
        %v866 = vpop.permute.xlu0 %865
        %867 = vset.pattern.permute.xlu0 5
        %868 = vperm.xlu0 %867, %v287
        %v869 = vpop.permute.xlu0 %868
        %870 = vset.pattern.permute.xlu0 5
        %871 = vperm.xlu0 %870, %v288
        %v872 = vpop.permute.xlu0 %871
        %873 = vset.pattern.permute.xlu0 5
        %874 = vperm.xlu0 %873, %v289
        %v875 = vpop.permute.xlu0 %874
        %876 = vset.pattern.permute.xlu0 5
        %877 = vperm.xlu0 %876, %v290
        %v878 = vpop.permute.xlu0 %877
        %879 = vset.pattern.permute.xlu0 5
        %880 = vperm.xlu0 %879, %v291
        %v881 = vpop.permute.xlu0 %880
        %882 = vset.pattern.permute.xlu0 5
        %883 = vperm.xlu0 %882, %v292
        %v884 = vpop.permute.xlu0 %883
        %885 = vset.pattern.permute.xlu0 5
        %886 = vperm.xlu0 %885, %v293
        %v887 = vpop.permute.xlu0 %886
        %888 = vset.pattern.permute.xlu0 5
        %889 = vperm.xlu0 %888, %v294
        %v890 = vpop.permute.xlu0 %889
        %891 = vset.pattern.permute.xlu0 5
        %892 = vperm.xlu0 %891, %v295
        %v893 = vpop.permute.xlu0 %892
        %894 = vset.pattern.permute.xlu0 5
        %895 = vperm.xlu0 %894, %v296
        %v896 = vpop.permute.xlu0 %895
        %897 = vset.pattern.permute.xlu0 5
        %898 = vperm.xlu0 %897, %v297
        %v899 = vpop.permute.xlu0 %898
        %900 = vset.pattern.permute.xlu0 5
        %901 = vperm.xlu0 %900, %v298
        %v902 = vpop.permute.xlu0 %901
        %903 = vset.pattern.permute.xlu0 5
        %904 = vperm.xlu0 %903, %v299
        %v905 = vpop.permute.xlu0 %904
        %906 = vset.pattern.permute.xlu0 5
        %907 = vperm.xlu0 %906, %v300
        %v908 = vpop.permute.xlu0 %907
        %909 = vset.pattern.permute.xlu0 5
        %910 = vperm.xlu0 %909, %v301
        %v911 = vpop.permute.xlu0 %910
        %vm912 = vcmp.eq.s32.totalorder %v866, %v303
        %vm913 = vcmp.eq.s32.totalorder %v869, %v303
        %vm914 = vcmp.eq.s32.totalorder %v872, %v303
        %vm915 = vcmp.eq.s32.totalorder %v875, %v303
        %vm916 = vcmp.eq.s32.totalorder %v878, %v303
        %vm917 = vcmp.eq.s32.totalorder %v881, %v303
        %vm918 = vcmp.eq.s32.totalorder %v884, %v303
        %vm919 = vcmp.eq.s32.totalorder %v887, %v303
        %vm920 = vcmp.eq.s32.totalorder %v890, %v303
        %vm921 = vcmp.eq.s32.totalorder %v893, %v303
        %vm922 = vcmp.eq.s32.totalorder %v896, %v303
        %vm923 = vcmp.eq.s32.totalorder %v899, %v303
        %vm924 = vcmp.eq.s32.totalorder %v902, %v303
        %vm925 = vcmp.eq.s32.totalorder %v905, %v303
        %vm926 = vcmp.eq.s32.totalorder %v908, %v303
        %vm927 = vcmp.eq.s32.totalorder %v911, %v303
        %v928 = vsel %vm912, 1, 0
        %v929 = vsel %vm913, 1, 0
        %v930 = vsel %vm914, 1, 0
        %v931 = vsel %vm915, 1, 0
        %v932 = vsel %vm916, 1, 0
        %v933 = vsel %vm917, 1, 0
        %v934 = vsel %vm918, 1, 0
        %v935 = vsel %vm919, 1, 0
        %v936 = vsel %vm920, 1, 0
        %v937 = vsel %vm921, 1, 0
        %v938 = vsel %vm922, 1, 0
        %v939 = vsel %vm923, 1, 0
        %v940 = vsel %vm924, 1, 0
        %v941 = vsel %vm925, 1, 0
        %v942 = vsel %vm926, 1, 0
        %v943 = vsel %vm927, 1, 0
        %v944 = vcvt.s32.f32 %v928
        %v945 = vcvt.s32.f32 %v929
        %v946 = vcvt.s32.f32 %v930
        %v947 = vcvt.s32.f32 %v931
        %v948 = vcvt.s32.f32 %v932
        %v949 = vcvt.s32.f32 %v933
        %v950 = vcvt.s32.f32 %v934
        %v951 = vcvt.s32.f32 %v935
        %v952 = vcvt.s32.f32 %v936
        %v953 = vcvt.s32.f32 %v937
        %v954 = vcvt.s32.f32 %v938
        %v955 = vcvt.s32.f32 %v939
        %v956 = vcvt.s32.f32 %v940
        %v957 = vcvt.s32.f32 %v941
        %v958 = vcvt.s32.f32 %v942
        %v959 = vcvt.s32.f32 %v943
        %v960 = vadd.f32 %v848, %v944
        %v961 = vadd.f32 %v849, %v945
        %v962 = vadd.f32 %v850, %v946
        %v963 = vadd.f32 %v851, %v947
        %v964 = vadd.f32 %v852, %v948
        %v965 = vadd.f32 %v853, %v949
        %v966 = vadd.f32 %v854, %v950
        %v967 = vadd.f32 %v855, %v951
        %v968 = vadd.f32 %v856, %v952
        %v969 = vadd.f32 %v857, %v953
        %v970 = vadd.f32 %v858, %v954
        %v971 = vadd.f32 %v859, %v955
        %v972 = vadd.f32 %v860, %v956
        %v973 = vadd.f32 %v861, %v957
        %v974 = vadd.f32 %v862, %v958
        %v975 = vadd.f32 %v863, %v959
        %976 = vset.pattern.permute.xlu0 6
        %977 = vperm.xlu0 %976, %v286
        %v978 = vpop.permute.xlu0 %977
        %979 = vset.pattern.permute.xlu0 6
        %980 = vperm.xlu0 %979, %v287
        %v981 = vpop.permute.xlu0 %980
        %982 = vset.pattern.permute.xlu0 6
        %983 = vperm.xlu0 %982, %v288
        %v984 = vpop.permute.xlu0 %983
        %985 = vset.pattern.permute.xlu0 6
        %986 = vperm.xlu0 %985, %v289
        %v987 = vpop.permute.xlu0 %986
        %988 = vset.pattern.permute.xlu0 6
        %989 = vperm.xlu0 %988, %v290
        %v990 = vpop.permute.xlu0 %989
        %991 = vset.pattern.permute.xlu0 6
        %992 = vperm.xlu0 %991, %v291
        %v993 = vpop.permute.xlu0 %992
        %994 = vset.pattern.permute.xlu0 6
        %995 = vperm.xlu0 %994, %v292
        %v996 = vpop.permute.xlu0 %995
        %997 = vset.pattern.permute.xlu0 6
        %998 = vperm.xlu0 %997, %v293
        %v999 = vpop.permute.xlu0 %998
        %1000 = vset.pattern.permute.xlu0 6
        %1001 = vperm.xlu0 %1000, %v294
        %v1002 = vpop.permute.xlu0 %1001
        %1003 = vset.pattern.permute.xlu0 6
        %1004 = vperm.xlu0 %1003, %v295
        %v1005 = vpop.permute.xlu0 %1004
        %1006 = vset.pattern.permute.xlu0 6
        %1007 = vperm.xlu0 %1006, %v296
        %v1008 = vpop.permute.xlu0 %1007
        %1009 = vset.pattern.permute.xlu0 6
        %1010 = vperm.xlu0 %1009, %v297
        %v1011 = vpop.permute.xlu0 %1010
        %1012 = vset.pattern.permute.xlu0 6
        %1013 = vperm.xlu0 %1012, %v298
        %v1014 = vpop.permute.xlu0 %1013
        %1015 = vset.pattern.permute.xlu0 6
        %1016 = vperm.xlu0 %1015, %v299
        %v1017 = vpop.permute.xlu0 %1016
        %1018 = vset.pattern.permute.xlu0 6
        %1019 = vperm.xlu0 %1018, %v300
        %v1020 = vpop.permute.xlu0 %1019
        %1021 = vset.pattern.permute.xlu0 6
        %1022 = vperm.xlu0 %1021, %v301
        %v1023 = vpop.permute.xlu0 %1022
        %vm1024 = vcmp.eq.s32.totalorder %v978, %v303
        %vm1025 = vcmp.eq.s32.totalorder %v981, %v303
        %vm1026 = vcmp.eq.s32.totalorder %v984, %v303
        %vm1027 = vcmp.eq.s32.totalorder %v987, %v303
        %vm1028 = vcmp.eq.s32.totalorder %v990, %v303
        %vm1029 = vcmp.eq.s32.totalorder %v993, %v303
        %vm1030 = vcmp.eq.s32.totalorder %v996, %v303
        %vm1031 = vcmp.eq.s32.totalorder %v999, %v303
        %vm1032 = vcmp.eq.s32.totalorder %v1002, %v303
        %vm1033 = vcmp.eq.s32.totalorder %v1005, %v303
        %vm1034 = vcmp.eq.s32.totalorder %v1008, %v303
        %vm1035 = vcmp.eq.s32.totalorder %v1011, %v303
        %vm1036 = vcmp.eq.s32.totalorder %v1014, %v303
        %vm1037 = vcmp.eq.s32.totalorder %v1017, %v303
        %vm1038 = vcmp.eq.s32.totalorder %v1020, %v303
        %vm1039 = vcmp.eq.s32.totalorder %v1023, %v303
        %v1040 = vsel %vm1024, 1, 0
        %v1041 = vsel %vm1025, 1, 0
        %v1042 = vsel %vm1026, 1, 0
        %v1043 = vsel %vm1027, 1, 0
        %v1044 = vsel %vm1028, 1, 0
        %v1045 = vsel %vm1029, 1, 0
        %v1046 = vsel %vm1030, 1, 0
        %v1047 = vsel %vm1031, 1, 0
        %v1048 = vsel %vm1032, 1, 0
        %v1049 = vsel %vm1033, 1, 0
        %v1050 = vsel %vm1034, 1, 0
        %v1051 = vsel %vm1035, 1, 0
        %v1052 = vsel %vm1036, 1, 0
        %v1053 = vsel %vm1037, 1, 0
        %v1054 = vsel %vm1038, 1, 0
        %v1055 = vsel %vm1039, 1, 0
        %v1056 = vcvt.s32.f32 %v1040
        %v1057 = vcvt.s32.f32 %v1041
        %v1058 = vcvt.s32.f32 %v1042
        %v1059 = vcvt.s32.f32 %v1043
        %v1060 = vcvt.s32.f32 %v1044
        %v1061 = vcvt.s32.f32 %v1045
        %v1062 = vcvt.s32.f32 %v1046
        %v1063 = vcvt.s32.f32 %v1047
        %v1064 = vcvt.s32.f32 %v1048
        %v1065 = vcvt.s32.f32 %v1049
        %v1066 = vcvt.s32.f32 %v1050
        %v1067 = vcvt.s32.f32 %v1051
        %v1068 = vcvt.s32.f32 %v1052
        %v1069 = vcvt.s32.f32 %v1053
        %v1070 = vcvt.s32.f32 %v1054
        %v1071 = vcvt.s32.f32 %v1055
        %v1072 = vadd.f32 %v960, %v1056
        %v1073 = vadd.f32 %v961, %v1057
        %v1074 = vadd.f32 %v962, %v1058
        %v1075 = vadd.f32 %v963, %v1059
        %v1076 = vadd.f32 %v964, %v1060
        %v1077 = vadd.f32 %v965, %v1061
        %v1078 = vadd.f32 %v966, %v1062
        %v1079 = vadd.f32 %v967, %v1063
        %v1080 = vadd.f32 %v968, %v1064
        %v1081 = vadd.f32 %v969, %v1065
        %v1082 = vadd.f32 %v970, %v1066
        %v1083 = vadd.f32 %v971, %v1067
        %v1084 = vadd.f32 %v972, %v1068
        %v1085 = vadd.f32 %v973, %v1069
        %v1086 = vadd.f32 %v974, %v1070
        %v1087 = vadd.f32 %v975, %v1071
        %1088 = vset.pattern.permute.xlu0 7
        %1089 = vperm.xlu0 %1088, %v286
        %v1090 = vpop.permute.xlu0 %1089
        %1091 = vset.pattern.permute.xlu0 7
        %1092 = vperm.xlu0 %1091, %v287
        %v1093 = vpop.permute.xlu0 %1092
        %1094 = vset.pattern.permute.xlu0 7
        %1095 = vperm.xlu0 %1094, %v288
        %v1096 = vpop.permute.xlu0 %1095
        %1097 = vset.pattern.permute.xlu0 7
        %1098 = vperm.xlu0 %1097, %v289
        %v1099 = vpop.permute.xlu0 %1098
        %1100 = vset.pattern.permute.xlu0 7
        %1101 = vperm.xlu0 %1100, %v290
        %v1102 = vpop.permute.xlu0 %1101
        %1103 = vset.pattern.permute.xlu0 7
        %1104 = vperm.xlu0 %1103, %v291
        %v1105 = vpop.permute.xlu0 %1104
        %1106 = vset.pattern.permute.xlu0 7
        %1107 = vperm.xlu0 %1106, %v292
        %v1108 = vpop.permute.xlu0 %1107
        %1109 = vset.pattern.permute.xlu0 7
        %1110 = vperm.xlu0 %1109, %v293
        %v1111 = vpop.permute.xlu0 %1110
        %1112 = vset.pattern.permute.xlu0 7
        %1113 = vperm.xlu0 %1112, %v294
        %v1114 = vpop.permute.xlu0 %1113
        %1115 = vset.pattern.permute.xlu0 7
        %1116 = vperm.xlu0 %1115, %v295
        %v1117 = vpop.permute.xlu0 %1116
        %1118 = vset.pattern.permute.xlu0 7
        %1119 = vperm.xlu0 %1118, %v296
        %v1120 = vpop.permute.xlu0 %1119
        %1121 = vset.pattern.permute.xlu0 7
        %1122 = vperm.xlu0 %1121, %v297
        %v1123 = vpop.permute.xlu0 %1122
        %1124 = vset.pattern.permute.xlu0 7
        %1125 = vperm.xlu0 %1124, %v298
        %v1126 = vpop.permute.xlu0 %1125
        %1127 = vset.pattern.permute.xlu0 7
        %1128 = vperm.xlu0 %1127, %v299
        %v1129 = vpop.permute.xlu0 %1128
        %1130 = vset.pattern.permute.xlu0 7
        %1131 = vperm.xlu0 %1130, %v300
        %v1132 = vpop.permute.xlu0 %1131
        %1133 = vset.pattern.permute.xlu0 7
        %1134 = vperm.xlu0 %1133, %v301
        %v1135 = vpop.permute.xlu0 %1134
        %vm1136 = vcmp.eq.s32.totalorder %v1090, %v303
        %vm1137 = vcmp.eq.s32.totalorder %v1093, %v303
        %vm1138 = vcmp.eq.s32.totalorder %v1096, %v303
        %vm1139 = vcmp.eq.s32.totalorder %v1099, %v303
        %vm1140 = vcmp.eq.s32.totalorder %v1102, %v303
        %vm1141 = vcmp.eq.s32.totalorder %v1105, %v303
        %vm1142 = vcmp.eq.s32.totalorder %v1108, %v303
        %vm1143 = vcmp.eq.s32.totalorder %v1111, %v303
        %vm1144 = vcmp.eq.s32.totalorder %v1114, %v303
        %vm1145 = vcmp.eq.s32.totalorder %v1117, %v303
        %vm1146 = vcmp.eq.s32.totalorder %v1120, %v303
        %vm1147 = vcmp.eq.s32.totalorder %v1123, %v303
        %vm1148 = vcmp.eq.s32.totalorder %v1126, %v303
        %vm1149 = vcmp.eq.s32.totalorder %v1129, %v303
        %vm1150 = vcmp.eq.s32.totalorder %v1132, %v303
        %vm1151 = vcmp.eq.s32.totalorder %v1135, %v303
        %v1152 = vsel %vm1136, 1, 0
        %v1153 = vsel %vm1137, 1, 0
        %v1154 = vsel %vm1138, 1, 0
        %v1155 = vsel %vm1139, 1, 0
        %v1156 = vsel %vm1140, 1, 0
        %v1157 = vsel %vm1141, 1, 0
        %v1158 = vsel %vm1142, 1, 0
        %v1159 = vsel %vm1143, 1, 0
        %v1160 = vsel %vm1144, 1, 0
        %v1161 = vsel %vm1145, 1, 0
        %v1162 = vsel %vm1146, 1, 0
        %v1163 = vsel %vm1147, 1, 0
        %v1164 = vsel %vm1148, 1, 0
        %v1165 = vsel %vm1149, 1, 0
        %v1166 = vsel %vm1150, 1, 0
        %v1167 = vsel %vm1151, 1, 0
        %v1168 = vcvt.s32.f32 %v1152
        %v1169 = vcvt.s32.f32 %v1153
        %v1170 = vcvt.s32.f32 %v1154
        %v1171 = vcvt.s32.f32 %v1155
        %v1172 = vcvt.s32.f32 %v1156
        %v1173 = vcvt.s32.f32 %v1157
        %v1174 = vcvt.s32.f32 %v1158
        %v1175 = vcvt.s32.f32 %v1159
        %v1176 = vcvt.s32.f32 %v1160
        %v1177 = vcvt.s32.f32 %v1161
        %v1178 = vcvt.s32.f32 %v1162
        %v1179 = vcvt.s32.f32 %v1163
        %v1180 = vcvt.s32.f32 %v1164
        %v1181 = vcvt.s32.f32 %v1165
        %v1182 = vcvt.s32.f32 %v1166
        %v1183 = vcvt.s32.f32 %v1167
        %v1184 = vadd.f32 %v1072, %v1168
        %v1185 = vadd.f32 %v1073, %v1169
        %v1186 = vadd.f32 %v1074, %v1170
        %v1187 = vadd.f32 %v1075, %v1171
        %v1188 = vadd.f32 %v1076, %v1172
        %v1189 = vadd.f32 %v1077, %v1173
        %v1190 = vadd.f32 %v1078, %v1174
        %v1191 = vadd.f32 %v1079, %v1175
        %v1192 = vadd.f32 %v1080, %v1176
        %v1193 = vadd.f32 %v1081, %v1177
        %v1194 = vadd.f32 %v1082, %v1178
        %v1195 = vadd.f32 %v1083, %v1179
        %v1196 = vadd.f32 %v1084, %v1180
        %v1197 = vadd.f32 %v1085, %v1181
        %v1198 = vadd.f32 %v1086, %v1182
        %v1199 = vadd.f32 %v1087, %v1183
        %v1200 = vpack.c.bf16 %v1185, %v1184
        %v1201 = vpack.c.bf16 %v1187, %v1186
        %v1202 = vpack.c.bf16 %v1189, %v1188
        %v1203 = vpack.c.bf16 %v1191, %v1190
        %v1204 = vpack.c.bf16 %v1193, %v1192
        %v1205 = vpack.c.bf16 %v1195, %v1194
        %v1206 = vpack.c.bf16 %v1197, %v1196
        %v1207 = vpack.c.bf16 %v1199, %v1198
        %v1208 = vld [vmem:[%s2] sm:$0xf]
        %v1209 = vld [vmem:[%s2 + $0x4] sm:$0xf]
        %v1210 = vld [vmem:[%s2 + $0x8] sm:$0xf]
        %v1211 = vld [vmem:[%s2 + $0xc] sm:$0xf]
        %v1212 = vld [vmem:[%s2 + $0x10] sm:$0xf]
        %v1213 = vld [vmem:[%s2 + $0x14] sm:$0xf]
        %v1214 = vld [vmem:[%s2 + $0x18] sm:$0xf]
        %v1215 = vld [vmem:[%s2 + $0x1c] sm:$0xf]
        %v1216 = vld [vmem:[%s2 + $0x20] sm:$0xf]
        %v1217 = vld [vmem:[%s2 + $0x24] sm:$0xf]
        %v1218 = vld [vmem:[%s2 + $0x28] sm:$0xf]
        %v1219 = vld [vmem:[%s2 + $0x2c] sm:$0xf]
        %v1220 = vld [vmem:[%s2 + $0x30] sm:$0xf]
        %v1221 = vld [vmem:[%s2 + $0x34] sm:$0xf]
        %v1222 = vld [vmem:[%s2 + $0x38] sm:$0xf]
        %v1223 = vld [vmem:[%s2 + $0x3c] sm:$0xf]
        %v1240 = vunpack.c.l.b16 %v1208
        %v1241 = vunpack.c.l.b16 %v1209
        %v1242 = vunpack.c.l.b16 %v1210
        %v1243 = vunpack.c.l.b16 %v1211
        %v1244 = vunpack.c.l.b16 %v1212
        %v1245 = vunpack.c.l.b16 %v1213
        %v1246 = vunpack.c.l.b16 %v1214
        %v1247 = vunpack.c.l.b16 %v1215
        %v1248 = vunpack.c.l.b16 %v1216
        %v1249 = vunpack.c.l.b16 %v1217
        %v1250 = vunpack.c.l.b16 %v1218
        %v1251 = vunpack.c.l.b16 %v1219
        %v1252 = vunpack.c.l.b16 %v1220
        %v1253 = vunpack.c.l.b16 %v1221
        %v1254 = vunpack.c.l.b16 %v1222
        %v1255 = vunpack.c.l.b16 %v1223
        %v1256 = vpack.c.b16 %v1241, %v1240
        %v1257 = vpack.c.b16 %v1243, %v1242
        %v1258 = vpack.c.b16 %v1245, %v1244
        %v1259 = vpack.c.b16 %v1247, %v1246
        %v1260 = vpack.c.b16 %v1249, %v1248
        %v1261 = vpack.c.b16 %v1251, %v1250
        %v1262 = vpack.c.b16 %v1253, %v1252
        %v1263 = vpack.c.b16 %v1255, %v1254
        %1272 = vmatprep.subr.bf16.mxu0 0
        %1273 = vmatpush1.bf16.msra.mxu0 %v1256
        %1274 = vmatprep.subr.bf16.mxu0 0
        %1275 = vmatpush1.bf16.msra.mxu0 %v1257
        %1276 = vmatprep.subr.bf16.mxu0 0
        %1277 = vmatpush1.bf16.msra.mxu0 %v1258
        %1278 = vmatprep.subr.bf16.mxu0 0
        %1279 = vmatpush1.bf16.msra.mxu0 %v1259
        %1280 = vmatprep.subr.bf16.mxu0 0
        %1281 = vmatpush1.bf16.msra.mxu0 %v1260
        %1282 = vmatprep.subr.bf16.mxu0 0
        %1283 = vmatpush1.bf16.msra.mxu0 %v1261
        %1284 = vmatprep.subr.bf16.mxu0 0
        %1285 = vmatpush1.bf16.msra.mxu0 %v1262
        %1286 = vmatprep.subr.bf16.mxu0 0
        %1287 = vmatpush1.bf16.msra.mxu0 %v1263
        %1288 = vmatprep.subr.bf16.mxu0 0
        %1289 = vmatpush1.bf16.msra.mxu0 0
        %1290 = vmatprep.subr.bf16.mxu0 0
        %1291 = vmatpush1.bf16.msra.mxu0 0
        %1292 = vmatprep.subr.bf16.mxu0 0
        %1293 = vmatpush1.bf16.msra.mxu0 0
        %1294 = vmatprep.subr.bf16.mxu0 0
        %1295 = vmatpush1.bf16.msra.mxu0 0
        %1296 = vmatprep.subr.bf16.mxu0 0
        %1297 = vmatpush1.bf16.msra.mxu0 0
        %1298 = vmatprep.subr.bf16.mxu0 0
        %1299 = vmatpush1.bf16.msra.mxu0 0
        %1300 = vmatprep.subr.bf16.mxu0 0
        %1301 = vmatpush1.bf16.msra.mxu0 0
        %1302 = vmatprep.subr.bf16.mxu0 0
        %1303 = vmatpush1.bf16.msra.mxu0 0
        %1304 = vmatprep.mubr.bf16.mxu0 0
        %1305 = vmatmul.mubr.bf16.gmra.mrb[0].mxu0 %v1200
        %v1306 = vpop.f32.mrb[0].mxu0
        %v1307 = vadd.f32 0.0, %v1306
        %v1308 = vpop.f32.mrb[0].mxu0
        %v1309 = vpop.f32.mrb[0].mxu0
        %v1310 = vadd.f32 0.0, %v1309
        %v1311 = vpop.f32.mrb[0].mxu0
        %1312 = vmatprep.mubr.bf16.mxu0 0
        %1313 = vmatmul.mubr.bf16.gmra.mrb[0].mxu0 %v1201
        %v1314 = vpop.f32.mrb[0].mxu0
        %v1315 = vadd.f32 0.0, %v1314
        %v1316 = vpop.f32.mrb[0].mxu0
        %v1317 = vpop.f32.mrb[0].mxu0
        %v1318 = vadd.f32 0.0, %v1317
        %v1319 = vpop.f32.mrb[0].mxu0
        %1320 = vmatprep.mubr.bf16.mxu0 0
        %1321 = vmatmul.mubr.bf16.gmra.mrb[0].mxu0 %v1202
        %v1322 = vpop.f32.mrb[0].mxu0
        %v1323 = vadd.f32 0.0, %v1322
        %v1324 = vpop.f32.mrb[0].mxu0
        %v1325 = vpop.f32.mrb[0].mxu0
        %v1326 = vadd.f32 0.0, %v1325
        %v1327 = vpop.f32.mrb[0].mxu0
        %1328 = vmatprep.mubr.bf16.mxu0 0
        %1329 = vmatmul.mubr.bf16.gmra.mrb[0].mxu0 %v1203
        %v1330 = vpop.f32.mrb[0].mxu0
        %v1331 = vadd.f32 0.0, %v1330
        %v1332 = vpop.f32.mrb[0].mxu0
        %v1333 = vpop.f32.mrb[0].mxu0
        %v1334 = vadd.f32 0.0, %v1333
        %v1335 = vpop.f32.mrb[0].mxu0
        %1336 = vmatprep.mubr.bf16.mxu0 0
        %1337 = vmatmul.mubr.bf16.gmra.mrb[0].mxu0 %v1204
        %v1338 = vpop.f32.mrb[0].mxu0
        %v1339 = vadd.f32 0.0, %v1338
        %v1340 = vpop.f32.mrb[0].mxu0
        %v1341 = vpop.f32.mrb[0].mxu0
        %v1342 = vadd.f32 0.0, %v1341
        %v1343 = vpop.f32.mrb[0].mxu0
        %1344 = vmatprep.mubr.bf16.mxu0 0
        %1345 = vmatmul.mubr.bf16.gmra.mrb[0].mxu0 %v1205
        %v1346 = vpop.f32.mrb[0].mxu0
        %v1347 = vadd.f32 0.0, %v1346
        %v1348 = vpop.f32.mrb[0].mxu0
        %v1349 = vpop.f32.mrb[0].mxu0
        %v1350 = vadd.f32 0.0, %v1349
        %v1351 = vpop.f32.mrb[0].mxu0
        %1352 = vmatprep.mubr.bf16.mxu0 0
        %1353 = vmatmul.mubr.bf16.gmra.mrb[0].mxu0 %v1206
        %v1354 = vpop.f32.mrb[0].mxu0
        %v1355 = vadd.f32 0.0, %v1354
        %v1356 = vpop.f32.mrb[0].mxu0
        %v1357 = vpop.f32.mrb[0].mxu0
        %v1358 = vadd.f32 0.0, %v1357
        %v1359 = vpop.f32.mrb[0].mxu0
        %1360 = vmatprep.mubr.bf16.mxu0 0
        %1361 = vmatmul.mubr.bf16.gmra.mrb[0].mxu0 %v1207
        %v1362 = vpop.f32.mrb[0].mxu0
        %v1363 = vadd.f32 0.0, %v1362
        %v1364 = vpop.f32.mrb[0].mxu0
        %v1365 = vpop.f32.mrb[0].mxu0
        %v1366 = vadd.f32 0.0, %v1365
        %v1367 = vpop.f32.mrb[0].mxu0
        %1368 = vdwg.mxu0
        %v1369 = vmul.f32 %v1307, 0.125
        %v1370 = vmul.f32 %v1310, 0.125
        %v1371 = vmul.f32 %v1315, 0.125
        %v1372 = vmul.f32 %v1318, 0.125
        %v1373 = vmul.f32 %v1323, 0.125
        %v1374 = vmul.f32 %v1326, 0.125
        %v1375 = vmul.f32 %v1331, 0.125
        %v1376 = vmul.f32 %v1334, 0.125
        %v1377 = vmul.f32 %v1339, 0.125
        %v1378 = vmul.f32 %v1342, 0.125
        %v1379 = vmul.f32 %v1347, 0.125
        %v1380 = vmul.f32 %v1350, 0.125
        %v1381 = vmul.f32 %v1355, 0.125
        %v1382 = vmul.f32 %v1358, 0.125
        %v1383 = vmul.f32 %v1363, 0.125
        %v1384 = vmul.f32 %v1366, 0.125
        %v1385 = vpack.c.bf16 %v1370, %v1369
        %v1386 = vpack.c.bf16 %v1372, %v1371
        %v1387 = vpack.c.bf16 %v1374, %v1373
        %v1388 = vpack.c.bf16 %v1376, %v1375
        %v1389 = vpack.c.bf16 %v1378, %v1377
        %v1390 = vpack.c.bf16 %v1380, %v1379
        %v1391 = vpack.c.bf16 %v1382, %v1381
        %v1392 = vpack.c.bf16 %v1384, %v1383
        %v1393 = vld [vmem:[%s3] sm:$0xf]
        %v1394 = vld [vmem:[%s3 + $0x4] sm:$0xf]
        %v1395 = vld [vmem:[%s3 + $0x8] sm:$0xf]
        %v1396 = vld [vmem:[%s3 + $0xc] sm:$0xf]
        %v1397 = vld [vmem:[%s3 + $0x10] sm:$0xf]
        %v1398 = vld [vmem:[%s3 + $0x14] sm:$0xf]
        %v1399 = vld [vmem:[%s3 + $0x18] sm:$0xf]
        %v1400 = vld [vmem:[%s3 + $0x1c] sm:$0xf]
        %v1401 = vld [vmem:[%s3 + $0x20] sm:$0xf]
        %v1402 = vld [vmem:[%s3 + $0x24] sm:$0xf]
        %v1403 = vld [vmem:[%s3 + $0x28] sm:$0xf]
        %v1404 = vld [vmem:[%s3 + $0x2c] sm:$0xf]
        %v1405 = vld [vmem:[%s3 + $0x30] sm:$0xf]
        %v1406 = vld [vmem:[%s3 + $0x34] sm:$0xf]
        %v1407 = vld [vmem:[%s3 + $0x38] sm:$0xf]
        %v1408 = vld [vmem:[%s3 + $0x3c] sm:$0xf]
        %v1409 = vld [vmem:[%s4] sm:$0x1]
        %v1411 = vlaneseq
        %v1412 = vshrl.u32 %v1411, 7
        %v1413 = vsub.s32 0, %v1412
        %v1414 = vrot.slane %v1409, %v1413
        %v1432 = vunpack.c.l.b16 %v1393
        %v1433 = vunpack.c.l.b16 %v1394
        %v1434 = vunpack.c.l.b16 %v1395
        %v1435 = vunpack.c.l.b16 %v1396
        %v1436 = vunpack.c.l.b16 %v1397
        %v1437 = vunpack.c.l.b16 %v1398
        %v1438 = vunpack.c.l.b16 %v1399
        %v1439 = vunpack.c.l.b16 %v1400
        %v1440 = vunpack.c.l.b16 %v1401
        %v1441 = vunpack.c.l.b16 %v1402
        %v1442 = vunpack.c.l.b16 %v1403
        %v1443 = vunpack.c.l.b16 %v1404
        %v1444 = vunpack.c.l.b16 %v1405
        %v1445 = vunpack.c.l.b16 %v1406
        %v1446 = vunpack.c.l.b16 %v1407
        %v1447 = vunpack.c.l.b16 %v1408
        %v1448 = vpack.c.b16 %v1433, %v1432
        %v1449 = vpack.c.b16 %v1435, %v1434
        %v1450 = vpack.c.b16 %v1437, %v1436
        %v1451 = vpack.c.b16 %v1439, %v1438
        %v1452 = vpack.c.b16 %v1441, %v1440
        %v1453 = vpack.c.b16 %v1443, %v1442
        %v1454 = vpack.c.b16 %v1445, %v1444
        %v1455 = vpack.c.b16 %v1447, %v1446
        %1464 = vmatprep.subr.bf16.mxu0 0
        %1465 = vmatpush1.bf16.msra.mxu0 %v1448
        %1466 = vmatprep.subr.bf16.mxu0 0
        %1467 = vmatpush1.bf16.msra.mxu0 %v1449
        %1468 = vmatprep.subr.bf16.mxu0 0
        %1469 = vmatpush1.bf16.msra.mxu0 %v1450
        %1470 = vmatprep.subr.bf16.mxu0 0
        %1471 = vmatpush1.bf16.msra.mxu0 %v1451
        %1472 = vmatprep.subr.bf16.mxu0 0
        %1473 = vmatpush1.bf16.msra.mxu0 %v1452
        %1474 = vmatprep.subr.bf16.mxu0 0
        %1475 = vmatpush1.bf16.msra.mxu0 %v1453
        %1476 = vmatprep.subr.bf16.mxu0 0
        %1477 = vmatpush1.bf16.msra.mxu0 %v1454
        %1478 = vmatprep.subr.bf16.mxu0 0
        %1479 = vmatpush1.bf16.msra.mxu0 %v1455
        %1480 = vmatprep.subr.bf16.mxu0 0
        %1481 = vmatpush1.bf16.msra.mxu0 0
        %1482 = vmatprep.subr.bf16.mxu0 0
        %1483 = vmatpush1.bf16.msra.mxu0 0
        %1484 = vmatprep.subr.bf16.mxu0 0
        %1485 = vmatpush1.bf16.msra.mxu0 0
        %1486 = vmatprep.subr.bf16.mxu0 0
        %1487 = vmatpush1.bf16.msra.mxu0 0
        %1488 = vmatprep.subr.bf16.mxu0 0
        %1489 = vmatpush1.bf16.msra.mxu0 0
        %1490 = vmatprep.subr.bf16.mxu0 0
        %1491 = vmatpush1.bf16.msra.mxu0 0
        %1492 = vmatprep.subr.bf16.mxu0 0
        %1493 = vmatpush1.bf16.msra.mxu0 0
        %1494 = vmatprep.subr.bf16.mxu0 0
        %1495 = vmatpush1.bf16.msra.mxu0 0
        %1496 = vmatprep.mubr.bf16.mxu0 0
        %1497 = vmatmul.mubr.bf16.gmra.mrb[0].mxu0 %v1385
        %v1498 = vpop.f32.mrb[0].mxu0
        %v1499 = vadd.f32 %v1414, %v1498
        %v1500 = vpop.f32.mrb[0].mxu0
        %v1501 = vpop.f32.mrb[0].mxu0
        %v1502 = vadd.f32 %v1414, %v1501
        %v1503 = vpop.f32.mrb[0].mxu0
        %1504 = vmatprep.mubr.bf16.mxu0 0
        %1505 = vmatmul.mubr.bf16.gmra.mrb[0].mxu0 %v1386
        %v1506 = vpop.f32.mrb[0].mxu0
        %v1507 = vadd.f32 %v1414, %v1506
        %v1508 = vpop.f32.mrb[0].mxu0
        %v1509 = vpop.f32.mrb[0].mxu0
        %v1510 = vadd.f32 %v1414, %v1509
        %v1511 = vpop.f32.mrb[0].mxu0
        %1512 = vmatprep.mubr.bf16.mxu0 0
        %1513 = vmatmul.mubr.bf16.gmra.mrb[0].mxu0 %v1387
        %v1514 = vpop.f32.mrb[0].mxu0
        %v1515 = vadd.f32 %v1414, %v1514
        %v1516 = vpop.f32.mrb[0].mxu0
        %v1517 = vpop.f32.mrb[0].mxu0
        %v1518 = vadd.f32 %v1414, %v1517
        %v1519 = vpop.f32.mrb[0].mxu0
        %1520 = vmatprep.mubr.bf16.mxu0 0
        %1521 = vmatmul.mubr.bf16.gmra.mrb[0].mxu0 %v1388
        %v1522 = vpop.f32.mrb[0].mxu0
        %v1523 = vadd.f32 %v1414, %v1522
        %v1524 = vpop.f32.mrb[0].mxu0
        %v1525 = vpop.f32.mrb[0].mxu0
        %v1526 = vadd.f32 %v1414, %v1525
        %v1527 = vpop.f32.mrb[0].mxu0
        %1528 = vmatprep.mubr.bf16.mxu0 0
        %1529 = vmatmul.mubr.bf16.gmra.mrb[0].mxu0 %v1389
        %v1530 = vpop.f32.mrb[0].mxu0
        %v1531 = vadd.f32 %v1414, %v1530
        %v1532 = vpop.f32.mrb[0].mxu0
        %v1533 = vpop.f32.mrb[0].mxu0
        %v1534 = vadd.f32 %v1414, %v1533
        %v1535 = vpop.f32.mrb[0].mxu0
        %1536 = vmatprep.mubr.bf16.mxu0 0
        %1537 = vmatmul.mubr.bf16.gmra.mrb[0].mxu0 %v1390
        %v1538 = vpop.f32.mrb[0].mxu0
        %v1539 = vadd.f32 %v1414, %v1538
        %v1540 = vpop.f32.mrb[0].mxu0
        %v1541 = vpop.f32.mrb[0].mxu0
        %v1542 = vadd.f32 %v1414, %v1541
        %v1543 = vpop.f32.mrb[0].mxu0
        %1544 = vmatprep.mubr.bf16.mxu0 0
        %1545 = vmatmul.mubr.bf16.gmra.mrb[0].mxu0 %v1391
        %v1546 = vpop.f32.mrb[0].mxu0
        %v1547 = vadd.f32 %v1414, %v1546
        %v1548 = vpop.f32.mrb[0].mxu0
        %v1549 = vpop.f32.mrb[0].mxu0
        %v1550 = vadd.f32 %v1414, %v1549
        %v1551 = vpop.f32.mrb[0].mxu0
        %1552 = vmatprep.mubr.bf16.mxu0 0
        %1553 = vmatmul.mubr.bf16.gmra.mrb[0].mxu0 %v1392
        %v1554 = vpop.f32.mrb[0].mxu0
        %v1555 = vadd.f32 %v1414, %v1554
        %v1556 = vpop.f32.mrb[0].mxu0
        %v1557 = vpop.f32.mrb[0].mxu0
        %v1558 = vadd.f32 %v1414, %v1557
        %v1559 = vpop.f32.mrb[0].mxu0
        %1560 = vdwg.mxu0
        %1561 = vmax.xlane.f32.xlu0 %v1499
        %v1562 = vpop.xlane.xlu0 %1561
        %1563 = vmax.xlane.f32.xlu0 %v1502
        %v1564 = vpop.xlane.xlu0 %1563
        %1565 = vmax.xlane.f32.xlu0 %v1507
        %v1566 = vpop.xlane.xlu0 %1565
        %1567 = vmax.xlane.f32.xlu0 %v1510
        %v1568 = vpop.xlane.xlu0 %1567
        %1569 = vmax.xlane.f32.xlu0 %v1515
        %v1570 = vpop.xlane.xlu0 %1569
        %1571 = vmax.xlane.f32.xlu0 %v1518
        %v1572 = vpop.xlane.xlu0 %1571
        %1573 = vmax.xlane.f32.xlu0 %v1523
        %v1574 = vpop.xlane.xlu0 %1573
        %1575 = vmax.xlane.f32.xlu0 %v1526
        %v1576 = vpop.xlane.xlu0 %1575
        %1577 = vmax.xlane.f32.xlu0 %v1531
        %v1578 = vpop.xlane.xlu0 %1577
        %1579 = vmax.xlane.f32.xlu0 %v1534
        %v1580 = vpop.xlane.xlu0 %1579
        %1581 = vmax.xlane.f32.xlu0 %v1539
        %v1582 = vpop.xlane.xlu0 %1581
        %1583 = vmax.xlane.f32.xlu0 %v1542
        %v1584 = vpop.xlane.xlu0 %1583
        %1585 = vmax.xlane.f32.xlu0 %v1547
        %v1586 = vpop.xlane.xlu0 %1585
        %1587 = vmax.xlane.f32.xlu0 %v1550
        %v1588 = vpop.xlane.xlu0 %1587
        %1589 = vmax.xlane.f32.xlu0 %v1555
        %v1590 = vpop.xlane.xlu0 %1589
        %1591 = vmax.xlane.f32.xlu0 %v1558
        %v1592 = vpop.xlane.xlu0 %1591
        %v1593 = vsub.f32 %v1499, %v1562
        %v1594 = vsub.f32 %v1502, %v1564
        %v1595 = vsub.f32 %v1507, %v1566
        %v1596 = vsub.f32 %v1510, %v1568
        %v1597 = vsub.f32 %v1515, %v1570
        %v1598 = vsub.f32 %v1518, %v1572
        %v1599 = vsub.f32 %v1523, %v1574
        %v1600 = vsub.f32 %v1526, %v1576
        %v1601 = vsub.f32 %v1531, %v1578
        %v1602 = vsub.f32 %v1534, %v1580
        %v1603 = vsub.f32 %v1539, %v1582
        %v1604 = vsub.f32 %v1542, %v1584
        %v1605 = vsub.f32 %v1547, %v1586
        %v1606 = vsub.f32 %v1550, %v1588
        %v1607 = vsub.f32 %v1555, %v1590
        %v1608 = vsub.f32 %v1558, %v1592
        %v1609 = vmul.f32 %v1593, 1.442695
        %v1610 = vpow.pop %v1609
        %v1611 = vmul.f32 %v1594, 1.442695
        %v1612 = vpow.pop %v1611
        %v1613 = vmul.f32 %v1595, 1.442695
        %v1614 = vpow.pop %v1613
        %v1615 = vmul.f32 %v1596, 1.442695
        %v1616 = vpow.pop %v1615
        %v1617 = vmul.f32 %v1597, 1.442695
        %v1618 = vpow.pop %v1617
        %v1619 = vmul.f32 %v1598, 1.442695
        %v1620 = vpow.pop %v1619
        %v1621 = vmul.f32 %v1599, 1.442695
        %v1622 = vpow.pop %v1621
        %v1623 = vmul.f32 %v1600, 1.442695
        %v1624 = vpow.pop %v1623
        %v1625 = vmul.f32 %v1601, 1.442695
        %v1626 = vpow.pop %v1625
        %v1627 = vmul.f32 %v1602, 1.442695
        %v1628 = vpow.pop %v1627
        %v1629 = vmul.f32 %v1603, 1.442695
        %v1630 = vpow.pop %v1629
        %v1631 = vmul.f32 %v1604, 1.442695
        %v1632 = vpow.pop %v1631
        %v1633 = vmul.f32 %v1605, 1.442695
        %v1634 = vpow.pop %v1633
        %v1635 = vmul.f32 %v1606, 1.442695
        %v1636 = vpow.pop %v1635
        %v1637 = vmul.f32 %v1607, 1.442695
        %v1638 = vpow.pop %v1637
        %v1639 = vmul.f32 %v1608, 1.442695
        %v1640 = vpow.pop %v1639
        %1641 = vadd.xlane.f32.xlu0 %v1610
        %v1642 = vpop.xlane.xlu0 %1641
        %1643 = vadd.xlane.f32.xlu0 %v1612
        %v1644 = vpop.xlane.xlu0 %1643
        %1645 = vadd.xlane.f32.xlu0 %v1614
        %v1646 = vpop.xlane.xlu0 %1645
        %1647 = vadd.xlane.f32.xlu0 %v1616
        %v1648 = vpop.xlane.xlu0 %1647
        %1649 = vadd.xlane.f32.xlu0 %v1618
        %v1650 = vpop.xlane.xlu0 %1649
        %1651 = vadd.xlane.f32.xlu0 %v1620
        %v1652 = vpop.xlane.xlu0 %1651
        %1653 = vadd.xlane.f32.xlu0 %v1622
        %v1654 = vpop.xlane.xlu0 %1653
        %1655 = vadd.xlane.f32.xlu0 %v1624
        %v1656 = vpop.xlane.xlu0 %1655
        %1657 = vadd.xlane.f32.xlu0 %v1626
        %v1658 = vpop.xlane.xlu0 %1657
        %1659 = vadd.xlane.f32.xlu0 %v1628
        %v1660 = vpop.xlane.xlu0 %1659
        %1661 = vadd.xlane.f32.xlu0 %v1630
        %v1662 = vpop.xlane.xlu0 %1661
        %1663 = vadd.xlane.f32.xlu0 %v1632
        %v1664 = vpop.xlane.xlu0 %1663
        %1665 = vadd.xlane.f32.xlu0 %v1634
        %v1666 = vpop.xlane.xlu0 %1665
        %1667 = vadd.xlane.f32.xlu0 %v1636
        %v1668 = vpop.xlane.xlu0 %1667
        %1669 = vadd.xlane.f32.xlu0 %v1638
        %v1670 = vpop.xlane.xlu0 %1669
        %1671 = vadd.xlane.f32.xlu0 %v1640
        %v1672 = vpop.xlane.xlu0 %1671
        %v1673 = vlog2.pop %v1642
        %v1674 = vmul.f32 %v1673, 0.6931472
        %v1675 = vlog2.pop %v1644
        %v1676 = vmul.f32 %v1675, 0.6931472
        %v1677 = vlog2.pop %v1646
        %v1678 = vmul.f32 %v1677, 0.6931472
        %v1679 = vlog2.pop %v1648
        %v1680 = vmul.f32 %v1679, 0.6931472
        %v1681 = vlog2.pop %v1650
        %v1682 = vmul.f32 %v1681, 0.6931472
        %v1683 = vlog2.pop %v1652
        %v1684 = vmul.f32 %v1683, 0.6931472
        %v1685 = vlog2.pop %v1654
        %v1686 = vmul.f32 %v1685, 0.6931472
        %v1687 = vlog2.pop %v1656
        %v1688 = vmul.f32 %v1687, 0.6931472
        %v1689 = vlog2.pop %v1658
        %v1690 = vmul.f32 %v1689, 0.6931472
        %v1691 = vlog2.pop %v1660
        %v1692 = vmul.f32 %v1691, 0.6931472
        %v1693 = vlog2.pop %v1662
        %v1694 = vmul.f32 %v1693, 0.6931472
        %v1695 = vlog2.pop %v1664
        %v1696 = vmul.f32 %v1695, 0.6931472
        %v1697 = vlog2.pop %v1666
        %v1698 = vmul.f32 %v1697, 0.6931472
        %v1699 = vlog2.pop %v1668
        %v1700 = vmul.f32 %v1699, 0.6931472
        %v1701 = vlog2.pop %v1670
        %v1702 = vmul.f32 %v1701, 0.6931472
        %v1703 = vlog2.pop %v1672
        %v1704 = vmul.f32 %v1703, 0.6931472
        %v1705 = vld [vmem:[%s283] sm:$0xff]
        %v1706 = vld [vmem:[%s283 + $0x8] sm:$0xff]
        %v1707 = vld [vmem:[%s283 + $0x10] sm:$0xff]
        %v1708 = vld [vmem:[%s283 + $0x18] sm:$0xff]
        %v1709 = vld [vmem:[%s283 + $0x20] sm:$0xff]
        %v1710 = vld [vmem:[%s283 + $0x28] sm:$0xff]
        %v1711 = vld [vmem:[%s283 + $0x30] sm:$0xff]
        %v1712 = vld [vmem:[%s283 + $0x38] sm:$0xff]
        %v1713 = vld [vmem:[%s283 + $0x40] sm:$0xff]
        %v1714 = vld [vmem:[%s283 + $0x48] sm:$0xff]
        %v1715 = vld [vmem:[%s283 + $0x50] sm:$0xff]
        %v1716 = vld [vmem:[%s283 + $0x58] sm:$0xff]
        %v1717 = vld [vmem:[%s283 + $0x60] sm:$0xff]
        %v1718 = vld [vmem:[%s283 + $0x68] sm:$0xff]
        %v1719 = vld [vmem:[%s283 + $0x70] sm:$0xff]
        %v1720 = vld [vmem:[%s283 + $0x78] sm:$0xff]
        %1721 = vset.pattern.permute.xlu0 0
        %1722 = vperm.xlu0 %1721, %v1705
        %v1723 = vpop.permute.xlu0 %1722
        %1724 = vset.pattern.permute.xlu0 0
        %1725 = vperm.xlu0 %1724, %v1706
        %v1726 = vpop.permute.xlu0 %1725
        %1727 = vset.pattern.permute.xlu0 0
        %1728 = vperm.xlu0 %1727, %v1707
        %v1729 = vpop.permute.xlu0 %1728
        %1730 = vset.pattern.permute.xlu0 0
        %1731 = vperm.xlu0 %1730, %v1708
        %v1732 = vpop.permute.xlu0 %1731
        %1733 = vset.pattern.permute.xlu0 0
        %1734 = vperm.xlu0 %1733, %v1709
        %v1735 = vpop.permute.xlu0 %1734
        %1736 = vset.pattern.permute.xlu0 0
        %1737 = vperm.xlu0 %1736, %v1710
        %v1738 = vpop.permute.xlu0 %1737
        %1739 = vset.pattern.permute.xlu0 0
        %1740 = vperm.xlu0 %1739, %v1711
        %v1741 = vpop.permute.xlu0 %1740
        %1742 = vset.pattern.permute.xlu0 0
        %1743 = vperm.xlu0 %1742, %v1712
        %v1744 = vpop.permute.xlu0 %1743
        %1745 = vset.pattern.permute.xlu0 0
        %1746 = vperm.xlu0 %1745, %v1713
        %v1747 = vpop.permute.xlu0 %1746
        %1748 = vset.pattern.permute.xlu0 0
        %1749 = vperm.xlu0 %1748, %v1714
        %v1750 = vpop.permute.xlu0 %1749
        %1751 = vset.pattern.permute.xlu0 0
        %1752 = vperm.xlu0 %1751, %v1715
        %v1753 = vpop.permute.xlu0 %1752
        %1754 = vset.pattern.permute.xlu0 0
        %1755 = vperm.xlu0 %1754, %v1716
        %v1756 = vpop.permute.xlu0 %1755
        %1757 = vset.pattern.permute.xlu0 0
        %1758 = vperm.xlu0 %1757, %v1717
        %v1759 = vpop.permute.xlu0 %1758
        %1760 = vset.pattern.permute.xlu0 0
        %1761 = vperm.xlu0 %1760, %v1718
        %v1762 = vpop.permute.xlu0 %1761
        %1763 = vset.pattern.permute.xlu0 0
        %1764 = vperm.xlu0 %1763, %v1719
        %v1765 = vpop.permute.xlu0 %1764
        %1766 = vset.pattern.permute.xlu0 0
        %1767 = vperm.xlu0 %1766, %v1720
        %v1768 = vpop.permute.xlu0 %1767
        %vm1769 = vcmp.eq.s32.totalorder %v303, %v1723
        %vm1770 = vcmp.eq.s32.totalorder %v303, %v1726
        %vm1771 = vcmp.eq.s32.totalorder %v303, %v1729
        %vm1772 = vcmp.eq.s32.totalorder %v303, %v1732
        %vm1773 = vcmp.eq.s32.totalorder %v303, %v1735
        %vm1774 = vcmp.eq.s32.totalorder %v303, %v1738
        %vm1775 = vcmp.eq.s32.totalorder %v303, %v1741
        %vm1776 = vcmp.eq.s32.totalorder %v303, %v1744
        %vm1777 = vcmp.eq.s32.totalorder %v303, %v1747
        %vm1778 = vcmp.eq.s32.totalorder %v303, %v1750
        %vm1779 = vcmp.eq.s32.totalorder %v303, %v1753
        %vm1780 = vcmp.eq.s32.totalorder %v303, %v1756
        %vm1781 = vcmp.eq.s32.totalorder %v303, %v1759
        %vm1782 = vcmp.eq.s32.totalorder %v303, %v1762
        %vm1783 = vcmp.eq.s32.totalorder %v303, %v1765
        %vm1784 = vcmp.eq.s32.totalorder %v303, %v1768
        %v1785 = vsel %vm1769, %v1593, 0.0
        %v1786 = vsel %vm1770, %v1594, 0.0
        %v1787 = vsel %vm1771, %v1595, 0.0
        %v1788 = vsel %vm1772, %v1596, 0.0
        %v1789 = vsel %vm1773, %v1597, 0.0
        %v1790 = vsel %vm1774, %v1598, 0.0
        %v1791 = vsel %vm1775, %v1599, 0.0
        %v1792 = vsel %vm1776, %v1600, 0.0
        %v1793 = vsel %vm1777, %v1601, 0.0
        %v1794 = vsel %vm1778, %v1602, 0.0
        %v1795 = vsel %vm1779, %v1603, 0.0
        %v1796 = vsel %vm1780, %v1604, 0.0
        %v1797 = vsel %vm1781, %v1605, 0.0
        %v1798 = vsel %vm1782, %v1606, 0.0
        %v1799 = vsel %vm1783, %v1607, 0.0
        %v1800 = vsel %vm1784, %v1608, 0.0
        %1801 = vadd.xlane.f32.xlu0 %v1785
        %v1802 = vpop.xlane.xlu0 %1801
        %1803 = vadd.xlane.f32.xlu0 %v1786
        %v1804 = vpop.xlane.xlu0 %1803
        %1805 = vadd.xlane.f32.xlu0 %v1787
        %v1806 = vpop.xlane.xlu0 %1805
        %1807 = vadd.xlane.f32.xlu0 %v1788
        %v1808 = vpop.xlane.xlu0 %1807
        %1809 = vadd.xlane.f32.xlu0 %v1789
        %v1810 = vpop.xlane.xlu0 %1809
        %1811 = vadd.xlane.f32.xlu0 %v1790
        %v1812 = vpop.xlane.xlu0 %1811
        %1813 = vadd.xlane.f32.xlu0 %v1791
        %v1814 = vpop.xlane.xlu0 %1813
        %1815 = vadd.xlane.f32.xlu0 %v1792
        %v1816 = vpop.xlane.xlu0 %1815
        %1817 = vadd.xlane.f32.xlu0 %v1793
        %v1818 = vpop.xlane.xlu0 %1817
        %1819 = vadd.xlane.f32.xlu0 %v1794
        %v1820 = vpop.xlane.xlu0 %1819
        %1821 = vadd.xlane.f32.xlu0 %v1795
        %v1822 = vpop.xlane.xlu0 %1821
        %1823 = vadd.xlane.f32.xlu0 %v1796
        %v1824 = vpop.xlane.xlu0 %1823
        %1825 = vadd.xlane.f32.xlu0 %v1797
        %v1826 = vpop.xlane.xlu0 %1825
        %1827 = vadd.xlane.f32.xlu0 %v1798
        %v1828 = vpop.xlane.xlu0 %1827
        %1829 = vadd.xlane.f32.xlu0 %v1799
        %v1830 = vpop.xlane.xlu0 %1829
        %1831 = vadd.xlane.f32.xlu0 %v1800
        %v1832 = vpop.xlane.xlu0 %1831
        %s1833 = smul.u32 %s24, 128
        %v1834 = vlaneseq
        %v1835 = vshrl.u32 %v1834, 7
        %v1836 = vadd.s32 %v1835, 8
        %v1837 = vadd.s32 %v1835, 16
        %v1838 = vadd.s32 %v1835, 24
        %v1839 = vadd.s32 %v1835, 32
        %v1840 = vadd.s32 %v1835, 40
        %v1841 = vadd.s32 %v1835, 48
        %v1842 = vadd.s32 %v1835, 56
        %v1843 = vadd.s32 %v1835, 64
        %v1844 = vadd.s32 %v1835, 72
        %v1845 = vadd.s32 %v1835, 80
        %v1846 = vadd.s32 %v1835, 88
        %v1847 = vadd.s32 %v1835, 96
        %v1848 = vadd.s32 %v1835, 104
        %v1849 = vadd.s32 %v1835, 112
        %v1850 = vadd.s32 %v1835, 120
        %v1851 = vstv %s1833
        %v1852 = vadd.s32 %v1851, %v1835
        %v1853 = vadd.s32 %v1851, %v1836
        %v1854 = vadd.s32 %v1851, %v1837
        %v1855 = vadd.s32 %v1851, %v1838
        %v1856 = vadd.s32 %v1851, %v1839
        %v1857 = vadd.s32 %v1851, %v1840
        %v1858 = vadd.s32 %v1851, %v1841
        %v1859 = vadd.s32 %v1851, %v1842
        %v1860 = vadd.s32 %v1851, %v1843
        %v1861 = vadd.s32 %v1851, %v1844
        %v1862 = vadd.s32 %v1851, %v1845
        %v1863 = vadd.s32 %v1851, %v1846
        %v1864 = vadd.s32 %v1851, %v1847
        %v1865 = vadd.s32 %v1851, %v1848
        %v1866 = vadd.s32 %v1851, %v1849
        %v1867 = vadd.s32 %v1851, %v1850
        %vm1868 = vcmp.lt.s32.totalorder %v1852, 200
        %vm1869 = vcmp.lt.s32.totalorder %v1853, 200
        %vm1870 = vcmp.lt.s32.totalorder %v1854, 200
        %vm1871 = vcmp.lt.s32.totalorder %v1855, 200
        %vm1872 = vcmp.lt.s32.totalorder %v1856, 200
        %vm1873 = vcmp.lt.s32.totalorder %v1857, 200
        %vm1874 = vcmp.lt.s32.totalorder %v1858, 200
        %vm1875 = vcmp.lt.s32.totalorder %v1859, 200
        %vm1876 = vcmp.lt.s32.totalorder %v1860, 200
        %vm1877 = vcmp.lt.s32.totalorder %v1861, 200
        %vm1878 = vcmp.lt.s32.totalorder %v1862, 200
        %vm1879 = vcmp.lt.s32.totalorder %v1863, 200
        %vm1880 = vcmp.lt.s32.totalorder %v1864, 200
        %vm1881 = vcmp.lt.s32.totalorder %v1865, 200
        %vm1882 = vcmp.lt.s32.totalorder %v1866, 200
        %vm1883 = vcmp.lt.s32.totalorder %v1867, 200
        %v1884 = vsub.f32 %v1802, %v1674
        %v1885 = vsub.f32 %v1804, %v1676
        %v1886 = vsub.f32 %v1806, %v1678
        %v1887 = vsub.f32 %v1808, %v1680
        %v1888 = vsub.f32 %v1810, %v1682
        %v1889 = vsub.f32 %v1812, %v1684
        %v1890 = vsub.f32 %v1814, %v1686
        %v1891 = vsub.f32 %v1816, %v1688
        %v1892 = vsub.f32 %v1818, %v1690
        %v1893 = vsub.f32 %v1820, %v1692
        %v1894 = vsub.f32 %v1822, %v1694
        %v1895 = vsub.f32 %v1824, %v1696
        %v1896 = vsub.f32 %v1826, %v1698
        %v1897 = vsub.f32 %v1828, %v1700
        %v1898 = vsub.f32 %v1830, %v1702
        %v1899 = vsub.f32 %v1832, %v1704
        %v1900 = vsel %vm1868, %v1884, 0.0
        %v1901 = vsel %vm1869, %v1885, 0.0
        %v1902 = vsel %vm1870, %v1886, 0.0
        %v1903 = vsel %vm1871, %v1887, 0.0
        %v1904 = vsel %vm1872, %v1888, 0.0
        %v1905 = vsel %vm1873, %v1889, 0.0
        %v1906 = vsel %vm1874, %v1890, 0.0
        %v1907 = vsel %vm1875, %v1891, 0.0
        %v1908 = vsel %vm1876, %v1892, 0.0
        %v1909 = vsel %vm1877, %v1893, 0.0
        %v1910 = vsel %vm1878, %v1894, 0.0
        %v1911 = vsel %vm1879, %v1895, 0.0
        %v1912 = vsel %vm1880, %v1896, 0.0
        %v1913 = vsel %vm1881, %v1897, 0.0
        %v1914 = vsel %vm1882, %v1898, 0.0
        %v1915 = vsel %vm1883, %v1899, 0.0
        %vm1916 = vcmask 7168
        %v1917 = vsel %vm1916, %v1900, 0.0
        %v1918 = vsel %vm1916, %v1901, 0.0
        %v1919 = vadd.f32 %v1917, %v1918
        %v1920 = vsel %vm1916, %v1902, 0.0
        %v1921 = vadd.f32 %v1919, %v1920
        %v1922 = vsel %vm1916, %v1903, 0.0
        %v1923 = vadd.f32 %v1921, %v1922
        %v1924 = vsel %vm1916, %v1904, 0.0
        %v1925 = vadd.f32 %v1923, %v1924
        %v1926 = vsel %vm1916, %v1905, 0.0
        %v1927 = vadd.f32 %v1925, %v1926
        %v1928 = vsel %vm1916, %v1906, 0.0
        %v1929 = vadd.f32 %v1927, %v1928
        %v1930 = vsel %vm1916, %v1907, 0.0
        %v1931 = vadd.f32 %v1929, %v1930
        %v1932 = vsel %vm1916, %v1908, 0.0
        %v1933 = vadd.f32 %v1931, %v1932
        %v1934 = vsel %vm1916, %v1909, 0.0
        %v1935 = vadd.f32 %v1933, %v1934
        %v1936 = vsel %vm1916, %v1910, 0.0
        %v1937 = vadd.f32 %v1935, %v1936
        %v1938 = vsel %vm1916, %v1911, 0.0
        %v1939 = vadd.f32 %v1937, %v1938
        %v1940 = vsel %vm1916, %v1912, 0.0
        %v1941 = vadd.f32 %v1939, %v1940
        %v1942 = vsel %vm1916, %v1913, 0.0
        %v1943 = vadd.f32 %v1941, %v1942
        %v1944 = vsel %vm1916, %v1914, 0.0
        %v1945 = vadd.f32 %v1943, %v1944
        %v1946 = vsel %vm1916, %v1915, 0.0
        %v1947 = vadd.f32 %v1945, %v1946
        %1948 = vadd.xlane.f32.xlu0 %v1947
        %v1949 = vpop.xlane.xlu0 %1948
        %v1950 = vrot.slane %v1949, 4
        %v1951 = vadd.f32 %v1949, %v1950
        %v1952 = vrot.slane %v1951, 2
        %v1953 = vadd.f32 %v1951, %v1952
        %v1954 = vrot.slane %v1953, 1
        %v1955 = vadd.f32 %v1953, %v1954
        %s1956 = vtos %v1955
        %vm1957 = vcmp.eq.f32.partialorder %v1499, %v1562
        %vm1958 = vcmp.eq.f32.partialorder %v1502, %v1564
        %vm1959 = vcmp.eq.f32.partialorder %v1507, %v1566
        %vm1960 = vcmp.eq.f32.partialorder %v1510, %v1568
        %vm1961 = vcmp.eq.f32.partialorder %v1515, %v1570
        %vm1962 = vcmp.eq.f32.partialorder %v1518, %v1572
        %vm1963 = vcmp.eq.f32.partialorder %v1523, %v1574
        %vm1964 = vcmp.eq.f32.partialorder %v1526, %v1576
        %vm1965 = vcmp.eq.f32.partialorder %v1531, %v1578
        %vm1966 = vcmp.eq.f32.partialorder %v1534, %v1580
        %vm1967 = vcmp.eq.f32.partialorder %v1539, %v1582
        %vm1968 = vcmp.eq.f32.partialorder %v1542, %v1584
        %vm1969 = vcmp.eq.f32.partialorder %v1547, %v1586
        %vm1970 = vcmp.eq.f32.partialorder %v1550, %v1588
        %vm1971 = vcmp.eq.f32.partialorder %v1555, %v1590
        %vm1972 = vcmp.eq.f32.partialorder %v1558, %v1592
        %v1973 = vsel %vm1957, %v303, 128
        %v1974 = vsel %vm1958, %v303, 128
        %v1975 = vsel %vm1959, %v303, 128
        %v1976 = vsel %vm1960, %v303, 128
        %v1977 = vsel %vm1961, %v303, 128
        %v1978 = vsel %vm1962, %v303, 128
        %v1979 = vsel %vm1963, %v303, 128
        %v1980 = vsel %vm1964, %v303, 128
        %v1981 = vsel %vm1965, %v303, 128
        %v1982 = vsel %vm1966, %v303, 128
        %v1983 = vsel %vm1967, %v303, 128
        %v1984 = vsel %vm1968, %v303, 128
        %v1985 = vsel %vm1969, %v303, 128
        %v1986 = vsel %vm1970, %v303, 128
        %v1987 = vsel %vm1971, %v303, 128
        %v1988 = vsel %vm1972, %v303, 128
        %v1989 = vand.u32 %v1973, 65535
        %v1990 = vshra.s32 %v1973, 16
        %v1991 = vcvt.s32.f32 %v1989
        %v1992 = vcvt.s32.f32 %v1990
        %1993 = vmin.xlane.f32.xlu0 %v1992
        %v1994 = vpop.xlane.xlu0 %1993
        %vm1995 = vcmp.eq.f32.partialorder %v1992, %v1994
        %v1996 = vsel %vm1995, %v1991, inf
        %1997 = vmin.xlane.f32.xlu0 %v1996
        %v1998 = vpop.xlane.xlu0 %1997
        %v1999 = vcvt.f32.s32 %v1998
        %v2000 = vcvt.f32.s32 %v1994
        %v2001 = vshll.u32 %v2000, 16
        %v2002 = vadd.s32 %v2001, %v1999
        %v2003 = vand.u32 %v1974, 65535
        %v2004 = vshra.s32 %v1974, 16
        %v2005 = vcvt.s32.f32 %v2003
        %v2006 = vcvt.s32.f32 %v2004
        %2007 = vmin.xlane.f32.xlu0 %v2006
        %v2008 = vpop.xlane.xlu0 %2007
        %vm2009 = vcmp.eq.f32.partialorder %v2006, %v2008
        %v2010 = vsel %vm2009, %v2005, inf
        %2011 = vmin.xlane.f32.xlu0 %v2010
        %v2012 = vpop.xlane.xlu0 %2011
        %v2013 = vcvt.f32.s32 %v2012
        %v2014 = vcvt.f32.s32 %v2008
        %v2015 = vshll.u32 %v2014, 16
        %v2016 = vadd.s32 %v2015, %v2013
        %v2017 = vand.u32 %v1975, 65535
        %v2018 = vshra.s32 %v1975, 16
        %v2019 = vcvt.s32.f32 %v2017
        %v2020 = vcvt.s32.f32 %v2018
        %2021 = vmin.xlane.f32.xlu0 %v2020
        %v2022 = vpop.xlane.xlu0 %2021
        %vm2023 = vcmp.eq.f32.partialorder %v2020, %v2022
        %v2024 = vsel %vm2023, %v2019, inf
        %2025 = vmin.xlane.f32.xlu0 %v2024
        %v2026 = vpop.xlane.xlu0 %2025
        %v2027 = vcvt.f32.s32 %v2026
        %v2028 = vcvt.f32.s32 %v2022
        %v2029 = vshll.u32 %v2028, 16
        %v2030 = vadd.s32 %v2029, %v2027
        %v2031 = vand.u32 %v1976, 65535
        %v2032 = vshra.s32 %v1976, 16
        %v2033 = vcvt.s32.f32 %v2031
        %v2034 = vcvt.s32.f32 %v2032
        %2035 = vmin.xlane.f32.xlu0 %v2034
        %v2036 = vpop.xlane.xlu0 %2035
        %vm2037 = vcmp.eq.f32.partialorder %v2034, %v2036
        %v2038 = vsel %vm2037, %v2033, inf
        %2039 = vmin.xlane.f32.xlu0 %v2038
        %v2040 = vpop.xlane.xlu0 %2039
        %v2041 = vcvt.f32.s32 %v2040
        %v2042 = vcvt.f32.s32 %v2036
        %v2043 = vshll.u32 %v2042, 16
        %v2044 = vadd.s32 %v2043, %v2041
        %v2045 = vand.u32 %v1977, 65535
        %v2046 = vshra.s32 %v1977, 16
        %v2047 = vcvt.s32.f32 %v2045
        %v2048 = vcvt.s32.f32 %v2046
        %2049 = vmin.xlane.f32.xlu0 %v2048
        %v2050 = vpop.xlane.xlu0 %2049
        %vm2051 = vcmp.eq.f32.partialorder %v2048, %v2050
        %v2052 = vsel %vm2051, %v2047, inf
        %2053 = vmin.xlane.f32.xlu0 %v2052
        %v2054 = vpop.xlane.xlu0 %2053
        %v2055 = vcvt.f32.s32 %v2054
        %v2056 = vcvt.f32.s32 %v2050
        %v2057 = vshll.u32 %v2056, 16
        %v2058 = vadd.s32 %v2057, %v2055
        %v2059 = vand.u32 %v1978, 65535
        %v2060 = vshra.s32 %v1978, 16
        %v2061 = vcvt.s32.f32 %v2059
        %v2062 = vcvt.s32.f32 %v2060
        %2063 = vmin.xlane.f32.xlu0 %v2062
        %v2064 = vpop.xlane.xlu0 %2063
        %vm2065 = vcmp.eq.f32.partialorder %v2062, %v2064
        %v2066 = vsel %vm2065, %v2061, inf
        %2067 = vmin.xlane.f32.xlu0 %v2066
        %v2068 = vpop.xlane.xlu0 %2067
        %v2069 = vcvt.f32.s32 %v2068
        %v2070 = vcvt.f32.s32 %v2064
        %v2071 = vshll.u32 %v2070, 16
        %v2072 = vadd.s32 %v2071, %v2069
        %v2073 = vand.u32 %v1979, 65535
        %v2074 = vshra.s32 %v1979, 16
        %v2075 = vcvt.s32.f32 %v2073
        %v2076 = vcvt.s32.f32 %v2074
        %2077 = vmin.xlane.f32.xlu0 %v2076
        %v2078 = vpop.xlane.xlu0 %2077
        %vm2079 = vcmp.eq.f32.partialorder %v2076, %v2078
        %v2080 = vsel %vm2079, %v2075, inf
        %2081 = vmin.xlane.f32.xlu0 %v2080
        %v2082 = vpop.xlane.xlu0 %2081
        %v2083 = vcvt.f32.s32 %v2082
        %v2084 = vcvt.f32.s32 %v2078
        %v2085 = vshll.u32 %v2084, 16
        %v2086 = vadd.s32 %v2085, %v2083
        %v2087 = vand.u32 %v1980, 65535
        %v2088 = vshra.s32 %v1980, 16
        %v2089 = vcvt.s32.f32 %v2087
        %v2090 = vcvt.s32.f32 %v2088
        %2091 = vmin.xlane.f32.xlu0 %v2090
        %v2092 = vpop.xlane.xlu0 %2091
        %vm2093 = vcmp.eq.f32.partialorder %v2090, %v2092
        %v2094 = vsel %vm2093, %v2089, inf
        %2095 = vmin.xlane.f32.xlu0 %v2094
        %v2096 = vpop.xlane.xlu0 %2095
        %v2097 = vcvt.f32.s32 %v2096
        %v2098 = vcvt.f32.s32 %v2092
        %v2099 = vshll.u32 %v2098, 16
        %v2100 = vadd.s32 %v2099, %v2097
        %v2101 = vand.u32 %v1981, 65535
        %v2102 = vshra.s32 %v1981, 16
        %v2103 = vcvt.s32.f32 %v2101
        %v2104 = vcvt.s32.f32 %v2102
        %2105 = vmin.xlane.f32.xlu0 %v2104
        %v2106 = vpop.xlane.xlu0 %2105
        %vm2107 = vcmp.eq.f32.partialorder %v2104, %v2106
        %v2108 = vsel %vm2107, %v2103, inf
        %2109 = vmin.xlane.f32.xlu0 %v2108
        %v2110 = vpop.xlane.xlu0 %2109
        %v2111 = vcvt.f32.s32 %v2110
        %v2112 = vcvt.f32.s32 %v2106
        %v2113 = vshll.u32 %v2112, 16
        %v2114 = vadd.s32 %v2113, %v2111
        %v2115 = vand.u32 %v1982, 65535
        %v2116 = vshra.s32 %v1982, 16
        %v2117 = vcvt.s32.f32 %v2115
        %v2118 = vcvt.s32.f32 %v2116
        %2119 = vmin.xlane.f32.xlu0 %v2118
        %v2120 = vpop.xlane.xlu0 %2119
        %vm2121 = vcmp.eq.f32.partialorder %v2118, %v2120
        %v2122 = vsel %vm2121, %v2117, inf
        %2123 = vmin.xlane.f32.xlu0 %v2122
        %v2124 = vpop.xlane.xlu0 %2123
        %v2125 = vcvt.f32.s32 %v2124
        %v2126 = vcvt.f32.s32 %v2120
        %v2127 = vshll.u32 %v2126, 16
        %v2128 = vadd.s32 %v2127, %v2125
        %v2129 = vand.u32 %v1983, 65535
        %v2130 = vshra.s32 %v1983, 16
        %v2131 = vcvt.s32.f32 %v2129
        %v2132 = vcvt.s32.f32 %v2130
        %2133 = vmin.xlane.f32.xlu0 %v2132
        %v2134 = vpop.xlane.xlu0 %2133
        %vm2135 = vcmp.eq.f32.partialorder %v2132, %v2134
        %v2136 = vsel %vm2135, %v2131, inf
        %2137 = vmin.xlane.f32.xlu0 %v2136
        %v2138 = vpop.xlane.xlu0 %2137
        %v2139 = vcvt.f32.s32 %v2138
        %v2140 = vcvt.f32.s32 %v2134
        %v2141 = vshll.u32 %v2140, 16
        %v2142 = vadd.s32 %v2141, %v2139
        %v2143 = vand.u32 %v1984, 65535
        %v2144 = vshra.s32 %v1984, 16
        %v2145 = vcvt.s32.f32 %v2143
        %v2146 = vcvt.s32.f32 %v2144
        %2147 = vmin.xlane.f32.xlu0 %v2146
        %v2148 = vpop.xlane.xlu0 %2147
        %vm2149 = vcmp.eq.f32.partialorder %v2146, %v2148
        %v2150 = vsel %vm2149, %v2145, inf
        %2151 = vmin.xlane.f32.xlu0 %v2150
        %v2152 = vpop.xlane.xlu0 %2151
        %v2153 = vcvt.f32.s32 %v2152
        %v2154 = vcvt.f32.s32 %v2148
        %v2155 = vshll.u32 %v2154, 16
        %v2156 = vadd.s32 %v2155, %v2153
        %v2157 = vand.u32 %v1985, 65535
        %v2158 = vshra.s32 %v1985, 16
        %v2159 = vcvt.s32.f32 %v2157
        %v2160 = vcvt.s32.f32 %v2158
        %2161 = vmin.xlane.f32.xlu0 %v2160
        %v2162 = vpop.xlane.xlu0 %2161
        %vm2163 = vcmp.eq.f32.partialorder %v2160, %v2162
        %v2164 = vsel %vm2163, %v2159, inf
        %2165 = vmin.xlane.f32.xlu0 %v2164
        %v2166 = vpop.xlane.xlu0 %2165
        %v2167 = vcvt.f32.s32 %v2166
        %v2168 = vcvt.f32.s32 %v2162
        %v2169 = vshll.u32 %v2168, 16
        %v2170 = vadd.s32 %v2169, %v2167
        %v2171 = vand.u32 %v1986, 65535
        %v2172 = vshra.s32 %v1986, 16
        %v2173 = vcvt.s32.f32 %v2171
        %v2174 = vcvt.s32.f32 %v2172
        %2175 = vmin.xlane.f32.xlu0 %v2174
        %v2176 = vpop.xlane.xlu0 %2175
        %vm2177 = vcmp.eq.f32.partialorder %v2174, %v2176
        %v2178 = vsel %vm2177, %v2173, inf
        %2179 = vmin.xlane.f32.xlu0 %v2178
        %v2180 = vpop.xlane.xlu0 %2179
        %v2181 = vcvt.f32.s32 %v2180
        %v2182 = vcvt.f32.s32 %v2176
        %v2183 = vshll.u32 %v2182, 16
        %v2184 = vadd.s32 %v2183, %v2181
        %v2185 = vand.u32 %v1987, 65535
        %v2186 = vshra.s32 %v1987, 16
        %v2187 = vcvt.s32.f32 %v2185
        %v2188 = vcvt.s32.f32 %v2186
        %2189 = vmin.xlane.f32.xlu0 %v2188
        %v2190 = vpop.xlane.xlu0 %2189
        %vm2191 = vcmp.eq.f32.partialorder %v2188, %v2190
        %v2192 = vsel %vm2191, %v2187, inf
        %2193 = vmin.xlane.f32.xlu0 %v2192
        %v2194 = vpop.xlane.xlu0 %2193
        %v2195 = vcvt.f32.s32 %v2194
        %v2196 = vcvt.f32.s32 %v2190
        %v2197 = vshll.u32 %v2196, 16
        %v2198 = vadd.s32 %v2197, %v2195
        %v2199 = vand.u32 %v1988, 65535
        %v2200 = vshra.s32 %v1988, 16
        %v2201 = vcvt.s32.f32 %v2199
        %v2202 = vcvt.s32.f32 %v2200
        %2203 = vmin.xlane.f32.xlu0 %v2202
        %v2204 = vpop.xlane.xlu0 %2203
        %vm2205 = vcmp.eq.f32.partialorder %v2202, %v2204
        %v2206 = vsel %vm2205, %v2201, inf
        %2207 = vmin.xlane.f32.xlu0 %v2206
        %v2208 = vpop.xlane.xlu0 %2207
        %v2209 = vcvt.f32.s32 %v2208
        %v2210 = vcvt.f32.s32 %v2204
        %v2211 = vshll.u32 %v2210, 16
        %v2212 = vadd.s32 %v2211, %v2209
        %vm2213 = vcmp.eq.s32.totalorder %v2002, %v1705
        %vm2214 = vcmp.eq.s32.totalorder %v2016, %v1706
        %vm2215 = vcmp.eq.s32.totalorder %v2030, %v1707
        %vm2216 = vcmp.eq.s32.totalorder %v2044, %v1708
        %vm2217 = vcmp.eq.s32.totalorder %v2058, %v1709
        %vm2218 = vcmp.eq.s32.totalorder %v2072, %v1710
        %vm2219 = vcmp.eq.s32.totalorder %v2086, %v1711
        %vm2220 = vcmp.eq.s32.totalorder %v2100, %v1712
        %vm2221 = vcmp.eq.s32.totalorder %v2114, %v1713
        %vm2222 = vcmp.eq.s32.totalorder %v2128, %v1714
        %vm2223 = vcmp.eq.s32.totalorder %v2142, %v1715
        %vm2224 = vcmp.eq.s32.totalorder %v2156, %v1716
        %vm2225 = vcmp.eq.s32.totalorder %v2170, %v1717
        %vm2226 = vcmp.eq.s32.totalorder %v2184, %v1718
        %vm2227 = vcmp.eq.s32.totalorder %v2198, %v1719
        %vm2228 = vcmp.eq.s32.totalorder %v2212, %v1720
        %vm2229 = vmand %vm2213, %vm1868
        %vm2230 = vmand %vm2214, %vm1869
        %vm2231 = vmand %vm2215, %vm1870
        %vm2232 = vmand %vm2216, %vm1871
        %vm2233 = vmand %vm2217, %vm1872
        %vm2234 = vmand %vm2218, %vm1873
        %vm2235 = vmand %vm2219, %vm1874
        %vm2236 = vmand %vm2220, %vm1875
        %vm2237 = vmand %vm2221, %vm1876
        %vm2238 = vmand %vm2222, %vm1877
        %vm2239 = vmand %vm2223, %vm1878
        %vm2240 = vmand %vm2224, %vm1879
        %vm2241 = vmand %vm2225, %vm1880
        %vm2242 = vmand %vm2226, %vm1881
        %vm2243 = vmand %vm2227, %vm1882
        %vm2244 = vmand %vm2228, %vm1883
        %v2245 = vsel %vm2229, 1, 0
        %v2246 = vsel %vm2230, 1, 0
        %v2247 = vsel %vm2231, 1, 0
        %v2248 = vsel %vm2232, 1, 0
        %v2249 = vsel %vm2233, 1, 0
        %v2250 = vsel %vm2234, 1, 0
        %v2251 = vsel %vm2235, 1, 0
        %v2252 = vsel %vm2236, 1, 0
        %v2253 = vsel %vm2237, 1, 0
        %v2254 = vsel %vm2238, 1, 0
        %v2255 = vsel %vm2239, 1, 0
        %v2256 = vsel %vm2240, 1, 0
        %v2257 = vsel %vm2241, 1, 0
        %v2258 = vsel %vm2242, 1, 0
        %v2259 = vsel %vm2243, 1, 0
        %v2260 = vsel %vm2244, 1, 0
        %v2261 = vsel %vm1916, %v2245, 0
        %v2262 = vsel %vm1916, %v2246, 0
        %v2263 = vsel %vm1916, %v2247, 0
        %v2264 = vsel %vm1916, %v2248, 0
        %v2265 = vsel %vm1916, %v2249, 0
        %v2266 = vadd.s32 %v2261, %v2265
        %v2267 = vsel %vm1916, %v2250, 0
        %v2268 = vadd.s32 %v2262, %v2267
        %v2269 = vsel %vm1916, %v2251, 0
        %v2270 = vadd.s32 %v2263, %v2269
        %v2271 = vsel %vm1916, %v2252, 0
        %v2272 = vadd.s32 %v2264, %v2271
        %v2273 = vsel %vm1916, %v2253, 0
        %v2274 = vadd.s32 %v2266, %v2273
        %v2275 = vsel %vm1916, %v2254, 0
        %v2276 = vadd.s32 %v2268, %v2275
        %v2277 = vsel %vm1916, %v2255, 0
        %v2278 = vadd.s32 %v2270, %v2277
        %v2279 = vsel %vm1916, %v2256, 0
        %v2280 = vadd.s32 %v2272, %v2279
        %v2281 = vsel %vm1916, %v2257, 0
        %v2282 = vadd.s32 %v2274, %v2281
        %v2283 = vsel %vm1916, %v2258, 0
        %v2284 = vadd.s32 %v2276, %v2283
        %v2285 = vsel %vm1916, %v2259, 0
        %v2286 = vadd.s32 %v2278, %v2285
        %v2287 = vsel %vm1916, %v2260, 0
        %v2288 = vadd.s32 %v2280, %v2287
        %v2289 = vadd.s32 %v2282, %v2284
        %v2290 = vadd.s32 %v2286, %v2288
        %v2291 = vadd.s32 %v2289, %v2290
        %v2292 = vand.u32 %v2291, 65535
        %v2293 = vshrl.u32 %v2291, 16
        %v2294 = vcvt.s32.f32 %v2292
        %v2295 = vcvt.s32.f32 %v2293
        %2296 = vadd.xlane.f32.xlu0 %v2294
        %v2297 = vpop.xlane.xlu0 %2296
        %2298 = vadd.xlane.f32.xlu0 %v2295
        %v2299 = vpop.xlane.xlu0 %2298
        %v2300 = vcvt.f32.s32 %v2297
        %v2301 = vcvt.f32.s32 %v2299
        %v2302 = vshll.u32 %v2301, 16
        %v2303 = vadd.s32 %v2302, %v2300
        %v2304 = vrot.slane %v2303, 4
        %v2305 = vadd.s32 %v2303, %v2304
        %v2306 = vrot.slane %v2305, 2
        %v2307 = vadd.s32 %v2305, %v2306
        %v2308 = vrot.slane %v2307, 1
        %v2309 = vadd.s32 %v2307, %v2308
        %s2310 = vtos %v2309
        %v2311 = vstv %s2310
        %2312 = vst [vmem:[%s265] sm:$0xff] %v2311
        %v2313 = vstv %s1956
        %v2314 = vadd.f32 %v2313, 0.0
        %2315 = vst [vmem:[%s272] sm:$0xff] %v2314
        %s2316 = sand.u32 %s147, 1
        %s2317 = scalar_lea.sflag [#allocation3], %s2316
        %s2318 = sand.u32 %s147, 1
        %s2319 = smul.addr %s2318, 8
        %s2320 = scalar_lea.vmem [#allocation2], %s2319
        %s2321 = sand.u32 %s173, 1
        %s2322 = scalar_lea.sflag [#allocation5], %s2321
        %s2323 = sand.u32 %s173, 1
        %s2324 = smul.addr %s2323, 8
        %s2325 = scalar_lea.vmem [#allocation4], %s2324
        // Predicated region
        $region41: #{tpu_custom_call.1} parent=39 // pred_check
          %p2326 = pneg %p157
        $region42: #{tpu_custom_call.1} parent=39 // pred_check_branch
          %2328 = sbr.rel (%p2326) target = $region44
        $region43: #{tpu_custom_call.1} parent=39 // pred_region
          %s2330 = ssub.s32 128, 128
          %2331 = vsyncadd %s2317, %s2330
          %s2332 = smul.addr %s24, 128
          %s2333 = scalar_lea.hbm %s5, %s2332
          %s2335 = sshll.u32 %s2320, 4
          %s2336 = int_to_ptr.vmem [resolvable:$true] %s2335
          %2338 = dma.vmem_to_hbm [thread:$0]  %s2336, 128, %s2333, %s2317
        $region44: #{tpu_custom_call.1} parent=39 // pred_fallthru
          _
        // Predicated region
        $region45: #{tpu_custom_call.1} parent=39 // pred_check
          %p2339 = pneg %p183
        $region46: #{tpu_custom_call.1} parent=39 // pred_check_branch
          %2341 = sbr.rel (%p2339) target = $region48
        $region47: #{tpu_custom_call.1} parent=39 // pred_region
          %s2343 = ssub.s32 128, 128
          %2344 = vsyncadd %s2322, %s2343
          %s2345 = smul.addr %s24, 128
          %s2346 = scalar_lea.hbm %s6, %s2345
          %s2348 = sshll.u32 %s2325, 4
          %s2349 = int_to_ptr.vmem [resolvable:$true] %s2348
          %2351 = dma.vmem_to_hbm [thread:$0]  %s2349, 128, %s2346, %s2322
        $region48: #{tpu_custom_call.1} parent=39 // pred_fallthru
          _
      $region40: #{tpu_custom_call.1} parent=5 // pred_fallthru
        _
      %p2352 = scmp.le.s32.totalorder 2, %s19
      // Predicated region
      $region49: #{tpu_custom_call.1} parent=5 // pred_check
        %p2353 = pneg %p2352
      $region50: #{tpu_custom_call.1} parent=5 // pred_check_branch
        %2355 = sbr.rel (%p2353) target = $region52
      $region51: #{tpu_custom_call.1} parent=5 // pred_region
        %s2356 = ssub.s32 %s19, 2
        // Predicated region
        $region53: #{tpu_custom_call.1} parent=51 // pred_check
          %p2357 = pneg %p163
        $region54: #{tpu_custom_call.1} parent=51 // pred_check_branch
          %2359 = sbr.rel (%p2357) target = $region56
        $region55: #{tpu_custom_call.1} parent=51 // pred_region
          %s2360 = sand.u32 %s148, 1
          %s2361 = scalar_lea.sflag [#allocation3], %s2360
          %s2362 = sand.u32 %s148, 1
          %s2363 = smul.addr %s2362, 8
          %s2364 = scalar_lea.vmem [#allocation2], %s2363
          %2365 = dma.done %s2361, 128
        $region56: #{tpu_custom_call.1} parent=51 // pred_fallthru
          _
        // Predicated region
        $region57: #{tpu_custom_call.1} parent=51 // pred_check
          %p2366 = pneg %p189
        $region58: #{tpu_custom_call.1} parent=51 // pred_check_branch
          %2368 = sbr.rel (%p2366) target = $region60
        $region59: #{tpu_custom_call.1} parent=51 // pred_region
          %s2369 = sand.u32 %s174, 1
          %s2370 = scalar_lea.sflag [#allocation5], %s2369
          %s2371 = sand.u32 %s174, 1
          %s2372 = smul.addr %s2371, 8
          %s2373 = scalar_lea.vmem [#allocation4], %s2372
          %2374 = dma.done %s2370, 128
        $region60: #{tpu_custom_call.1} parent=51 // pred_fallthru
          _
      $region52: #{tpu_custom_call.1} parent=5 // pred_fallthru
        _
    $region6: #{tpu_custom_call.1} parent=1 // loop_footer
      %s23 = sadd.s32 1, %s19
    $region7: #{tpu_custom_call.1} parent=1 // loop_footer_branch
      %18 = sbr.rel target = $region3
    $region8: #{tpu_custom_call.1} parent=1 // loop_exit
      _
    %2375 = vsyncpa [#allocation3], 1
    %s2376 = scalar_lea.sflag [#allocation3], 1
    %2377 = vsyncpa %s2376, 1
    %2378 = vsyncpa [#allocation5], 1
    %s2379 = scalar_lea.sflag [#allocation5], 1
    %2380 = vsyncpa %s2379, 1

</llo_original>
